<compile_context>
chip_gen: v6e
topology: v6e:2x2x1
jax: 0.10.0
libtpu: 0.0.40
codegen_flags: <defaults>
</compile_context>

<pallas_src>
import functools

import numpy as np
import jax
import jax.numpy as jnp
from jax.experimental import pallas as pl
from jax.experimental.pallas import tpu as pltpu


def _round_up(x, m):
    return ((x + m - 1) // m) * m


# ----------------------------------------------------------------------------
# Fused kernel: conv3x3 -> ReLU -> conv3x3 -> PixelShuffle + bicubic + add.
# ----------------------------------------------------------------------------
def _xswl_kernel(x_ref, masks_ref, w1_ref, b1_ref, w2_ref, b2_ref, pmat_ref,
                 o_ref, pad_ref,
                 *, H, W, KC, LPAD, PADW, Cin, Cout, scale):
    HW = H * W
    s2 = scale * scale

    # Re-zero only the two aligned 128-lane halo regions (interior is fully
    # overwritten before every use).  Done every step so the scratch never
    # relies on a program_id==0 guard (megacore-safe).
    pad_ref[:, 0:LPAD] = jnp.zeros((KC, LPAD), jnp.float32)
    pad_ref[:, LPAD + HW:PADW] = jnp.zeros((KC, PADW - LPAD - HW), jnp.float32)

    mask_l = masks_ref[0:1, :]          # zero where w == 0     (dx == -1 taps)
    mask_r = masks_ref[1:2, :]          # zero where w == W - 1 (dx == +1 taps)

    def im2col(flat):
        # flat: (KC, HW).  Returns the (9*KC, HW) im2col block as a register
        # value (no scratch stores).  Vertical zero padding comes from the
        # zeroed halo, horizontal from the border masks.
        pad_ref[:, LPAD:LPAD + HW] = flat            # aligned full-tile store
        pieces = []
        for dy in (-1, 0, 1):
            for dx in (-1, 0, 1):
                s = dy * W + dx
                # TODO(synk): lane-misaligned window load -> pltpu.roll.
                p = pad_ref[:, LPAD + s:LPAD + s + HW]
                if dx == -1:
                    p = p * mask_l
                elif dx == 1:
                    p = p * mask_r
                pieces.append(p)                      # each piece (KC, HW)
        return jnp.concatenate(pieces, axis=0)        # (9*KC, HW)

    x8 = x_ref[0]                                     # (KC, HW)

    # conv1 + bias + ReLU : one MXU matmul with K = 9*KC
    h1 = jnp.dot(w1_ref[...], im2col(x8),
                 preferred_element_type=jnp.float32) + b1_ref[...]
    h1 = jnp.maximum(h1, 0.0)                         # (KC, HW), pad rows = 0

    # conv2 + bias : one MXU matmul with K = 9*KC (rows permuted to (p, c))
    y = jnp.dot(w2_ref[...], im2col(h1),
                preferred_element_type=jnp.float32) + b2_ref[...]   # (C2, HW)

    # Fused PixelShuffle + bicubic residual, lane-dense on Hs*Ws:
    #   out[c] = x[c] @ B  +  sum_p y[p*Cout + c] @ S_p
    out = jnp.dot(x8[0:Cin, :], pmat_ref[s2],
                  preferred_element_type=jnp.float32)               # bicubic
    for p in range(s2):
        out = out + jnp.dot(y[p * Cout:(p + 1) * Cout, :], pmat_ref[p],
                            preferred_element_type=jnp.float32)
    o_ref[0] = out                                    # (Cout, Hs*Ws)


# ----------------------------------------------------------------------------
# Trace-time constants: packed/padded conv weights, border masks, bicubic and
# pixel-shuffle placement matrices (all flat H*W -> Hs*Ws).
# ----------------------------------------------------------------------------
def _border_masks(H, W):
    wpos = np.arange(H * W) % W
    mask_l = (wpos != 0).astype(np.float32)
    mask_r = (wpos != W - 1).astype(np.float32)
    return jnp.asarray(np.stack([mask_l, mask_r], axis=0))


def bicubic_weight_matrix(in_size, scale):
    """(in_size*scale, in_size) matrix reproducing PyTorch's bicubic
    interpolation (a=-0.75, align_corners=False, border-clamped taps)."""
    A = -0.75

    def c1(x):  # |x| <= 1
        return ((A + 2.0) * x - (A + 3.0)) * x * x + 1.0

    def c2(x):  # 1 < |x| < 2
        return ((A * x - 5.0 * A) * x + 8.0 * A) * x - 4.0 * A

    out_size = in_size * scale
    Wm = np.zeros((out_size, in_size), dtype=np.float32)
    for o in range(out_size):
        real = (o + 0.5) / scale - 0.5
        i0 = int(np.floor(real))
        t = real - i0
        coef = (c2(t + 1.0), c1(t), c1(1.0 - t), c2(2.0 - t))
        for k in range(4):
            idx = min(max(i0 - 1 + k, 0), in_size - 1)
            Wm[o, idx] += coef[k]
    return Wm


def _placement_and_bicubic_matrices(H, W, scale):
    """(scale^2 + 1, H*W, Hs*Ws): S_p pixel-shuffle placement matrices for
    each sub-position p = sy*scale + sx, plus B = kron(Wh, Ww)^T."""
    HW = H * W
    Hs, Ws = scale * H, scale * W
    s2 = scale * scale
    smat = np.zeros((s2, HW, Hs * Ws), np.float32)
    src = (np.arange(H)[:, None] * W + np.arange(W)[None, :]).ravel()
    for sy in range(scale):
        for sx in range(scale):
            p = sy * scale + sx
            dst = ((scale * np.arange(H) + sy)[:, None] * Ws
                   + (scale * np.arange(W) + sx)[None, :]).ravel()
            smat[p, src, dst] = 1.0
    wh = bicubic_weight_matrix(H, scale)               # (Hs, H)
    ww = bicubic_weight_matrix(W, scale)               # (Ws, W)
    bmat = np.kron(wh, ww).T.astype(np.float32)        # (HW, Hs*Ws)
    return jnp.asarray(np.concatenate([smat, bmat[None]], axis=0))


def xswl_forward(x_nchw, params, scale):
    """Pallas implementation of XSWL.forward (params in HWIO layout)."""
    w1, b1, w2, b2 = params
    N, Cin, H, W = x_nchw.shape
    C1 = w1.shape[-1]
    C2 = w2.shape[-1]
    s2 = scale * scale
    Cout = C2 // s2
    assert Cout == Cin, "residual add requires Cout == Cin"
    HW = H * W
    Hs, Ws = scale * H, scale * W
    KC = 8                                              # channels padded to sublane tile
    assert Cin <= KC and C1 <= KC

    LPAD = _round_up(W + 1, 128)
    PADW = LPAD + HW + _round_up(W + 1, 128)

    # conv1 weights: (3,3,Cin,C1) HWIO -> (KC, 9*KC), row order (ky, kx, cin),
    # zero-padded input/output channels.
    w1m = jnp.transpose(w1, (3, 0, 1, 2)).reshape(C1, 9, Cin)
    w1p = jnp.pad(w1m, ((0, KC - C1), (0, 0), (0, KC - Cin))).reshape(KC, 9 * KC)
    b1p = jnp.pad(b1, (0, KC - C1)).reshape(KC, 1)

    # conv2 weights: rows permuted to (p, c) order so the kernel can slice one
    # contiguous Cout-row group per pixel-shuffle sub-position.
    perm = np.asarray([c * s2 + p for p in range(s2) for c in range(Cout)])
    w2m = jnp.transpose(w2, (3, 0, 1, 2)).reshape(C2, 9, C1)[perm]
    w2p = jnp.pad(w2m, ((0, 0), (0, 0), (0, KC - C1))).reshape(C2, 9 * KC)
    b2p = b2[perm].reshape(C2, 1)

    masks = _border_masks(H, W)                         # (2, HW)
    pmat = _placement_and_bicubic_matrices(H, W, scale)  # (s2+1, HW, Hs*Ws)

    # Input: pad channels to KC, flatten spatial onto lanes.
    xflat = x_nchw.reshape(N, Cin, HW)
    xp = jnp.concatenate(
        [xflat, jnp.zeros((N, KC - Cin, HW), jnp.float32)], axis=1)

    kern = functools.partial(_xswl_kernel, H=H, W=W, KC=KC, LPAD=LPAD,
                             PADW=PADW, Cin=Cin, Cout=Cout, scale=scale)
    flops = int(N * (2 * 9 * KC * KC * HW + 2 * 9 * KC * C2 * HW
                     + 2 * (s2 + 1) * Cout * HW * Hs * Ws))
    bytes_acc = int(4 * (N * (KC * HW + Cout * Hs * Ws)
                         + pmat.size + masks.size + w1p.size + b1p.size
                         + w2p.size + b2p.size))

    out_flat = pl.pallas_call(
        kern,
        out_shape=jax.ShapeDtypeStruct((N, Cout, Hs * Ws), jnp.float32),
        grid=(N,),
        in_specs=[
            pl.BlockSpec((1, KC, HW), lambda n: (n, 0, 0)),        # x (padded)
            pl.BlockSpec((2, HW), lambda n: (0, 0)),               # masks
            pl.BlockSpec((KC, 9 * KC), lambda n: (0, 0)),          # w1
            pl.BlockSpec((KC, 1), lambda n: (0, 0)),               # b1
            pl.BlockSpec((C2, 9 * KC), lambda n: (0, 0)),          # w2 (perm)
            pl.BlockSpec((C2, 1), lambda n: (0, 0)),               # b2 (perm)
            pl.BlockSpec((s2 + 1, HW, Hs * Ws), lambda n: (0, 0, 0)),  # S_p, B
        ],
        out_specs=pl.BlockSpec((1, Cout, Hs * Ws), lambda n: (n, 0, 0)),
        scratch_shapes=[pltpu.VMEM((KC, PADW), jnp.float32)],
        compiler_params=pltpu.CompilerParams(
            dimension_semantics=("parallel",),
            vmem_limit_bytes=48 * 1024 * 1024),
        cost_estimate=pl.CostEstimate(flops=flops, transcendentals=0,
                                      bytes_accessed=bytes_acc),
    )(xp, masks, w1p, b1p, w2p, b2p, pmat)

    # Free row-major reshape to NCHW.
    return out_flat.reshape(N, Cout, Hs, Ws)


# ----------------------------------------------------------------------------
# Pure-JAX reference (correctness check only)
# ----------------------------------------------------------------------------
def pixel_shuffle(x, s):
    N, Cs2, H, W = x.shape
    C = Cs2 // (s * s)
    x = x.reshape(N, C, s, s, H, W)
    x = jnp.transpose(x, (0, 1, 4, 2, 5, 3))
    return x.reshape(N, C, H * s, W * s)


def reference(x, params, scale, wh, ww):
    w1, b1, w2, b2 = params

    def conv(x, w, b):
        o = jax.lax.conv_general_dilated(
            x, w, (1, 1), "SAME",
            dimension_numbers=("NCHW", "HWIO", "NCHW"))
        return o + b.reshape(1, -1, 1, 1)

    h = jax.nn.relu(conv(x, w1, b1))
    y = conv(h, w2, b2)
    y = pixel_shuffle(y, scale)
    up = jnp.einsum("oi,ncij,pj->ncop", wh, x, ww)
    return y + up


if __name__ == "__main__":
    scale = 2                                   # args.scale = [2]
    N, Cin, H, W = 2, 3, 16, 16
    C1 = 3 * scale * scale // 2                 # 6
    C2 = 3 * scale * scale                      # 12

    key = jax.random.PRNGKey(0)
    k1, k2, k3, k4, kx = jax.random.split(key, 5)
    # deterministic synthetic parameters (HWIO layout)
    w1 = jax.random.normal(k1, (3, 3, Cin, C1), jnp.float32) * 0.1
    b1 = jax.random.normal(k2, (C1,), jnp.float32) * 0.1
    w2 = jax.random.normal(k3, (3, 3, C1, C2), jnp.float32) * 0.1
    b2 = jax.random.normal(k4, (C2,), jnp.float32) * 0.1
    params = (w1, b1, w2, b2)

    x = jax.random.normal(kx, (N, Cin, H, W), jnp.float32)

    out = xswl_forward(x, params, scale)
    out = jax.block_until_ready(out)
    assert out.shape == (N, Cin, H * scale, W * scale)

    wh = bicubic_weight_matrix(H, scale)
    ww = bicubic_weight_matrix(W, scale)
    ref = reference(x, params, scale, wh, ww)
    np.testing.assert_allclose(np.asarray(out), np.asarray(ref),
                               rtol=1e-4, atol=2e-4)
    print("KERNEL_OK")
</pallas_src>

<mosaic_0001>
module attributes {stable_mosaic.version = 11 : i64} {
  func.func @_xswl_kernel(%arg0: i32, %arg1: memref<1x8x256xf32, #tpu.memory_space<vmem>>, %arg2: memref<2x256xf32, #tpu.memory_space<vmem>>, %arg3: memref<8x72xf32, #tpu.memory_space<vmem>>, %arg4: memref<8x1xf32, #tpu.memory_space<vmem>>, %arg5: memref<12x72xf32, #tpu.memory_space<vmem>>, %arg6: memref<12x1xf32, #tpu.memory_space<vmem>>, %arg7: memref<5x256x1024xf32, #tpu.memory_space<vmem>>, %arg8: memref<1x3x1024xf32, #tpu.memory_space<vmem>>, %arg9: memref<8x512xf32, #tpu.memory_space<vmem>>) attributes {dimension_semantics = [#tpu.dimension_semantics<parallel>], iteration_bounds = array<i64: 2>, scalar_prefetch = 0 : i64, scratch_operands = 1 : i64, tpu.core_type = #tpu.core_type<tc>, window_params = [{transform_indices = @transform_0, window_bounds = array<i64: 1, 8, 256>}, {pipeline_mode = #tpu.pipeline_mode<synchronous>, transform_indices = @transform_1, window_bounds = array<i64: 2, 256>}, {pipeline_mode = #tpu.pipeline_mode<synchronous>, transform_indices = @transform_2, window_bounds = array<i64: 8, 72>}, {pipeline_mode = #tpu.pipeline_mode<synchronous>, transform_indices = @transform_3, window_bounds = array<i64: 8, 1>}, {pipeline_mode = #tpu.pipeline_mode<synchronous>, transform_indices = @transform_4, window_bounds = array<i64: 12, 72>}, {pipeline_mode = #tpu.pipeline_mode<synchronous>, transform_indices = @transform_5, window_bounds = array<i64: 12, 1>}, {pipeline_mode = #tpu.pipeline_mode<synchronous>, transform_indices = @transform_6, window_bounds = array<i64: 5, 256, 1024>}, {transform_indices = @transform_7, window_bounds = array<i64: 1, 3, 1024>}]} {
    %cst = arith.constant 0.000000e+00 : f32
    %0 = vector.broadcast %cst : f32 to vector<8x128xf32>
    %c0 = arith.constant 0 : index
    %c0_0 = arith.constant 0 : index
    %1 = vector.load %arg9[%c0, %c0_0] : memref<8x512xf32, #tpu.memory_space<vmem>>, vector<8x128xf32>
    tpu.vector_store %arg9[%c0, %c0_0], %0 {strides = array<i32>} : memref<8x512xf32, #tpu.memory_space<vmem>>, vector<8x128xf32>,
    %cst_1 = arith.constant 0.000000e+00 : f32
    %2 = vector.broadcast %cst_1 : f32 to vector<8x128xf32>
    %c0_2 = arith.constant 0 : index
    %c384 = arith.constant 384 : index
    %3 = vector.load %arg9[%c0_2, %c384] : memref<8x512xf32, #tpu.memory_space<vmem>>, vector<8x128xf32>
    tpu.vector_store %arg9[%c0_2, %c384], %2 {strides = array<i32>} : memref<8x512xf32, #tpu.memory_space<vmem>>, vector<8x128xf32>,
    %c0_3 = arith.constant 0 : index
    %c0_4 = arith.constant 0 : index
    %4 = vector.load %arg2[%c0_3, %c0_4] : memref<2x256xf32, #tpu.memory_space<vmem>>, vector<1x256xf32>
    %c1 = arith.constant 1 : index
    %c0_5 = arith.constant 0 : index
    %5 = vector.load %arg2[%c1, %c0_5] : memref<2x256xf32, #tpu.memory_space<vmem>>, vector<1x256xf32>
    %c0_6 = arith.constant 0 : index
    %c0_7 = arith.constant 0 : index
    %c0_8 = arith.constant 0 : index
    %6 = vector.load %arg1[%c0_6, %c0_7, %c0_8] : memref<1x8x256xf32, #tpu.memory_space<vmem>>, vector<1x8x256xf32>
    %7 = vector.shape_cast %6 : vector<1x8x256xf32> to vector<8x256xf32>
    %c0_9 = arith.constant 0 : index
    %c0_10 = arith.constant 0 : index
    %8 = vector.load %arg3[%c0_9, %c0_10] : memref<8x72xf32, #tpu.memory_space<vmem>>, vector<8x72xf32>
    %c0_11 = arith.constant 0 : index
    %c128 = arith.constant 128 : index
    %9 = vector.load %arg9[%c0_11, %c128] : memref<8x512xf32, #tpu.memory_space<vmem>>, vector<8x256xf32>
    tpu.vector_store %arg9[%c0_11, %c128], %7 {strides = array<i32>} : memref<8x512xf32, #tpu.memory_space<vmem>>, vector<8x256xf32>,
    %c0_12 = arith.constant 0 : index
    %c111 = arith.constant 111 : index
    %10 = vector.load %arg9[%c0_12, %c111] : memref<8x512xf32, #tpu.memory_space<vmem>>, vector<8x256xf32>
    %11 = vector.broadcast %4 : vector<1x256xf32> to vector<8x256xf32>
    %12 = arith.mulf %10, %11 : vector<8x256xf32>
    %c0_13 = arith.constant 0 : index
    %c112 = arith.constant 112 : index
    %13 = vector.load %arg9[%c0_13, %c112] : memref<8x512xf32, #tpu.memory_space<vmem>>, vector<8x256xf32>
    %c0_14 = arith.constant 0 : index
    %c113 = arith.constant 113 : index
    %14 = vector.load %arg9[%c0_14, %c113] : memref<8x512xf32, #tpu.memory_space<vmem>>, vector<8x256xf32>
    %15 = vector.broadcast %5 : vector<1x256xf32> to vector<8x256xf32>
    %16 = arith.mulf %14, %15 : vector<8x256xf32>
    %c0_15 = arith.constant 0 : index
    %c127 = arith.constant 127 : index
    %17 = vector.load %arg9[%c0_15, %c127] : memref<8x512xf32, #tpu.memory_space<vmem>>, vector<8x256xf32>
    %18 = vector.broadcast %4 : vector<1x256xf32> to vector<8x256xf32>
    %19 = arith.mulf %17, %18 : vector<8x256xf32>
    %c0_16 = arith.constant 0 : index
    %c128_17 = arith.constant 128 : index
    %20 = vector.load %arg9[%c0_16, %c128_17] : memref<8x512xf32, #tpu.memory_space<vmem>>, vector<8x256xf32>
    %c0_18 = arith.constant 0 : index
    %c129 = arith.constant 129 : index
    %21 = vector.load %arg9[%c0_18, %c129] : memref<8x512xf32, #tpu.memory_space<vmem>>, vector<8x256xf32>
    %22 = vector.broadcast %5 : vector<1x256xf32> to vector<8x256xf32>
    %23 = arith.mulf %21, %22 : vector<8x256xf32>
    %c0_19 = arith.constant 0 : index
    %c143 = arith.constant 143 : index
    %24 = vector.load %arg9[%c0_19, %c143] : memref<8x512xf32, #tpu.memory_space<vmem>>, vector<8x256xf32>
    %25 = vector.broadcast %4 : vector<1x256xf32> to vector<8x256xf32>
    %26 = arith.mulf %24, %25 : vector<8x256xf32>
    %c0_20 = arith.constant 0 : index
    %c144 = arith.constant 144 : index
    %27 = vector.load %arg9[%c0_20, %c144] : memref<8x512xf32, #tpu.memory_space<vmem>>, vector<8x256xf32>
    %c0_21 = arith.constant 0 : index
    %c145 = arith.constant 145 : index
    %28 = vector.load %arg9[%c0_21, %c145] : memref<8x512xf32, #tpu.memory_space<vmem>>, vector<8x256xf32>
    %29 = vector.broadcast %5 : vector<1x256xf32> to vector<8x256xf32>
    %30 = arith.mulf %28, %29 : vector<8x256xf32>
    %31 = tpu.concatenate %12, %13, %16, %19, %20, %23, %26, %27, %30 in 0 : vector<8x256xf32>, vector<8x256xf32>, vector<8x256xf32>, vector<8x256xf32>, vector<8x256xf32>, vector<8x256xf32>, vector<8x256xf32>, vector<8x256xf32>, vector<8x256xf32> -> vector<72x256xf32>
    %cst_22 = arith.constant dense<0.000000e+00> : vector<8x256xf32>
    %32 = tpu.matmul %8, %31, %cst_22 {dimension_numbers = #tpu.dot_dimension_numbers<[1], [0], [0], [1], [0, 0, 1, 1], [], []>} : vector<8x72xf32>, vector<72x256xf32>, vector<8x256xf32> -> vector<8x256xf32>
    %c0_23 = arith.constant 0 : index
    %c0_24 = arith.constant 0 : index
    %33 = vector.load %arg4[%c0_23, %c0_24] : memref<8x1xf32, #tpu.memory_space<vmem>>, vector<8x1xf32>
    %34 = vector.broadcast %33 : vector<8x1xf32> to vector<8x256xf32>
    %35 = arith.addf %32, %34 : vector<8x256xf32>
    %cst_25 = arith.constant 0.000000e+00 : f32
    %36 = vector.broadcast %cst_25 : f32 to vector<8x256xf32>
    %37 = arith.maximumf %35, %36 : vector<8x256xf32>
    %c0_26 = arith.constant 0 : index
    %c0_27 = arith.constant 0 : index
    %38 = vector.load %arg5[%c0_26, %c0_27] : memref<12x72xf32, #tpu.memory_space<vmem>>, vector<12x72xf32>
    %c0_28 = arith.constant 0 : index
    %c128_29 = arith.constant 128 : index
    %39 = vector.load %arg9[%c0_28, %c128_29] : memref<8x512xf32, #tpu.memory_space<vmem>>, vector<8x256xf32>
    tpu.vector_store %arg9[%c0_28, %c128_29], %37 {strides = array<i32>} : memref<8x512xf32, #tpu.memory_space<vmem>>, vector<8x256xf32>,
    %c0_30 = arith.constant 0 : index
    %c111_31 = arith.constant 111 : index
    %40 = vector.load %arg9[%c0_30, %c111_31] : memref<8x512xf32, #tpu.memory_space<vmem>>, vector<8x256xf32>
    %41 = vector.broadcast %4 : vector<1x256xf32> to vector<8x256xf32>
    %42 = arith.mulf %40, %41 : vector<8x256xf32>
    %c0_32 = arith.constant 0 : index
    %c112_33 = arith.constant 112 : index
    %43 = vector.load %arg9[%c0_32, %c112_33] : memref<8x512xf32, #tpu.memory_space<vmem>>, vector<8x256xf32>
    %c0_34 = arith.constant 0 : index
    %c113_35 = arith.constant 113 : index
    %44 = vector.load %arg9[%c0_34, %c113_35] : memref<8x512xf32, #tpu.memory_space<vmem>>, vector<8x256xf32>
    %45 = vector.broadcast %5 : vector<1x256xf32> to vector<8x256xf32>
    %46 = arith.mulf %44, %45 : vector<8x256xf32>
    %c0_36 = arith.constant 0 : index
    %c127_37 = arith.constant 127 : index
    %47 = vector.load %arg9[%c0_36, %c127_37] : memref<8x512xf32, #tpu.memory_space<vmem>>, vector<8x256xf32>
    %48 = vector.broadcast %4 : vector<1x256xf32> to vector<8x256xf32>
    %49 = arith.mulf %47, %48 : vector<8x256xf32>
    %c0_38 = arith.constant 0 : index
    %c128_39 = arith.constant 128 : index
    %50 = vector.load %arg9[%c0_38, %c128_39] : memref<8x512xf32, #tpu.memory_space<vmem>>, vector<8x256xf32>
    %c0_40 = arith.constant 0 : index
    %c129_41 = arith.constant 129 : index
    %51 = vector.load %arg9[%c0_40, %c129_41] : memref<8x512xf32, #tpu.memory_space<vmem>>, vector<8x256xf32>
    %52 = vector.broadcast %5 : vector<1x256xf32> to vector<8x256xf32>
    %53 = arith.mulf %51, %52 : vector<8x256xf32>
    %c0_42 = arith.constant 0 : index
    %c143_43 = arith.constant 143 : index
    %54 = vector.load %arg9[%c0_42, %c143_43] : memref<8x512xf32, #tpu.memory_space<vmem>>, vector<8x256xf32>
    %55 = vector.broadcast %4 : vector<1x256xf32> to vector<8x256xf32>
    %56 = arith.mulf %54, %55 : vector<8x256xf32>
    %c0_44 = arith.constant 0 : index
    %c144_45 = arith.constant 144 : index
    %57 = vector.load %arg9[%c0_44, %c144_45] : memref<8x512xf32, #tpu.memory_space<vmem>>, vector<8x256xf32>
    %c0_46 = arith.constant 0 : index
    %c145_47 = arith.constant 145 : index
    %58 = vector.load %arg9[%c0_46, %c145_47] : memref<8x512xf32, #tpu.memory_space<vmem>>, vector<8x256xf32>
    %59 = vector.broadcast %5 : vector<1x256xf32> to vector<8x256xf32>
    %60 = arith.mulf %58, %59 : vector<8x256xf32>
    %61 = tpu.concatenate %42, %43, %46, %49, %50, %53, %56, %57, %60 in 0 : vector<8x256xf32>, vector<8x256xf32>, vector<8x256xf32>, vector<8x256xf32>, vector<8x256xf32>, vector<8x256xf32>, vector<8x256xf32>, vector<8x256xf32>, vector<8x256xf32> -> vector<72x256xf32>
    %cst_48 = arith.constant dense<0.000000e+00> : vector<12x256xf32>
    %62 = tpu.matmul %38, %61, %cst_48 {dimension_numbers = #tpu.dot_dimension_numbers<[1], [0], [0], [1], [0, 0, 1, 1], [], []>} : vector<12x72xf32>, vector<72x256xf32>, vector<12x256xf32> -> vector<12x256xf32>
    %c0_49 = arith.constant 0 : index
    %c0_50 = arith.constant 0 : index
    %63 = vector.load %arg6[%c0_49, %c0_50] : memref<12x1xf32, #tpu.memory_space<vmem>>, vector<12x1xf32>
    %64 = vector.broadcast %63 : vector<12x1xf32> to vector<12x256xf32>
    %65 = arith.addf %62, %64 : vector<12x256xf32>
    %66 = vector.extract_strided_slice %7 {offsets = [0, 0], sizes = [3, 256], strides = [1, 1]} : vector<8x256xf32> to vector<3x256xf32>
    %c4 = arith.constant 4 : index
    %c0_51 = arith.constant 0 : index
    %c0_52 = arith.constant 0 : index
    %67 = vector.load %arg7[%c4, %c0_51, %c0_52] : memref<5x256x1024xf32, #tpu.memory_space<vmem>>, vector<1x256x1024xf32>
    %68 = vector.shape_cast %67 : vector<1x256x1024xf32> to vector<256x1024xf32>
    %cst_53 = arith.constant dense<0.000000e+00> : vector<3x1024xf32>
    %69 = tpu.matmul %66, %68, %cst_53 {dimension_numbers = #tpu.dot_dimension_numbers<[1], [0], [0], [1], [0, 0, 1, 1], [], []>} : vector<3x256xf32>, vector<256x1024xf32>, vector<3x1024xf32> -> vector<3x1024xf32>
    %70 = vector.extract_strided_slice %65 {offsets = [0, 0], sizes = [3, 256], strides = [1, 1]} : vector<12x256xf32> to vector<3x256xf32>
    %c0_54 = arith.constant 0 : index
    %c0_55 = arith.constant 0 : index
    %c0_56 = arith.constant 0 : index
    %71 = vector.load %arg7[%c0_54, %c0_55, %c0_56] : memref<5x256x1024xf32, #tpu.memory_space<vmem>>, vector<1x256x1024xf32>
    %72 = vector.shape_cast %71 : vector<1x256x1024xf32> to vector<256x1024xf32>
    %cst_57 = arith.constant dense<0.000000e+00> : vector<3x1024xf32>
    %73 = tpu.matmul %70, %72, %cst_57 {dimension_numbers = #tpu.dot_dimension_numbers<[1], [0], [0], [1], [0, 0, 1, 1], [], []>} : vector<3x256xf32>, vector<256x1024xf32>, vector<3x1024xf32> -> vector<3x1024xf32>
    %74 = arith.addf %69, %73 : vector<3x1024xf32>
    %75 = vector.extract_strided_slice %65 {offsets = [3, 0], sizes = [3, 256], strides = [1, 1]} : vector<12x256xf32> to vector<3x256xf32>
    %c1_58 = arith.constant 1 : index
    %c0_59 = arith.constant 0 : index
    %c0_60 = arith.constant 0 : index
    %76 = vector.load %arg7[%c1_58, %c0_59, %c0_60] : memref<5x256x1024xf32, #tpu.memory_space<vmem>>, vector<1x256x1024xf32>
    %77 = vector.shape_cast %76 : vector<1x256x1024xf32> to vector<256x1024xf32>
    %cst_61 = arith.constant dense<0.000000e+00> : vector<3x1024xf32>
    %78 = tpu.matmul %75, %77, %cst_61 {dimension_numbers = #tpu.dot_dimension_numbers<[1], [0], [0], [1], [0, 0, 1, 1], [], []>} : vector<3x256xf32>, vector<256x1024xf32>, vector<3x1024xf32> -> vector<3x1024xf32>
    %79 = arith.addf %74, %78 : vector<3x1024xf32>
    %80 = vector.extract_strided_slice %65 {offsets = [6, 0], sizes = [3, 256], strides = [1, 1]} : vector<12x256xf32> to vector<3x256xf32>
    %c2 = arith.constant 2 : index
    %c0_62 = arith.constant 0 : index
    %c0_63 = arith.constant 0 : index
    %81 = vector.load %arg7[%c2, %c0_62, %c0_63] : memref<5x256x1024xf32, #tpu.memory_space<vmem>>, vector<1x256x1024xf32>
    %82 = vector.shape_cast %81 : vector<1x256x1024xf32> to vector<256x1024xf32>
    %cst_64 = arith.constant dense<0.000000e+00> : vector<3x1024xf32>
    %83 = tpu.matmul %80, %82, %cst_64 {dimension_numbers = #tpu.dot_dimension_numbers<[1], [0], [0], [1], [0, 0, 1, 1], [], []>} : vector<3x256xf32>, vector<256x1024xf32>, vector<3x1024xf32> -> vector<3x1024xf32>
    %84 = arith.addf %79, %83 : vector<3x1024xf32>
    %85 = vector.extract_strided_slice %65 {offsets = [9, 0], sizes = [3, 256], strides = [1, 1]} : vector<12x256xf32> to vector<3x256xf32>
    %c3 = arith.constant 3 : index
    %c0_65 = arith.constant 0 : index
    %c0_66 = arith.constant 0 : index
    %86 = vector.load %arg7[%c3, %c0_65, %c0_66] : memref<5x256x1024xf32, #tpu.memory_space<vmem>>, vector<1x256x1024xf32>
    %87 = vector.shape_cast %86 : vector<1x256x1024xf32> to vector<256x1024xf32>
    %cst_67 = arith.constant dense<0.000000e+00> : vector<3x1024xf32>
    %88 = tpu.matmul %85, %87, %cst_67 {dimension_numbers = #tpu.dot_dimension_numbers<[1], [0], [0], [1], [0, 0, 1, 1], [], []>} : vector<3x256xf32>, vector<256x1024xf32>, vector<3x1024xf32> -> vector<3x1024xf32>
    %89 = arith.addf %84, %88 : vector<3x1024xf32>
    %c0_68 = arith.constant 0 : index
    %c0_69 = arith.constant 0 : index
    %c0_70 = arith.constant 0 : index
    %90 = vector.load %arg8[%c0_68, %c0_69, %c0_70] : memref<1x3x1024xf32, #tpu.memory_space<vmem>>, vector<1x3x1024xf32>
    %91 = vector.shape_cast %90 : vector<1x3x1024xf32> to vector<3x1024xf32>
    %92 = vector.shape_cast %89 : vector<3x1024xf32> to vector<1x3x1024xf32>
    tpu.vector_store %arg8[%c0_68, %c0_69, %c0_70], %92 {strides = array<i32>} : memref<1x3x1024xf32, #tpu.memory_space<vmem>>, vector<1x3x1024xf32>,
    return
  }
  func.func @transform_0(%arg0: i32) -> (i32, i32, i32) {
    %c0_i32 = arith.constant 0 : i32
    %c0_i32_0 = arith.constant 0 : i32
    %c0_i32_1 = arith.constant 0 : i32
    return %arg0, %c0_i32, %c0_i32_0 : i32, i32, i32
  }
  func.func @transform_1(%arg0: i32) -> (i32, i32) {
    %c0_i32 = arith.constant 0 : i32
    %c0_i32_0 = arith.constant 0 : i32
    %c0_i32_1 = arith.constant 0 : i32
    return %c0_i32, %c0_i32_0 : i32, i32
  }
  func.func @transform_2(%arg0: i32) -> (i32, i32) {
    %c0_i32 = arith.constant 0 : i32
    %c0_i32_0 = arith.constant 0 : i32
    %c0_i32_1 = arith.constant 0 : i32
    return %c0_i32, %c0_i32_0 : i32, i32
  }
  func.func @transform_3(%arg0: i32) -> (i32, i32) {
    %c0_i32 = arith.constant 0 : i32
    %c0_i32_0 = arith.constant 0 : i32
    %c0_i32_1 = arith.constant 0 : i32
    return %c0_i32, %c0_i32_0 : i32, i32
  }
  func.func @transform_4(%arg0: i32) -> (i32, i32) {
    %c0_i32 = arith.constant 0 : i32
    %c0_i32_0 = arith.constant 0 : i32
    %c0_i32_1 = arith.constant 0 : i32
    return %c0_i32, %c0_i32_0 : i32, i32
  }
  func.func @transform_5(%arg0: i32) -> (i32, i32) {
    %c0_i32 = arith.constant 0 : i32
    %c0_i32_0 = arith.constant 0 : i32
    %c0_i32_1 = arith.constant 0 : i32
    return %c0_i32, %c0_i32_0 : i32, i32
  }
  func.func @transform_6(%arg0: i32) -> (i32, i32, i32) {
    %c0_i32 = arith.constant 0 : i32
    %c0_i32_0 = arith.constant 0 : i32
    %c0_i32_1 = arith.constant 0 : i32
    %c0_i32_2 = arith.constant 0 : i32
    return %c0_i32, %c0_i32_0, %c0_i32_1 : i32, i32, i32
  }
  func.func @transform_7(%arg0: i32) -> (i32, i32, i32) {
    %c0_i32 = arith.constant 0 : i32
    %c0_i32_0 = arith.constant 0 : i32
    %c0_i32_1 = arith.constant 0 : i32
    return %arg0, %c0_i32, %c0_i32_0 : i32, i32, i32
  }
}

</mosaic_0001>

<llo_original>
// kernel: tpu_custom_call.1
$region0: #{tpu_custom_call.1}
  #allocation0 [shape = 'u32[]', space=smem, size = 0x4, offset = 0x4, fixed_abs, tag = 'smem constant byte address 0x4 - core index']
  #allocation1 [shape = 'u32[144,128]{1,0:T(1,128)}', space=vmem, size = 0x12000, scoped, tag = 'internal scratch']
  #allocation2 [shape = 'f32[8,512]{1,0:T(8,128)}', space=vmem, size = 0x4000, scoped, tag = 'scratch operand']
  %s0 = inlined_call_operand.hbm [shape: f32[2,8,256], index: 0, kind: input, shape index: {}]
  %s1 = inlined_call_operand.hbm [shape: f32[2,256], index: 1, kind: input, shape index: {}]
  %s2 = inlined_call_operand.hbm [shape: f32[8,72], index: 2, kind: input, shape index: {}]
  %s3 = inlined_call_operand.vmem [shape: f32[8,1], index: 3, kind: input, shape index: {}]
  %s4 = inlined_call_operand.hbm [shape: f32[12,72], index: 4, kind: input, shape index: {}]
  %s5 = inlined_call_operand.vmem [shape: f32[12,1], index: 5, kind: input, shape index: {}]
  %s6 = inlined_call_operand.hbm [shape: f32[5,256,1024], index: 6, kind: input, shape index: {}]
  %s7 = inlined_call_operand.vmem [shape: f32[2,3,1024], index: 7, kind: output, shape index: {}]
  %s8 = sld [smem:[#allocation0]]
  $region81: #{tpu_custom_call.1} parent=0
    _
  %s10 = ssub.s32 1, %s8
  %s11 = scalar_select 0, %s10, %s8
  $region1: #{tpu_custom_call.1} parent=0
    #allocation3 [shape = 'u8[16384]{0}', space=vmem, size = 0x4000, scoped, tag = 'input window, operand 0']
    #allocation4 [shape = 's32[2]{0}', space=sflag, size = 0x8, scoped, tag = 'scoped memory for tpu_custom_call.1']
    #allocation5 [shape = 'u8[2048]{0}', space=vmem, size = 0x800, scoped, tag = 'input window, operand 1, single buffered']
    #allocation6 [shape = 's32[1]{0}', space=sflag, size = 0x4, scoped, tag = 'scoped memory for tpu_custom_call.1']
    #allocation7 [shape = 'u8[4096]{0}', space=vmem, size = 0x1000, scoped, tag = 'input window, operand 2, single buffered']
    #allocation8 [shape = 'u8[8192]{0}', space=vmem, size = 0x2000, scoped, tag = 'input window, operand 4, single buffered']
    #allocation9 [shape = 's32[1]{0}', space=sflag, size = 0x4, scoped, tag = 'scoped memory for tpu_custom_call.1']
    #allocation10 [shape = 'u8[5242880]{0}', space=vmem, size = 0x500000, scoped, tag = 'input window, operand 6, single buffered']
    %12 = vsyncpa [#allocation4], 0
    %s13 = scalar_lea.sflag [#allocation4], 1
    %14 = vsyncpa %s13, 0
    %15 = vsyncpa [#allocation6], 0
    %16 = vsyncpa [#allocation9], 0
    loop: start=0, step=1, limit=4
    $region2: #{tpu_custom_call.1} parent=1 // loop_pre_header
      _
    $region3: #{tpu_custom_call.1} parent=1 // loop_header
      %s18 = sphi 0, %s22
      %p19 = scmp.ge.s32.totalorder %s18, 4
      %s28 = sphi 0, %s30
      %s31 = sphi 0, %s28
      %s32 = sphi 0, %s31
      %s48 = sphi 0, %s32
      %s52 = sphi 0, %s52
      %s54 = sphi 0, %s52
      %s55 = sphi 0, %s54
      %s69 = sphi 0, %s55
      %s73 = sphi 0, %s73
      %s75 = sphi 0, %s73
      %s76 = sphi 0, %s75
      %s90 = sphi 0, %s76
      %s94 = sphi 0, %s94
      %s96 = sphi 0, %s94
      %s97 = sphi 0, %s96
      %s111 = sphi 0, %s97
      %s115 = sphi 0, %s115
      %s117 = sphi 0, %s115
      %s118 = sphi 0, %s117
      %s132 = sphi 0, %s118
      %s136 = sphi 0, %s136
      %s138 = sphi 0, %s136
      %s139 = sphi 0, %s138
      %s153 = sphi 0, %s139
      %s157 = sphi 0, %s157
      %s159 = sphi 0, %s157
      %s160 = sphi 0, %s159
      %s174 = sphi 0, %s160
      %s180 = sphi 0, %s182
      %s183 = sphi 0, %s180
      %s184 = sphi 0, %s183
      %s200 = sphi 0, %s184
    $region4: #{tpu_custom_call.1} parent=1 // loop_header_branch
      %21 = sbr.rel (%p19) target = $region8
    $region5: #{tpu_custom_call.1} parent=1 // loop_body
      %s23 = ssub.s32 %s18, 1
      %s24 = ssub.s32 %s18, 2
      %s25 = sadd.s32 %s18, 1
      %s26 = ssub.s32 %s18, %s25
      %p27 = scmp.eq.s32.totalorder %s26, 0
      %s29 = sadd.s32 %s28, 1
      %s30 = scalar_select %p27, %s28, %s29
      %p33 = pneg %p27
      %p34 = scmp.eq.s32.totalorder %s18, 1
      %p35 = por %p33, %p34
      %p36 = scmp.ne.s32.totalorder %s28, %s31
      %p37 = scmp.eq.s32.totalorder %s18, 0
      %p38 = por %p36, %p37
      %p39 = scmp.ne.s32.totalorder %s28, %s31
      %p40 = scmp.eq.s32.totalorder %s23, 1
      %p41 = por %p39, %p40
      %p42 = scmp.ne.s32.totalorder %s31, %s32
      %p43 = scmp.eq.s32.totalorder %s23, 0
      %p44 = por %p42, %p43
      %p45 = scmp.ne.s32.totalorder %s31, %s32
      %p46 = scmp.eq.s32.totalorder %s24, 1
      %p47 = por %p45, %p46
      %p49 = scmp.ne.s32.totalorder %s32, %s48
      %p50 = scmp.eq.s32.totalorder %s24, 0
      %p51 = por %p49, %p50
      %s53 = sadd.s32 %s52, 1
      %p56 = scmp.eq.s32.totalorder %s18, 1
      %p57 = scmp.ne.s32.totalorder %s52, %s54
      %p58 = scmp.eq.s32.totalorder %s18, 0
      %p59 = por %p57, %p58
      %p60 = scmp.ne.s32.totalorder %s52, %s54
      %p61 = scmp.eq.s32.totalorder %s23, 1
      %p62 = por %p60, %p61
      %p63 = scmp.ne.s32.totalorder %s54, %s55
      %p64 = scmp.eq.s32.totalorder %s23, 0
      %p65 = por %p63, %p64
      %p66 = scmp.ne.s32.totalorder %s54, %s55
      %p67 = scmp.eq.s32.totalorder %s24, 1
      %p68 = por %p66, %p67
      %p70 = scmp.ne.s32.totalorder %s55, %s69
      %p71 = scmp.eq.s32.totalorder %s24, 0
      %p72 = por %p70, %p71
      %s74 = sadd.s32 %s73, 1
      %p77 = scmp.eq.s32.totalorder %s18, 1
      %p78 = scmp.ne.s32.totalorder %s73, %s75
      %p79 = scmp.eq.s32.totalorder %s18, 0
      %p80 = por %p78, %p79
      %p81 = scmp.ne.s32.totalorder %s73, %s75
      %p82 = scmp.eq.s32.totalorder %s23, 1
      %p83 = por %p81, %p82
      %p84 = scmp.ne.s32.totalorder %s75, %s76
      %p85 = scmp.eq.s32.totalorder %s23, 0
      %p86 = por %p84, %p85
      %p87 = scmp.ne.s32.totalorder %s75, %s76
      %p88 = scmp.eq.s32.totalorder %s24, 1
      %p89 = por %p87, %p88
      %p91 = scmp.ne.s32.totalorder %s76, %s90
      %p92 = scmp.eq.s32.totalorder %s24, 0
      %p93 = por %p91, %p92
      %s95 = sadd.s32 %s94, 1
      %p98 = scmp.eq.s32.totalorder %s18, 1
      %p99 = scmp.ne.s32.totalorder %s94, %s96
      %p100 = scmp.eq.s32.totalorder %s18, 0
      %p101 = por %p99, %p100
      %p102 = scmp.ne.s32.totalorder %s94, %s96
      %p103 = scmp.eq.s32.totalorder %s23, 1
      %p104 = por %p102, %p103
      %p105 = scmp.ne.s32.totalorder %s96, %s97
      %p106 = scmp.eq.s32.totalorder %s23, 0
      %p107 = por %p105, %p106
      %p108 = scmp.ne.s32.totalorder %s96, %s97
      %p109 = scmp.eq.s32.totalorder %s24, 1
      %p110 = por %p108, %p109
      %p112 = scmp.ne.s32.totalorder %s97, %s111
      %p113 = scmp.eq.s32.totalorder %s24, 0
      %p114 = por %p112, %p113
      %s116 = sadd.s32 %s115, 1
      %p119 = scmp.eq.s32.totalorder %s18, 1
      %p120 = scmp.ne.s32.totalorder %s115, %s117
      %p121 = scmp.eq.s32.totalorder %s18, 0
      %p122 = por %p120, %p121
      %p123 = scmp.ne.s32.totalorder %s115, %s117
      %p124 = scmp.eq.s32.totalorder %s23, 1
      %p125 = por %p123, %p124
      %p126 = scmp.ne.s32.totalorder %s117, %s118
      %p127 = scmp.eq.s32.totalorder %s23, 0
      %p128 = por %p126, %p127
      %p129 = scmp.ne.s32.totalorder %s117, %s118
      %p130 = scmp.eq.s32.totalorder %s24, 1
      %p131 = por %p129, %p130
      %p133 = scmp.ne.s32.totalorder %s118, %s132
      %p134 = scmp.eq.s32.totalorder %s24, 0
      %p135 = por %p133, %p134
      %s137 = sadd.s32 %s136, 1
      %p140 = scmp.eq.s32.totalorder %s18, 1
      %p141 = scmp.ne.s32.totalorder %s136, %s138
      %p142 = scmp.eq.s32.totalorder %s18, 0
      %p143 = por %p141, %p142
      %p144 = scmp.ne.s32.totalorder %s136, %s138
      %p145 = scmp.eq.s32.totalorder %s23, 1
      %p146 = por %p144, %p145
      %p147 = scmp.ne.s32.totalorder %s138, %s139
      %p148 = scmp.eq.s32.totalorder %s23, 0
      %p149 = por %p147, %p148
      %p150 = scmp.ne.s32.totalorder %s138, %s139
      %p151 = scmp.eq.s32.totalorder %s24, 1
      %p152 = por %p150, %p151
      %p154 = scmp.ne.s32.totalorder %s139, %s153
      %p155 = scmp.eq.s32.totalorder %s24, 0
      %p156 = por %p154, %p155
      %s158 = sadd.s32 %s157, 1
      %p161 = scmp.eq.s32.totalorder %s18, 1
      %p162 = scmp.ne.s32.totalorder %s157, %s159
      %p163 = scmp.eq.s32.totalorder %s18, 0
      %p164 = por %p162, %p163
      %p165 = scmp.ne.s32.totalorder %s157, %s159
      %p166 = scmp.eq.s32.totalorder %s23, 1
      %p167 = por %p165, %p166
      %p168 = scmp.ne.s32.totalorder %s159, %s160
      %p169 = scmp.eq.s32.totalorder %s23, 0
      %p170 = por %p168, %p169
      %p171 = scmp.ne.s32.totalorder %s159, %s160
      %p172 = scmp.eq.s32.totalorder %s24, 1
      %p173 = por %p171, %p172
      %p175 = scmp.ne.s32.totalorder %s160, %s174
      %p176 = scmp.eq.s32.totalorder %s24, 0
      %p177 = por %p175, %p176
      %s178 = ssub.s32 %s18, %s25
      %p179 = scmp.eq.s32.totalorder %s178, 0
      %s181 = sadd.s32 %s180, 1
      %s182 = scalar_select %p179, %s180, %s181
      %p185 = pneg %p179
      %p186 = scmp.eq.s32.totalorder %s18, 1
      %p187 = por %p185, %p186
      %p188 = scmp.ne.s32.totalorder %s180, %s183
      %p189 = scmp.eq.s32.totalorder %s18, 0
      %p190 = por %p188, %p189
      %p191 = scmp.ne.s32.totalorder %s180, %s183
      %p192 = scmp.eq.s32.totalorder %s23, 1
      %p193 = por %p191, %p192
      %p194 = scmp.ne.s32.totalorder %s183, %s184
      %p195 = scmp.eq.s32.totalorder %s23, 0
      %p196 = por %p194, %p195
      %p197 = scmp.ne.s32.totalorder %s183, %s184
      %p198 = scmp.eq.s32.totalorder %s24, 1
      %p199 = por %p197, %p198
      %p201 = scmp.ne.s32.totalorder %s184, %s200
      %p202 = scmp.eq.s32.totalorder %s24, 0
      %p203 = por %p201, %p202
      %p204 = scmp.le.s32.totalorder 1, %s18
      %p205 = scmp.lt.s32.totalorder %s18, 3
      %p206 = pnand %p204, %p205
      %p207 = pneg %p206
      // Predicated region
      $region9: #{tpu_custom_call.1} parent=5 // pred_check
        _
      $region10: #{tpu_custom_call.1} parent=5 // pred_check_branch
        %209 = sbr.rel (%p206) target = $region12
      $region11: #{tpu_custom_call.1} parent=5 // pred_region
        %s210 = ssub.s32 %s18, 1
        // Predicated region
        $region13: #{tpu_custom_call.1} parent=11 // pred_check
          %p211 = pneg %p65
        $region14: #{tpu_custom_call.1} parent=11 // pred_check_branch
          %213 = sbr.rel (%p211) target = $region16
        $region15: #{tpu_custom_call.1} parent=11 // pred_region
          %s215 = ssub.s32 64, 64
          %216 = vsyncadd [#allocation6], %s215
          %s218 = sshll.u32 [#allocation5], 4
          %s219 = int_to_ptr.vmem [resolvable:$true] %s218
          %221 = dma.hbm_to_vmem [thread:$0]  %s1, 64, %s219, [#allocation6]
        $region16: #{tpu_custom_call.1} parent=11 // pred_fallthru
          _
        // Predicated region
        $region17: #{tpu_custom_call.1} parent=11 // pred_check
          %p222 = pneg %p86
        $region18: #{tpu_custom_call.1} parent=11 // pred_check_branch
          %224 = sbr.rel (%p222) target = $region20
        $region19: #{tpu_custom_call.1} parent=11 // pred_region
          %s226 = ssub.s32 128, 128
          %227 = vsyncadd [#allocation6], %s226
          %s229 = sshll.u32 [#allocation7], 4
          %s230 = int_to_ptr.vmem [resolvable:$true] %s229
          %232 = dma.hbm_to_vmem [thread:$0]  %s2, 128, %s230, [#allocation6]
        $region20: #{tpu_custom_call.1} parent=11 // pred_fallthru
          _
        // Predicated region
        $region21: #{tpu_custom_call.1} parent=11 // pred_check
          %p233 = pneg %p107
        $region22: #{tpu_custom_call.1} parent=11 // pred_check_branch
          %235 = sbr.rel (%p233) target = $region24
        $region23: #{tpu_custom_call.1} parent=11 // pred_region
          _
        $region24: #{tpu_custom_call.1} parent=11 // pred_fallthru
          _
        // Predicated region
        $region25: #{tpu_custom_call.1} parent=11 // pred_check
          %p236 = pneg %p128
        $region26: #{tpu_custom_call.1} parent=11 // pred_check_branch
          %238 = sbr.rel (%p236) target = $region28
        $region27: #{tpu_custom_call.1} parent=11 // pred_region
          %s240 = ssub.s32 256, 256
          %241 = vsyncadd [#allocation9], %s240
          %s242 = sshll.u32 [#allocation8], 4
          %s243 = int_to_ptr.vmem [resolvable:$true] %s242
          %248 = dma.hbm_to_vmem [thread:$0]  %s4, 256, %s243, [#allocation9], 128, 128, 8
        $region28: #{tpu_custom_call.1} parent=11 // pred_fallthru
          _
        // Predicated region
        $region29: #{tpu_custom_call.1} parent=11 // pred_check
          %p249 = pneg %p149
        $region30: #{tpu_custom_call.1} parent=11 // pred_check_branch
          %251 = sbr.rel (%p249) target = $region32
        $region31: #{tpu_custom_call.1} parent=11 // pred_region
          _
        $region32: #{tpu_custom_call.1} parent=11 // pred_fallthru
          _
        // Predicated region
        $region33: #{tpu_custom_call.1} parent=11 // pred_check
          %p252 = pneg %p170
        $region34: #{tpu_custom_call.1} parent=11 // pred_check_branch
          %254 = sbr.rel (%p252) target = $region36
        $region35: #{tpu_custom_call.1} parent=11 // pred_region
          %s256 = ssub.s32 163840, 163840
          %257 = vsyncadd [#allocation9], %s256
          %s258 = sshll.u32 [#allocation10], 4
          %s259 = int_to_ptr.vmem [resolvable:$true] %s258
          %264 = dma.hbm_to_vmem [thread:$0]  %s6, 163840, %s259, [#allocation9], 1024, 1024, 64
        $region36: #{tpu_custom_call.1} parent=11 // pred_fallthru
          _
      $region12: #{tpu_custom_call.1} parent=5 // pred_fallthru
        _
      %p265 = scmp.lt.s32.totalorder %s18, 2
      // Predicated region
      $region37: #{tpu_custom_call.1} parent=5 // pred_check
        %p266 = pneg %p265
      $region38: #{tpu_custom_call.1} parent=5 // pred_check_branch
        %268 = sbr.rel (%p266) target = $region40
      $region39: #{tpu_custom_call.1} parent=5 // pred_region
        // Predicated region
        $region41: #{tpu_custom_call.1} parent=39 // pred_check
          %p269 = pneg %p38
        $region42: #{tpu_custom_call.1} parent=39 // pred_check_branch
          %271 = sbr.rel (%p269) target = $region44
        $region43: #{tpu_custom_call.1} parent=39 // pred_region
          %s272 = sand.u32 %s28, 1
          %s273 = scalar_lea.sflag [#allocation4], %s272
          %s274 = sand.u32 %s28, 1
          %s275 = smul.addr %s274, 16
          %s276 = scalar_lea.vmem [#allocation3], %s275
          %s278 = ssub.s32 256, 256
          %279 = vsyncadd %s273, %s278
          %s280 = smul.addr %s18, 2
          %s281 = smul.addr %s280, 128
          %s282 = scalar_lea.hbm %s0, %s281
          %s284 = sshll.u32 %s276, 4
          %s285 = int_to_ptr.vmem [resolvable:$true] %s284
          %287 = dma.hbm_to_vmem [thread:$0]  %s282, 256, %s285, %s273
        $region44: #{tpu_custom_call.1} parent=39 // pred_fallthru
          _
      $region40: #{tpu_custom_call.1} parent=5 // pred_fallthru
        _
      %p288 = scmp.le.s32.totalorder 1, %s18
      %p289 = scmp.lt.s32.totalorder %s18, 3
      %p290 = pnand %p288, %p289
      %p291 = pneg %p290
      // Predicated region
      $region45: #{tpu_custom_call.1} parent=5 // pred_check
        _
      $region46: #{tpu_custom_call.1} parent=5 // pred_check_branch
        %293 = sbr.rel (%p290) target = $region48
      $region47: #{tpu_custom_call.1} parent=5 // pred_region
        %s294 = ssub.s32 %s18, 1
        %s295 = sand.u32 %s31, 1
        %s296 = scalar_lea.sflag [#allocation4], %s295
        %s297 = sand.u32 %s31, 1
        %s298 = smul.addr %s297, 16
        %s299 = scalar_lea.vmem [#allocation3], %s298
        // Predicated region
        $region49: #{tpu_custom_call.1} parent=47 // pred_check
          %p300 = pneg %p44
        $region50: #{tpu_custom_call.1} parent=47 // pred_check_branch
          %302 = sbr.rel (%p300) target = $region52
        $region51: #{tpu_custom_call.1} parent=47 // pred_region
          %303 = dma.done %s296, 256
        $region52: #{tpu_custom_call.1} parent=47 // pred_fallthru
          _
        // Predicated region
        $region53: #{tpu_custom_call.1} parent=47 // pred_check
          %p304 = pneg %p65
        $region54: #{tpu_custom_call.1} parent=47 // pred_check_branch
          %306 = sbr.rel (%p304) target = $region56
        $region55: #{tpu_custom_call.1} parent=47 // pred_region
          %307 = dma.done [#allocation6], 64
        $region56: #{tpu_custom_call.1} parent=47 // pred_fallthru
          _
        // Predicated region
        $region57: #{tpu_custom_call.1} parent=47 // pred_check
          %p308 = pneg %p86
        $region58: #{tpu_custom_call.1} parent=47 // pred_check_branch
          %310 = sbr.rel (%p308) target = $region60
        $region59: #{tpu_custom_call.1} parent=47 // pred_region
          %311 = dma.done [#allocation6], 128
        $region60: #{tpu_custom_call.1} parent=47 // pred_fallthru
          _
        // Predicated region
        $region61: #{tpu_custom_call.1} parent=47 // pred_check
          %p312 = pneg %p128
        $region62: #{tpu_custom_call.1} parent=47 // pred_check_branch
          %314 = sbr.rel (%p312) target = $region64
        $region63: #{tpu_custom_call.1} parent=47 // pred_region
          %315 = dma.done [#allocation9], 256
        $region64: #{tpu_custom_call.1} parent=47 // pred_fallthru
          _
        // Predicated region
        $region65: #{tpu_custom_call.1} parent=47 // pred_check
          %p316 = pneg %p170
        $region66: #{tpu_custom_call.1} parent=47 // pred_check_branch
          %318 = sbr.rel (%p316) target = $region68
        $region67: #{tpu_custom_call.1} parent=47 // pred_region
          %319 = dma.done [#allocation9], 163840
        $region68: #{tpu_custom_call.1} parent=47 // pred_fallthru
          _
        %s320 = sand.u32 %s31, 1
        %s321 = scalar_lea.sflag [#allocation4], %s320
        %s322 = sand.u32 %s31, 1
        %s323 = smul.addr %s322, 16
        %s324 = scalar_lea.vmem [#allocation3], %s323
        %p325 = pneg %p44
        %p326 = pneg %p41
        %p327 = pneg %p65
        %p328 = pneg %p62
        %p329 = pneg %p86
        %p330 = pneg %p83
        %p331 = pneg %p107
        %p332 = pneg %p104
        %p333 = pneg %p128
        %p334 = pneg %p125
        %p335 = pneg %p149
        %p336 = pneg %p146
        %p337 = pneg %p170
        %p338 = pneg %p167
        %p339 = pneg %p196
        %p340 = pneg %p193
        %p341 = scmp.lt.s32.totalorder %s23, 1
        %s342 = scalar_select %p341, %s23, 1
        %s343 = smul.addr %s342, 8
        %s344 = smul.addr %s343, 4
        %s345 = scalar_lea.vmem %s7, %s344
        %p346 = scmp.lt.s32.totalorder %s23, 1
        %s347 = scalar_select %p346, %s23, 1
        %s348 = smul.addr %s347, 8
        %s349 = smul.addr %s348, 4
        %s350 = scalar_lea.vmem %s7, %s349
        %351 = vst [vmem:[#allocation2] sm:$0xff] 0.0
        %352 = vst [vmem:[#allocation2 + $0x18] sm:$0xff] 0.0
        %v353 = vld [vmem:[#allocation5] ss:$2 sm:$0x3]
        %s354 = scalar_lea.vmem [#allocation5], 1
        %v355 = vld [vmem:[%s354] ss:$2 sm:$0x3]
        %v356 = vld [vmem:[%s299] sm:$0xff]
        %v357 = vld [vmem:[%s299 + $0x8] sm:$0xff]
        %v358 = vld [vmem:[#allocation7] sm:$0xff]
        %359 = vst [vmem:[#allocation2 + $0x8] sm:$0xff] %v356
        %360 = vst [vmem:[#allocation2 + $0x10] sm:$0xff] %v357
        %v361 = vld [vmem:[#allocation2] sm:$0xff]
        %v362 = vld [vmem:[#allocation2 + $0x8] sm:$0xff]
        %v363 = vld [vmem:[#allocation2 + $0x10] sm:$0xff]
        %v365 = vlaneseq
        %v366 = vshrl.u32 %v365, 7
        %v367 = vsub.s32 0, %v366
        %v368 = vrot.slane %v353, %v367
        %v369 = vlaneseq
        %v370 = vshrl.u32 %v369, 7
        %v371 = vsub.s32 1, %v370
        %v372 = vrot.slane %v353, %v371
        %373 = vrot.lane.b32.xlu0 %v368, 111
        %v374 = vpop.permute.xlu0 %373
        %375 = vrot.lane.b32.xlu0 %v372, 111
        %v376 = vpop.permute.xlu0 %375
        %vm377 = vcmask 908288
        %v378 = vsel %vm377, %v374, %v376
        %v382 = vmul.f32 %v361, %v374
        %v383 = vmul.f32 %v362, %v378
        %v384 = vmul.f32 %v363, %v376
        %v386 = vlaneseq
        %v387 = vshrl.u32 %v386, 7
        %v388 = vsub.s32 0, %v387
        %v389 = vrot.slane %v355, %v388
        %v390 = vlaneseq
        %v391 = vshrl.u32 %v390, 7
        %v392 = vsub.s32 1, %v391
        %v393 = vrot.slane %v355, %v392
        %394 = vrot.lane.b32.xlu0 %v389, 113
        %v395 = vpop.permute.xlu0 %394
        %396 = vrot.lane.b32.xlu0 %v393, 113
        %v397 = vpop.permute.xlu0 %396
        %vm398 = vcmask 924672
        %v399 = vsel %vm398, %v395, %v397
        %v403 = vmul.f32 %v361, %v395
        %v404 = vmul.f32 %v362, %v399
        %v405 = vmul.f32 %v363, %v397
        %406 = vrot.lane.b32.xlu0 %v368, 127
        %v407 = vpop.permute.xlu0 %406
        %408 = vrot.lane.b32.xlu0 %v372, 127
        %v409 = vpop.permute.xlu0 %408
        %vm410 = vcmask 1039360
        %v411 = vsel %vm410, %v407, %v409
        %v415 = vmul.f32 %v361, %v407
        %v416 = vmul.f32 %v362, %v411
        %v417 = vmul.f32 %v363, %v409
        %v418 = vld [vmem:[#allocation2 + $0x8] sm:$0xff]
        %v419 = vld [vmem:[#allocation2 + $0x10] sm:$0xff]
        %v420 = vld [vmem:[#allocation2 + $0x18] sm:$0xff]
        %421 = vrot.lane.b32.xlu0 %v389, 1
        %v422 = vpop.permute.xlu0 %421
        %423 = vrot.lane.b32.xlu0 %v393, 1
        %v424 = vpop.permute.xlu0 %423
        %vm425 = vcmask 7168
        %v426 = vsel %vm425, %v422, %v424
        %v430 = vmul.f32 %v418, %v422
        %v431 = vmul.f32 %v419, %v426
        %v432 = vmul.f32 %v420, %v424
        %433 = vrot.lane.b32.xlu0 %v368, 15
        %v434 = vpop.permute.xlu0 %433
        %435 = vrot.lane.b32.xlu0 %v372, 15
        %v436 = vpop.permute.xlu0 %435
        %vm437 = vcmask 121856
        %v438 = vsel %vm437, %v434, %v436
        %v442 = vmul.f32 %v418, %v434
        %v443 = vmul.f32 %v419, %v438
        %v444 = vmul.f32 %v420, %v436
        %445 = vrot.lane.b32.xlu0 %v389, 17
        %v446 = vpop.permute.xlu0 %445
        %447 = vrot.lane.b32.xlu0 %v393, 17
        %v448 = vpop.permute.xlu0 %447
        %vm449 = vcmask 138240
        %v450 = vsel %vm449, %v446, %v448
        %v454 = vmul.f32 %v418, %v446
        %v455 = vmul.f32 %v419, %v450
        %v456 = vmul.f32 %v420, %v448
        %460 = vrot.lane.b32.xlu0 %v361, 127
        %v461 = vpop.permute.xlu0 %460
        %462 = vrot.lane.b32.xlu0 %v362, 127
        %v463 = vpop.permute.xlu0 %462
        %464 = vrot.lane.b32.xlu0 %v363, 127
        %v465 = vpop.permute.xlu0 %464
        %v466 = vsel %vm410, %v461, %v463
        %v467 = vsel %vm410, %v463, %v465
        %471 = vrot.lane.b32.xlu0 %v403, 126
        %v472 = vpop.permute.xlu0 %471
        %473 = vrot.lane.b32.xlu0 %v404, 126
        %v474 = vpop.permute.xlu0 %473
        %475 = vrot.lane.b32.xlu0 %v405, 126
        %v476 = vpop.permute.xlu0 %475
        %vm477 = vcmask 1031168
        %v478 = vsel %vm477, %v472, %v474
        %v479 = vsel %vm477, %v474, %v476
        %483 = vrot.lane.b32.xlu0 %v415, 112
        %v484 = vpop.permute.xlu0 %483
        %485 = vrot.lane.b32.xlu0 %v416, 112
        %v486 = vpop.permute.xlu0 %485
        %487 = vrot.lane.b32.xlu0 %v417, 112
        %v488 = vpop.permute.xlu0 %487
        %vm489 = vcmask 916480
        %v490 = vsel %vm489, %v484, %v486
        %v491 = vsel %vm489, %v486, %v488
        %492 = vrot.lane.b32.xlu0 %v362, 111
        %v493 = vpop.permute.xlu0 %492
        %494 = vrot.lane.b32.xlu0 %v363, 111
        %v495 = vpop.permute.xlu0 %494
        %v496 = vsel %vm377, %v493, %v495
        %500 = vrot.lane.b32.xlu0 %v430, 110
        %v501 = vpop.permute.xlu0 %500
        %502 = vrot.lane.b32.xlu0 %v431, 110
        %v503 = vpop.permute.xlu0 %502
        %504 = vrot.lane.b32.xlu0 %v432, 110
        %v505 = vpop.permute.xlu0 %504
        %vm506 = vcmask 900096
        %v507 = vsel %vm506, %v501, %v503
        %v508 = vsel %vm506, %v503, %v505
        %512 = vrot.lane.b32.xlu0 %v442, 96
        %v513 = vpop.permute.xlu0 %512
        %514 = vrot.lane.b32.xlu0 %v443, 96
        %v515 = vpop.permute.xlu0 %514
        %516 = vrot.lane.b32.xlu0 %v444, 96
        %v517 = vpop.permute.xlu0 %516
        %vm518 = vcmask 785408
        %v519 = vsel %vm518, %v513, %v515
        %v520 = vsel %vm518, %v515, %v517
        %524 = vrot.lane.b32.xlu0 %v418, 95
        %v525 = vpop.permute.xlu0 %524
        %526 = vrot.lane.b32.xlu0 %v419, 95
        %v527 = vpop.permute.xlu0 %526
        %528 = vrot.lane.b32.xlu0 %v420, 95
        %v529 = vpop.permute.xlu0 %528
        %vm530 = vcmask 777216
        %v531 = vsel %vm530, %v525, %v527
        %v532 = vsel %vm530, %v527, %v529
        %536 = vrot.lane.b32.xlu0 %v454, 94
        %v537 = vpop.permute.xlu0 %536
        %538 = vrot.lane.b32.xlu0 %v455, 94
        %v539 = vpop.permute.xlu0 %538
        %540 = vrot.lane.b32.xlu0 %v456, 94
        %v541 = vpop.permute.xlu0 %540
        %vm542 = vcmask 769024
        %v543 = vsel %vm542, %v537, %v539
        %v544 = vsel %vm542, %v539, %v541
        %v545 = vld [vmem:[%s3] sm:$0xff]
        %547 = vset.pattern.permute.xlu0 0
        %548 = vperm.xlu0 %547, %v545
        %v549 = vpop.permute.xlu0 %548
        %554 = vrot.lane.b32.xlu0 %v382, 17
        %v555 = vpop.permute.xlu0 %554
        %556 = vrot.lane.b32.xlu0 %v383, 17
        %v557 = vpop.permute.xlu0 %556
        %558 = vrot.lane.b32.xlu0 %v384, 17
        %v559 = vpop.permute.xlu0 %558
        %560 = vrot.lane.b32.xlu0 %v466, 17
        %v561 = vpop.permute.xlu0 %560
        %562 = vrot.lane.b32.xlu0 %v467, 17
        %v563 = vpop.permute.xlu0 %562
        %564 = vrot.lane.b32.xlu0 %v465, 17
        %v565 = vpop.permute.xlu0 %564
        %566 = vrot.lane.b32.xlu0 %v478, 17
        %v567 = vpop.permute.xlu0 %566
        %568 = vrot.lane.b32.xlu0 %v479, 17
        %v569 = vpop.permute.xlu0 %568
        %570 = vrot.lane.b32.xlu0 %v476, 17
        %v571 = vpop.permute.xlu0 %570
        %572 = vrot.lane.b32.xlu0 %v490, 17
        %v573 = vpop.permute.xlu0 %572
        %574 = vrot.lane.b32.xlu0 %v491, 17
        %v575 = vpop.permute.xlu0 %574
        %576 = vrot.lane.b32.xlu0 %v488, 17
        %v577 = vpop.permute.xlu0 %576
        %578 = vrot.lane.b32.xlu0 %v493, 17
        %v579 = vpop.permute.xlu0 %578
        %580 = vrot.lane.b32.xlu0 %v496, 17
        %v581 = vpop.permute.xlu0 %580
        %582 = vrot.lane.b32.xlu0 %v495, 17
        %v583 = vpop.permute.xlu0 %582
        %584 = vrot.lane.b32.xlu0 %v501, 17
        %v585 = vpop.permute.xlu0 %584
        %586 = vrot.lane.b32.xlu0 %v507, 17
        %v587 = vpop.permute.xlu0 %586
        %588 = vrot.lane.b32.xlu0 %v508, 17
        %v589 = vpop.permute.xlu0 %588
        %590 = vrot.lane.b32.xlu0 %v513, 17
        %v591 = vpop.permute.xlu0 %590
        %592 = vrot.lane.b32.xlu0 %v519, 17
        %v593 = vpop.permute.xlu0 %592
        %594 = vrot.lane.b32.xlu0 %v520, 17
        %v595 = vpop.permute.xlu0 %594
        %596 = vrot.lane.b32.xlu0 %v525, 17
        %v597 = vpop.permute.xlu0 %596
        %598 = vrot.lane.b32.xlu0 %v531, 17
        %v599 = vpop.permute.xlu0 %598
        %600 = vrot.lane.b32.xlu0 %v532, 17
        %v601 = vpop.permute.xlu0 %600
        %602 = vrot.lane.b32.xlu0 %v537, 17
        %v603 = vpop.permute.xlu0 %602
        %604 = vrot.lane.b32.xlu0 %v543, 17
        %v605 = vpop.permute.xlu0 %604
        %606 = vrot.lane.b32.xlu0 %v544, 17
        %v607 = vpop.permute.xlu0 %606
        %v608 = vsel %vm449, %v555, %v557
        %v609 = vsel %vm449, %v557, %v559
        %v610 = vsel %vm449, %v561, %v563
        %v611 = vsel %vm449, %v563, %v565
        %v612 = vsel %vm449, %v567, %v569
        %v613 = vsel %vm449, %v569, %v571
        %v614 = vsel %vm449, %v573, %v575
        %v615 = vsel %vm449, %v575, %v577
        %v616 = vsel %vm449, %v579, %v581
        %v617 = vsel %vm449, %v581, %v583
        %v618 = vsel %vm449, %v585, %v587
        %v619 = vsel %vm449, %v587, %v589
        %v620 = vsel %vm449, %v591, %v593
        %v621 = vsel %vm449, %v593, %v595
        %v622 = vsel %vm449, %v597, %v599
        %v623 = vsel %vm449, %v599, %v601
        %v624 = vsel %vm449, %v603, %v605
        %v625 = vsel %vm449, %v605, %v607
        %vm644 = vcmask 588800
        %v646 = vsel %vm644, %v358, 0
        %648 = vmatprep.subr.mxu0 0.0
        %649 = vmatpush1.msra.mxu0 0.0
        %650 = vmatprep.subr.mxu0 0.0
        %651 = vmatpush1.msra.mxu0 0.0
        %652 = vmatprep.subr.mxu0 0.0
        %653 = vmatpush1.msra.mxu0 0.0
        %654 = vmatprep.subr.mxu0 0.0
        %655 = vmatpush1.msra.mxu0 0.0
        %656 = vmatprep.subr.mxu0 0.0
        %657 = vmatpush1.msra.mxu0 0.0
        %658 = vmatprep.subr.mxu0 0.0
        %659 = vmatpush1.msra.mxu0 0.0
        %660 = vmatprep.subr.mxu0 0.0
        %661 = vmatpush1.msra.mxu0 0.0
        %662 = vmatprep.subr.mxu0 %v625
        %663 = vmatpush1.msra.mxu0 %v624
        %664 = vmatprep.subr.mxu0 %v623
        %665 = vmatpush1.msra.mxu0 %v622
        %666 = vmatprep.subr.mxu0 %v621
        %667 = vmatpush1.msra.mxu0 %v620
        %668 = vmatprep.subr.mxu0 %v619
        %669 = vmatpush1.msra.mxu0 %v618
        %670 = vmatprep.subr.mxu0 %v617
        %671 = vmatpush1.msra.mxu0 %v616
        %672 = vmatprep.subr.mxu0 %v615
        %673 = vmatpush1.msra.mxu0 %v614
        %674 = vmatprep.subr.mxu0 %v613
        %675 = vmatpush1.msra.mxu0 %v612
        %676 = vmatprep.subr.mxu0 %v611
        %677 = vmatpush1.msra.mxu0 %v610
        %678 = vmatprep.subr.mxu0 %v609
        %679 = vmatpush1.msra.mxu0 %v608
        %680 = vmatprep.subr.mxu0 0.0
        %681 = vmatpush2.msra.mxu0 0.0
        %682 = vmatprep.subr.mxu0 0.0
        %683 = vmatpush2.msra.mxu0 0.0
        %684 = vmatprep.subr.mxu0 0.0
        %685 = vmatpush2.msra.mxu0 0.0
        %686 = vmatprep.subr.mxu0 0.0
        %687 = vmatpush2.msra.mxu0 0.0
        %688 = vmatprep.subr.mxu0 0.0
        %689 = vmatpush2.msra.mxu0 0.0
        %690 = vmatprep.subr.mxu0 0.0
        %691 = vmatpush2.msra.mxu0 0.0
        %692 = vmatprep.subr.mxu0 0.0
        %693 = vmatpush2.msra.mxu0 0.0
        %694 = vmatprep.subr.mxu0 0.0
        %695 = vmatpush2.msra.mxu0 0.0
        %696 = vmatprep.subr.mxu0 0.0
        %697 = vmatpush2.msra.mxu0 0.0
        %698 = vmatprep.subr.mxu0 0.0
        %699 = vmatpush2.msra.mxu0 0.0
        %700 = vmatprep.subr.mxu0 0.0
        %701 = vmatpush2.msra.mxu0 0.0
        %702 = vmatprep.subr.mxu0 0.0
        %703 = vmatpush2.msra.mxu0 0.0
        %704 = vmatprep.subr.mxu0 0.0
        %705 = vmatpush2.msra.mxu0 0.0
        %706 = vmatprep.subr.mxu0 0.0
        %707 = vmatpush2.msra.mxu0 0.0
        %708 = vmatprep.subr.mxu0 0.0
        %709 = vmatpush2.msra.mxu0 0.0
        %710 = vmatprep.subr.mxu0 0.0
        %711 = vmatpush2.msra.mxu0 0.0
        %712 = vmatprep.mubr.f32.mxu0 0.0
        %713 = vmatmul.mubr.f32.gmra.mxu0 %v646
        %v714 = vpop.f32.mrf.mxu0
        %v715 = vadd.f32 %v549, %v714
        %v716 = vpop.f32.mrf.mxu0
        %v717 = vadd.f32 %v549, %v716
        %718 = vdwg.mxu0
        %v719 = vmax.f32 %v715, 0.0
        %v720 = vmax.f32 %v717, 0.0
        %v721 = vld [vmem:[#allocation8] sm:$0xff]
        %v722 = vld [vmem:[#allocation8 + $0x8] sm:$0xf]
        %723 = vst [vmem:[#allocation2 + $0x8] sm:$0xff] %v719
        %724 = vst [vmem:[#allocation2 + $0x10] sm:$0xff] %v720
        %v725 = vld [vmem:[#allocation2] sm:$0xff]
        %v726 = vld [vmem:[#allocation2 + $0x8] sm:$0xff]
        %v727 = vld [vmem:[#allocation2 + $0x10] sm:$0xff]
        %v728 = vmul.f32 %v725, %v374
        %v729 = vmul.f32 %v726, %v378
        %v730 = vmul.f32 %v727, %v376
        %v731 = vmul.f32 %v725, %v395
        %v732 = vmul.f32 %v726, %v399
        %v733 = vmul.f32 %v727, %v397
        %v734 = vmul.f32 %v725, %v407
        %v735 = vmul.f32 %v726, %v411
        %v736 = vmul.f32 %v727, %v409
        %v737 = vld [vmem:[#allocation2 + $0x8] sm:$0xff]
        %v738 = vld [vmem:[#allocation2 + $0x10] sm:$0xff]
        %v739 = vld [vmem:[#allocation2 + $0x18] sm:$0xff]
        %v740 = vmul.f32 %v737, %v422
        %v741 = vmul.f32 %v738, %v426
        %v742 = vmul.f32 %v739, %v424
        %v743 = vmul.f32 %v737, %v434
        %v744 = vmul.f32 %v738, %v438
        %v745 = vmul.f32 %v739, %v436
        %v746 = vmul.f32 %v737, %v446
        %v747 = vmul.f32 %v738, %v450
        %v748 = vmul.f32 %v739, %v448
        %752 = vrot.lane.b32.xlu0 %v725, 127
        %v753 = vpop.permute.xlu0 %752
        %754 = vrot.lane.b32.xlu0 %v726, 127
        %v755 = vpop.permute.xlu0 %754
        %756 = vrot.lane.b32.xlu0 %v727, 127
        %v757 = vpop.permute.xlu0 %756
        %v758 = vsel %vm410, %v753, %v755
        %v759 = vsel %vm410, %v755, %v757
        %763 = vrot.lane.b32.xlu0 %v731, 126
        %v764 = vpop.permute.xlu0 %763
        %765 = vrot.lane.b32.xlu0 %v732, 126
        %v766 = vpop.permute.xlu0 %765
        %767 = vrot.lane.b32.xlu0 %v733, 126
        %v768 = vpop.permute.xlu0 %767
        %v769 = vsel %vm477, %v764, %v766
        %v770 = vsel %vm477, %v766, %v768
        %774 = vrot.lane.b32.xlu0 %v734, 112
        %v775 = vpop.permute.xlu0 %774
        %776 = vrot.lane.b32.xlu0 %v735, 112
        %v777 = vpop.permute.xlu0 %776
        %778 = vrot.lane.b32.xlu0 %v736, 112
        %v779 = vpop.permute.xlu0 %778
        %v780 = vsel %vm489, %v775, %v777
        %v781 = vsel %vm489, %v777, %v779
        %782 = vrot.lane.b32.xlu0 %v726, 111
        %v783 = vpop.permute.xlu0 %782
        %784 = vrot.lane.b32.xlu0 %v727, 111
        %v785 = vpop.permute.xlu0 %784
        %v786 = vsel %vm377, %v783, %v785
        %790 = vrot.lane.b32.xlu0 %v740, 110
        %v791 = vpop.permute.xlu0 %790
        %792 = vrot.lane.b32.xlu0 %v741, 110
        %v793 = vpop.permute.xlu0 %792
        %794 = vrot.lane.b32.xlu0 %v742, 110
        %v795 = vpop.permute.xlu0 %794
        %v796 = vsel %vm506, %v791, %v793
        %v797 = vsel %vm506, %v793, %v795
        %801 = vrot.lane.b32.xlu0 %v743, 96
        %v802 = vpop.permute.xlu0 %801
        %803 = vrot.lane.b32.xlu0 %v744, 96
        %v804 = vpop.permute.xlu0 %803
        %805 = vrot.lane.b32.xlu0 %v745, 96
        %v806 = vpop.permute.xlu0 %805
        %v807 = vsel %vm518, %v802, %v804
        %v808 = vsel %vm518, %v804, %v806
        %812 = vrot.lane.b32.xlu0 %v737, 95
        %v813 = vpop.permute.xlu0 %812
        %814 = vrot.lane.b32.xlu0 %v738, 95
        %v815 = vpop.permute.xlu0 %814
        %816 = vrot.lane.b32.xlu0 %v739, 95
        %v817 = vpop.permute.xlu0 %816
        %v818 = vsel %vm530, %v813, %v815
        %v819 = vsel %vm530, %v815, %v817
        %823 = vrot.lane.b32.xlu0 %v746, 94
        %v824 = vpop.permute.xlu0 %823
        %825 = vrot.lane.b32.xlu0 %v747, 94
        %v826 = vpop.permute.xlu0 %825
        %827 = vrot.lane.b32.xlu0 %v748, 94
        %v828 = vpop.permute.xlu0 %827
        %v829 = vsel %vm542, %v824, %v826
        %v830 = vsel %vm542, %v826, %v828
        %v831 = vld [vmem:[%s5] sm:$0xff]
        %v832 = vld [vmem:[%s5 + $0x8] sm:$0xf]
        %834 = vset.pattern.permute.xlu0 0
        %835 = vperm.xlu0 %834, %v831
        %v836 = vpop.permute.xlu0 %835
        %839 = vset.pattern.permute.xlu0 0
        %840 = vperm.xlu0 %839, %v832
        %v841 = vpop.permute.xlu0 %840
        %846 = vrot.lane.b32.xlu0 %v728, 17
        %v847 = vpop.permute.xlu0 %846
        %848 = vrot.lane.b32.xlu0 %v729, 17
        %v849 = vpop.permute.xlu0 %848
        %850 = vrot.lane.b32.xlu0 %v730, 17
        %v851 = vpop.permute.xlu0 %850
        %852 = vrot.lane.b32.xlu0 %v758, 17
        %v853 = vpop.permute.xlu0 %852
        %854 = vrot.lane.b32.xlu0 %v759, 17
        %v855 = vpop.permute.xlu0 %854
        %856 = vrot.lane.b32.xlu0 %v757, 17
        %v857 = vpop.permute.xlu0 %856
        %858 = vrot.lane.b32.xlu0 %v769, 17
        %v859 = vpop.permute.xlu0 %858
        %860 = vrot.lane.b32.xlu0 %v770, 17
        %v861 = vpop.permute.xlu0 %860
        %862 = vrot.lane.b32.xlu0 %v768, 17
        %v863 = vpop.permute.xlu0 %862
        %864 = vrot.lane.b32.xlu0 %v780, 17
        %v865 = vpop.permute.xlu0 %864
        %866 = vrot.lane.b32.xlu0 %v781, 17
        %v867 = vpop.permute.xlu0 %866
        %868 = vrot.lane.b32.xlu0 %v779, 17
        %v869 = vpop.permute.xlu0 %868
        %870 = vrot.lane.b32.xlu0 %v783, 17
        %v871 = vpop.permute.xlu0 %870
        %872 = vrot.lane.b32.xlu0 %v786, 17
        %v873 = vpop.permute.xlu0 %872
        %874 = vrot.lane.b32.xlu0 %v785, 17
        %v875 = vpop.permute.xlu0 %874
        %876 = vrot.lane.b32.xlu0 %v791, 17
        %v877 = vpop.permute.xlu0 %876
        %878 = vrot.lane.b32.xlu0 %v796, 17
        %v879 = vpop.permute.xlu0 %878
        %880 = vrot.lane.b32.xlu0 %v797, 17
        %v881 = vpop.permute.xlu0 %880
        %882 = vrot.lane.b32.xlu0 %v802, 17
        %v883 = vpop.permute.xlu0 %882
        %884 = vrot.lane.b32.xlu0 %v807, 17
        %v885 = vpop.permute.xlu0 %884
        %886 = vrot.lane.b32.xlu0 %v808, 17
        %v887 = vpop.permute.xlu0 %886
        %888 = vrot.lane.b32.xlu0 %v813, 17
        %v889 = vpop.permute.xlu0 %888
        %890 = vrot.lane.b32.xlu0 %v818, 17
        %v891 = vpop.permute.xlu0 %890
        %892 = vrot.lane.b32.xlu0 %v819, 17
        %v893 = vpop.permute.xlu0 %892
        %894 = vrot.lane.b32.xlu0 %v824, 17
        %v895 = vpop.permute.xlu0 %894
        %896 = vrot.lane.b32.xlu0 %v829, 17
        %v897 = vpop.permute.xlu0 %896
        %898 = vrot.lane.b32.xlu0 %v830, 17
        %v899 = vpop.permute.xlu0 %898
        %v900 = vsel %vm449, %v847, %v849
        %v901 = vsel %vm449, %v849, %v851
        %v902 = vsel %vm449, %v853, %v855
        %v903 = vsel %vm449, %v855, %v857
        %v904 = vsel %vm449, %v859, %v861
        %v905 = vsel %vm449, %v861, %v863
        %v906 = vsel %vm449, %v865, %v867
        %v907 = vsel %vm449, %v867, %v869
        %v908 = vsel %vm449, %v871, %v873
        %v909 = vsel %vm449, %v873, %v875
        %v910 = vsel %vm449, %v877, %v879
        %v911 = vsel %vm449, %v879, %v881
        %v912 = vsel %vm449, %v883, %v885
        %v913 = vsel %vm449, %v885, %v887
        %v914 = vsel %vm449, %v889, %v891
        %v915 = vsel %vm449, %v891, %v893
        %v916 = vsel %vm449, %v895, %v897
        %v917 = vsel %vm449, %v897, %v899
        %v937 = vsel %vm644, %v721, 0
        %v940 = vsel %vm644, %v722, 0
        %942 = vmatprep.subr.mxu0 0.0
        %943 = vmatpush1.msra.mxu0 0.0
        %944 = vmatprep.subr.mxu0 0.0
        %945 = vmatpush1.msra.mxu0 0.0
        %946 = vmatprep.subr.mxu0 0.0
        %947 = vmatpush1.msra.mxu0 0.0
        %948 = vmatprep.subr.mxu0 0.0
        %949 = vmatpush1.msra.mxu0 0.0
        %950 = vmatprep.subr.mxu0 0.0
        %951 = vmatpush1.msra.mxu0 0.0
        %952 = vmatprep.subr.mxu0 0.0
        %953 = vmatpush1.msra.mxu0 0.0
        %954 = vmatprep.subr.mxu0 0.0
        %955 = vmatpush1.msra.mxu0 0.0
        %956 = vmatprep.subr.mxu0 %v917
        %957 = vmatpush1.msra.mxu0 %v916
        %958 = vmatprep.subr.mxu0 %v915
        %959 = vmatpush1.msra.mxu0 %v914
        %960 = vmatprep.subr.mxu0 %v913
        %961 = vmatpush1.msra.mxu0 %v912
        %962 = vmatprep.subr.mxu0 %v911
        %963 = vmatpush1.msra.mxu0 %v910
        %964 = vmatprep.subr.mxu0 %v909
        %965 = vmatpush1.msra.mxu0 %v908
        %966 = vmatprep.subr.mxu0 %v907
        %967 = vmatpush1.msra.mxu0 %v906
        %968 = vmatprep.subr.mxu0 %v905
        %969 = vmatpush1.msra.mxu0 %v904
        %970 = vmatprep.subr.mxu0 %v903
        %971 = vmatpush1.msra.mxu0 %v902
        %972 = vmatprep.subr.mxu0 %v901
        %973 = vmatpush1.msra.mxu0 %v900
        %974 = vmatprep.subr.mxu0 0.0
        %975 = vmatpush2.msra.mxu0 0.0
        %976 = vmatprep.subr.mxu0 0.0
        %977 = vmatpush2.msra.mxu0 0.0
        %978 = vmatprep.subr.mxu0 0.0
        %979 = vmatpush2.msra.mxu0 0.0
        %980 = vmatprep.subr.mxu0 0.0
        %981 = vmatpush2.msra.mxu0 0.0
        %982 = vmatprep.subr.mxu0 0.0
        %983 = vmatpush2.msra.mxu0 0.0
        %984 = vmatprep.subr.mxu0 0.0
        %985 = vmatpush2.msra.mxu0 0.0
        %986 = vmatprep.subr.mxu0 0.0
        %987 = vmatpush2.msra.mxu0 0.0
        %988 = vmatprep.subr.mxu0 0.0
        %989 = vmatpush2.msra.mxu0 0.0
        %990 = vmatprep.subr.mxu0 0.0
        %991 = vmatpush2.msra.mxu0 0.0
        %992 = vmatprep.subr.mxu0 0.0
        %993 = vmatpush2.msra.mxu0 0.0
        %994 = vmatprep.subr.mxu0 0.0
        %995 = vmatpush2.msra.mxu0 0.0
        %996 = vmatprep.subr.mxu0 0.0
        %997 = vmatpush2.msra.mxu0 0.0
        %998 = vmatprep.subr.mxu0 0.0
        %999 = vmatpush2.msra.mxu0 0.0
        %1000 = vmatprep.subr.mxu0 0.0
        %1001 = vmatpush2.msra.mxu0 0.0
        %1002 = vmatprep.subr.mxu0 0.0
        %1003 = vmatpush2.msra.mxu0 0.0
        %1004 = vmatprep.subr.mxu0 0.0
        %1005 = vmatpush2.msra.mxu0 0.0
        %1006 = vmatprep.mubr.f32.mxu0 0.0
        %1007 = vmatmul.mubr.f32.gmra.mxu0 %v937
        %v1008 = vpop.f32.mrf.mxu0
        %v1009 = vadd.f32 %v836, %v1008
        %v1010 = vpop.f32.mrf.mxu0
        %v1011 = vadd.f32 %v836, %v1010
        %1012 = vmatprep.mubr.f32.mxu0 0.0
        %1013 = vmatmul.mubr.f32.gmra.mxu0 %v940
        %v1014 = vpop.f32.mrf.mxu0
        %v1015 = vadd.f32 %v841, %v1014
        %v1016 = vpop.f32.mrf.mxu0
        %v1017 = vadd.f32 %v841, %v1016
        %1018 = vdwg.mxu0
        %s1019 = scalar_lea.vmem [#allocation10], 8192
        %v1020 = vld [vmem:[%s1019] sm:$0xff]
        %v1021 = vld [vmem:[%s1019 + $0x8] sm:$0xff]
        %v1022 = vld [vmem:[%s1019 + $0x10] sm:$0xff]
        %v1023 = vld [vmem:[%s1019 + $0x18] sm:$0xff]
        %v1024 = vld [vmem:[%s1019 + $0x20] sm:$0xff]
        %v1025 = vld [vmem:[%s1019 + $0x28] sm:$0xff]
        %v1026 = vld [vmem:[%s1019 + $0x30] sm:$0xff]
        %v1027 = vld [vmem:[%s1019 + $0x38] sm:$0xff]
        %v1028 = vld [vmem:[%s1019 + $0x40] sm:$0xff]
        %v1029 = vld [vmem:[%s1019 + $0x48] sm:$0xff]
        %v1030 = vld [vmem:[%s1019 + $0x50] sm:$0xff]
        %v1031 = vld [vmem:[%s1019 + $0x58] sm:$0xff]
        %v1032 = vld [vmem:[%s1019 + $0x60] sm:$0xff]
        %v1033 = vld [vmem:[%s1019 + $0x68] sm:$0xff]
        %v1034 = vld [vmem:[%s1019 + $0x70] sm:$0xff]
        %v1035 = vld [vmem:[%s1019 + $0x78] sm:$0xff]
        %v1036 = vld [vmem:[%s1019 + $0x80] sm:$0xff]
        %v1037 = vld [vmem:[%s1019 + $0x88] sm:$0xff]
        %v1038 = vld [vmem:[%s1019 + $0x90] sm:$0xff]
        %v1039 = vld [vmem:[%s1019 + $0x98] sm:$0xff]
        %v1040 = vld [vmem:[%s1019 + $0xa0] sm:$0xff]
        %v1041 = vld [vmem:[%s1019 + $0xa8] sm:$0xff]
        %v1042 = vld [vmem:[%s1019 + $0xb0] sm:$0xff]
        %v1043 = vld [vmem:[%s1019 + $0xb8] sm:$0xff]
        %v1044 = vld [vmem:[%s1019 + $0xc0] sm:$0xff]
        %v1045 = vld [vmem:[%s1019 + $0xc8] sm:$0xff]
        %v1046 = vld [vmem:[%s1019 + $0xd0] sm:$0xff]
        %v1047 = vld [vmem:[%s1019 + $0xd8] sm:$0xff]
        %v1048 = vld [vmem:[%s1019 + $0xe0] sm:$0xff]
        %v1049 = vld [vmem:[%s1019 + $0xe8] sm:$0xff]
        %v1050 = vld [vmem:[%s1019 + $0xf0] sm:$0xff]
        %v1051 = vld [vmem:[%s1019 + $0xf8] sm:$0xff]
        %v1052 = vld [vmem:[%s1019 + $0x100] sm:$0xff]
        %v1053 = vld [vmem:[%s1019 + $0x108] sm:$0xff]
        %v1054 = vld [vmem:[%s1019 + $0x110] sm:$0xff]
        %v1055 = vld [vmem:[%s1019 + $0x118] sm:$0xff]
        %v1056 = vld [vmem:[%s1019 + $0x120] sm:$0xff]
        %v1057 = vld [vmem:[%s1019 + $0x128] sm:$0xff]
        %v1058 = vld [vmem:[%s1019 + $0x130] sm:$0xff]
        %v1059 = vld [vmem:[%s1019 + $0x138] sm:$0xff]
        %v1060 = vld [vmem:[%s1019 + $0x140] sm:$0xff]
        %v1061 = vld [vmem:[%s1019 + $0x148] sm:$0xff]
        %v1062 = vld [vmem:[%s1019 + $0x150] sm:$0xff]
        %v1063 = vld [vmem:[%s1019 + $0x158] sm:$0xff]
        %v1064 = vld [vmem:[%s1019 + $0x160] sm:$0xff]
        %v1065 = vld [vmem:[%s1019 + $0x168] sm:$0xff]
        %v1066 = vld [vmem:[%s1019 + $0x170] sm:$0xff]
        %v1067 = vld [vmem:[%s1019 + $0x178] sm:$0xff]
        %v1068 = vld [vmem:[%s1019 + $0x180] sm:$0xff]
        %v1069 = vld [vmem:[%s1019 + $0x188] sm:$0xff]
        %v1070 = vld [vmem:[%s1019 + $0x190] sm:$0xff]
        %v1071 = vld [vmem:[%s1019 + $0x198] sm:$0xff]
        %v1072 = vld [vmem:[%s1019 + $0x1a0] sm:$0xff]
        %v1073 = vld [vmem:[%s1019 + $0x1a8] sm:$0xff]
        %v1074 = vld [vmem:[%s1019 + $0x1b0] sm:$0xff]
        %v1075 = vld [vmem:[%s1019 + $0x1b8] sm:$0xff]
        %v1076 = vld [vmem:[%s1019 + $0x1c0] sm:$0xff]
        %v1077 = vld [vmem:[%s1019 + $0x1c8] sm:$0xff]
        %v1078 = vld [vmem:[%s1019 + $0x1d0] sm:$0xff]
        %v1079 = vld [vmem:[%s1019 + $0x1d8] sm:$0xff]
        %v1080 = vld [vmem:[%s1019 + $0x1e0] sm:$0xff]
        %v1081 = vld [vmem:[%s1019 + $0x1e8] sm:$0xff]
        %v1082 = vld [vmem:[%s1019 + $0x1f0] sm:$0xff]
        %v1083 = vld [vmem:[%s1019 + $0x1f8] sm:$0xff]
        %v1084 = vld [vmem:[%s1019 + $0x200] sm:$0xff]
        %v1085 = vld [vmem:[%s1019 + $0x208] sm:$0xff]
        %v1086 = vld [vmem:[%s1019 + $0x210] sm:$0xff]
        %v1087 = vld [vmem:[%s1019 + $0x218] sm:$0xff]
        %v1088 = vld [vmem:[%s1019 + $0x220] sm:$0xff]
        %v1089 = vld [vmem:[%s1019 + $0x228] sm:$0xff]
        %v1090 = vld [vmem:[%s1019 + $0x230] sm:$0xff]
        %v1091 = vld [vmem:[%s1019 + $0x238] sm:$0xff]
        %v1092 = vld [vmem:[%s1019 + $0x240] sm:$0xff]
        %v1093 = vld [vmem:[%s1019 + $0x248] sm:$0xff]
        %v1094 = vld [vmem:[%s1019 + $0x250] sm:$0xff]
        %v1095 = vld [vmem:[%s1019 + $0x258] sm:$0xff]
        %v1096 = vld [vmem:[%s1019 + $0x260] sm:$0xff]
        %v1097 = vld [vmem:[%s1019 + $0x268] sm:$0xff]
        %v1098 = vld [vmem:[%s1019 + $0x270] sm:$0xff]
        %v1099 = vld [vmem:[%s1019 + $0x278] sm:$0xff]
        %v1100 = vld [vmem:[%s1019 + $0x280] sm:$0xff]
        %v1101 = vld [vmem:[%s1019 + $0x288] sm:$0xff]
        %v1102 = vld [vmem:[%s1019 + $0x290] sm:$0xff]
        %v1103 = vld [vmem:[%s1019 + $0x298] sm:$0xff]
        %v1104 = vld [vmem:[%s1019 + $0x2a0] sm:$0xff]
        %v1105 = vld [vmem:[%s1019 + $0x2a8] sm:$0xff]
        %v1106 = vld [vmem:[%s1019 + $0x2b0] sm:$0xff]
        %v1107 = vld [vmem:[%s1019 + $0x2b8] sm:$0xff]
        %v1108 = vld [vmem:[%s1019 + $0x2c0] sm:$0xff]
        %v1109 = vld [vmem:[%s1019 + $0x2c8] sm:$0xff]
        %v1110 = vld [vmem:[%s1019 + $0x2d0] sm:$0xff]
        %v1111 = vld [vmem:[%s1019 + $0x2d8] sm:$0xff]
        %v1112 = vld [vmem:[%s1019 + $0x2e0] sm:$0xff]
        %v1113 = vld [vmem:[%s1019 + $0x2e8] sm:$0xff]
        %v1114 = vld [vmem:[%s1019 + $0x2f0] sm:$0xff]
        %v1115 = vld [vmem:[%s1019 + $0x2f8] sm:$0xff]
        %v1116 = vld [vmem:[%s1019 + $0x300] sm:$0xff]
        %v1117 = vld [vmem:[%s1019 + $0x308] sm:$0xff]
        %v1118 = vld [vmem:[%s1019 + $0x310] sm:$0xff]
        %v1119 = vld [vmem:[%s1019 + $0x318] sm:$0xff]
        %v1120 = vld [vmem:[%s1019 + $0x320] sm:$0xff]
        %v1121 = vld [vmem:[%s1019 + $0x328] sm:$0xff]
        %v1122 = vld [vmem:[%s1019 + $0x330] sm:$0xff]
        %v1123 = vld [vmem:[%s1019 + $0x338] sm:$0xff]
        %v1124 = vld [vmem:[%s1019 + $0x340] sm:$0xff]
        %v1125 = vld [vmem:[%s1019 + $0x348] sm:$0xff]
        %v1126 = vld [vmem:[%s1019 + $0x350] sm:$0xff]
        %v1127 = vld [vmem:[%s1019 + $0x358] sm:$0xff]
        %v1128 = vld [vmem:[%s1019 + $0x360] sm:$0xff]
        %v1129 = vld [vmem:[%s1019 + $0x368] sm:$0xff]
        %v1130 = vld [vmem:[%s1019 + $0x370] sm:$0xff]
        %v1131 = vld [vmem:[%s1019 + $0x378] sm:$0xff]
        %v1132 = vld [vmem:[%s1019 + $0x380] sm:$0xff]
        %v1133 = vld [vmem:[%s1019 + $0x388] sm:$0xff]
        %v1134 = vld [vmem:[%s1019 + $0x390] sm:$0xff]
        %v1135 = vld [vmem:[%s1019 + $0x398] sm:$0xff]
        %v1136 = vld [vmem:[%s1019 + $0x3a0] sm:$0xff]
        %v1137 = vld [vmem:[%s1019 + $0x3a8] sm:$0xff]
        %v1138 = vld [vmem:[%s1019 + $0x3b0] sm:$0xff]
        %v1139 = vld [vmem:[%s1019 + $0x3b8] sm:$0xff]
        %v1140 = vld [vmem:[%s1019 + $0x3c0] sm:$0xff]
        %v1141 = vld [vmem:[%s1019 + $0x3c8] sm:$0xff]
        %v1142 = vld [vmem:[%s1019 + $0x3d0] sm:$0xff]
        %v1143 = vld [vmem:[%s1019 + $0x3d8] sm:$0xff]
        %v1144 = vld [vmem:[%s1019 + $0x3e0] sm:$0xff]
        %v1145 = vld [vmem:[%s1019 + $0x3e8] sm:$0xff]
        %v1146 = vld [vmem:[%s1019 + $0x3f0] sm:$0xff]
        %v1147 = vld [vmem:[%s1019 + $0x3f8] sm:$0xff]
        %v1148 = vld [vmem:[%s1019 + $0x400] sm:$0xff]
        %v1149 = vld [vmem:[%s1019 + $0x408] sm:$0xff]
        %v1150 = vld [vmem:[%s1019 + $0x410] sm:$0xff]
        %v1151 = vld [vmem:[%s1019 + $0x418] sm:$0xff]
        %v1152 = vld [vmem:[%s1019 + $0x420] sm:$0xff]
        %v1153 = vld [vmem:[%s1019 + $0x428] sm:$0xff]
        %v1154 = vld [vmem:[%s1019 + $0x430] sm:$0xff]
        %v1155 = vld [vmem:[%s1019 + $0x438] sm:$0xff]
        %v1156 = vld [vmem:[%s1019 + $0x440] sm:$0xff]
        %v1157 = vld [vmem:[%s1019 + $0x448] sm:$0xff]
        %v1158 = vld [vmem:[%s1019 + $0x450] sm:$0xff]
        %v1159 = vld [vmem:[%s1019 + $0x458] sm:$0xff]
        %v1160 = vld [vmem:[%s1019 + $0x460] sm:$0xff]
        %v1161 = vld [vmem:[%s1019 + $0x468] sm:$0xff]
        %v1162 = vld [vmem:[%s1019 + $0x470] sm:$0xff]
        %v1163 = vld [vmem:[%s1019 + $0x478] sm:$0xff]
        %v1164 = vld [vmem:[%s1019 + $0x480] sm:$0xff]
        %v1165 = vld [vmem:[%s1019 + $0x488] sm:$0xff]
        %v1166 = vld [vmem:[%s1019 + $0x490] sm:$0xff]
        %v1167 = vld [vmem:[%s1019 + $0x498] sm:$0xff]
        %v1168 = vld [vmem:[%s1019 + $0x4a0] sm:$0xff]
        %v1169 = vld [vmem:[%s1019 + $0x4a8] sm:$0xff]
        %v1170 = vld [vmem:[%s1019 + $0x4b0] sm:$0xff]
        %v1171 = vld [vmem:[%s1019 + $0x4b8] sm:$0xff]
        %v1172 = vld [vmem:[%s1019 + $0x4c0] sm:$0xff]
        %v1173 = vld [vmem:[%s1019 + $0x4c8] sm:$0xff]
        %v1174 = vld [vmem:[%s1019 + $0x4d0] sm:$0xff]
        %v1175 = vld [vmem:[%s1019 + $0x4d8] sm:$0xff]
        %v1176 = vld [vmem:[%s1019 + $0x4e0] sm:$0xff]
        %v1177 = vld [vmem:[%s1019 + $0x4e8] sm:$0xff]
        %v1178 = vld [vmem:[%s1019 + $0x4f0] sm:$0xff]
        %v1179 = vld [vmem:[%s1019 + $0x4f8] sm:$0xff]
        %v1180 = vld [vmem:[%s1019 + $0x500] sm:$0xff]
        %v1181 = vld [vmem:[%s1019 + $0x508] sm:$0xff]
        %v1182 = vld [vmem:[%s1019 + $0x510] sm:$0xff]
        %v1183 = vld [vmem:[%s1019 + $0x518] sm:$0xff]
        %v1184 = vld [vmem:[%s1019 + $0x520] sm:$0xff]
        %v1185 = vld [vmem:[%s1019 + $0x528] sm:$0xff]
        %v1186 = vld [vmem:[%s1019 + $0x530] sm:$0xff]
        %v1187 = vld [vmem:[%s1019 + $0x538] sm:$0xff]
        %v1188 = vld [vmem:[%s1019 + $0x540] sm:$0xff]
        %v1189 = vld [vmem:[%s1019 + $0x548] sm:$0xff]
        %v1190 = vld [vmem:[%s1019 + $0x550] sm:$0xff]
        %v1191 = vld [vmem:[%s1019 + $0x558] sm:$0xff]
        %v1192 = vld [vmem:[%s1019 + $0x560] sm:$0xff]
        %v1193 = vld [vmem:[%s1019 + $0x568] sm:$0xff]
        %v1194 = vld [vmem:[%s1019 + $0x570] sm:$0xff]
        %v1195 = vld [vmem:[%s1019 + $0x578] sm:$0xff]
        %v1196 = vld [vmem:[%s1019 + $0x580] sm:$0xff]
        %v1197 = vld [vmem:[%s1019 + $0x588] sm:$0xff]
        %v1198 = vld [vmem:[%s1019 + $0x590] sm:$0xff]
        %v1199 = vld [vmem:[%s1019 + $0x598] sm:$0xff]
        %v1200 = vld [vmem:[%s1019 + $0x5a0] sm:$0xff]
        %v1201 = vld [vmem:[%s1019 + $0x5a8] sm:$0xff]
        %v1202 = vld [vmem:[%s1019 + $0x5b0] sm:$0xff]
        %v1203 = vld [vmem:[%s1019 + $0x5b8] sm:$0xff]
        %v1204 = vld [vmem:[%s1019 + $0x5c0] sm:$0xff]
        %v1205 = vld [vmem:[%s1019 + $0x5c8] sm:$0xff]
        %v1206 = vld [vmem:[%s1019 + $0x5d0] sm:$0xff]
        %v1207 = vld [vmem:[%s1019 + $0x5d8] sm:$0xff]
        %v1208 = vld [vmem:[%s1019 + $0x5e0] sm:$0xff]
        %v1209 = vld [vmem:[%s1019 + $0x5e8] sm:$0xff]
        %v1210 = vld [vmem:[%s1019 + $0x5f0] sm:$0xff]
        %v1211 = vld [vmem:[%s1019 + $0x5f8] sm:$0xff]
        %v1212 = vld [vmem:[%s1019 + $0x600] sm:$0xff]
        %v1213 = vld [vmem:[%s1019 + $0x608] sm:$0xff]
        %v1214 = vld [vmem:[%s1019 + $0x610] sm:$0xff]
        %v1215 = vld [vmem:[%s1019 + $0x618] sm:$0xff]
        %v1216 = vld [vmem:[%s1019 + $0x620] sm:$0xff]
        %v1217 = vld [vmem:[%s1019 + $0x628] sm:$0xff]
        %v1218 = vld [vmem:[%s1019 + $0x630] sm:$0xff]
        %v1219 = vld [vmem:[%s1019 + $0x638] sm:$0xff]
        %v1220 = vld [vmem:[%s1019 + $0x640] sm:$0xff]
        %v1221 = vld [vmem:[%s1019 + $0x648] sm:$0xff]
        %v1222 = vld [vmem:[%s1019 + $0x650] sm:$0xff]
        %v1223 = vld [vmem:[%s1019 + $0x658] sm:$0xff]
        %v1224 = vld [vmem:[%s1019 + $0x660] sm:$0xff]
        %v1225 = vld [vmem:[%s1019 + $0x668] sm:$0xff]
        %v1226 = vld [vmem:[%s1019 + $0x670] sm:$0xff]
        %v1227 = vld [vmem:[%s1019 + $0x678] sm:$0xff]
        %v1228 = vld [vmem:[%s1019 + $0x680] sm:$0xff]
        %v1229 = vld [vmem:[%s1019 + $0x688] sm:$0xff]
        %v1230 = vld [vmem:[%s1019 + $0x690] sm:$0xff]
        %v1231 = vld [vmem:[%s1019 + $0x698] sm:$0xff]
        %v1232 = vld [vmem:[%s1019 + $0x6a0] sm:$0xff]
        %v1233 = vld [vmem:[%s1019 + $0x6a8] sm:$0xff]
        %v1234 = vld [vmem:[%s1019 + $0x6b0] sm:$0xff]
        %v1235 = vld [vmem:[%s1019 + $0x6b8] sm:$0xff]
        %v1236 = vld [vmem:[%s1019 + $0x6c0] sm:$0xff]
        %v1237 = vld [vmem:[%s1019 + $0x6c8] sm:$0xff]
        %v1238 = vld [vmem:[%s1019 + $0x6d0] sm:$0xff]
        %v1239 = vld [vmem:[%s1019 + $0x6d8] sm:$0xff]
        %v1240 = vld [vmem:[%s1019 + $0x6e0] sm:$0xff]
        %v1241 = vld [vmem:[%s1019 + $0x6e8] sm:$0xff]
        %v1242 = vld [vmem:[%s1019 + $0x6f0] sm:$0xff]
        %v1243 = vld [vmem:[%s1019 + $0x6f8] sm:$0xff]
        %v1244 = vld [vmem:[%s1019 + $0x700] sm:$0xff]
        %v1245 = vld [vmem:[%s1019 + $0x708] sm:$0xff]
        %v1246 = vld [vmem:[%s1019 + $0x710] sm:$0xff]
        %v1247 = vld [vmem:[%s1019 + $0x718] sm:$0xff]
        %v1248 = vld [vmem:[%s1019 + $0x720] sm:$0xff]
        %v1249 = vld [vmem:[%s1019 + $0x728] sm:$0xff]
        %v1250 = vld [vmem:[%s1019 + $0x730] sm:$0xff]
        %v1251 = vld [vmem:[%s1019 + $0x738] sm:$0xff]
        %v1252 = vld [vmem:[%s1019 + $0x740] sm:$0xff]
        %v1253 = vld [vmem:[%s1019 + $0x748] sm:$0xff]
        %v1254 = vld [vmem:[%s1019 + $0x750] sm:$0xff]
        %v1255 = vld [vmem:[%s1019 + $0x758] sm:$0xff]
        %v1256 = vld [vmem:[%s1019 + $0x760] sm:$0xff]
        %v1257 = vld [vmem:[%s1019 + $0x768] sm:$0xff]
        %v1258 = vld [vmem:[%s1019 + $0x770] sm:$0xff]
        %v1259 = vld [vmem:[%s1019 + $0x778] sm:$0xff]
        %v1260 = vld [vmem:[%s1019 + $0x780] sm:$0xff]
        %v1261 = vld [vmem:[%s1019 + $0x788] sm:$0xff]
        %v1262 = vld [vmem:[%s1019 + $0x790] sm:$0xff]
        %v1263 = vld [vmem:[%s1019 + $0x798] sm:$0xff]
        %v1264 = vld [vmem:[%s1019 + $0x7a0] sm:$0xff]
        %v1265 = vld [vmem:[%s1019 + $0x7a8] sm:$0xff]
        %v1266 = vld [vmem:[%s1019 + $0x7b0] sm:$0xff]
        %v1267 = vld [vmem:[%s1019 + $0x7b8] sm:$0xff]
        %v1268 = vld [vmem:[%s1019 + $0x7c0] sm:$0xff]
        %v1269 = vld [vmem:[%s1019 + $0x7c8] sm:$0xff]
        %v1270 = vld [vmem:[%s1019 + $0x7d0] sm:$0xff]
        %v1271 = vld [vmem:[%s1019 + $0x7d8] sm:$0xff]
        %v1272 = vld [vmem:[%s1019 + $0x7e0] sm:$0xff]
        %v1273 = vld [vmem:[%s1019 + $0x7e8] sm:$0xff]
        %v1274 = vld [vmem:[%s1019 + $0x7f0] sm:$0xff]
        %v1275 = vld [vmem:[%s1019 + $0x7f8] sm:$0xff]
        %v1276 = vld [vmem:[#allocation10] sm:$0xff]
        %v1277 = vld [vmem:[#allocation10 + $0x8] sm:$0xff]
        %v1278 = vld [vmem:[#allocation10 + $0x10] sm:$0xff]
        %v1279 = vld [vmem:[#allocation10 + $0x18] sm:$0xff]
        %v1280 = vld [vmem:[#allocation10 + $0x20] sm:$0xff]
        %v1281 = vld [vmem:[#allocation10 + $0x28] sm:$0xff]
        %v1282 = vld [vmem:[#allocation10 + $0x30] sm:$0xff]
        %v1283 = vld [vmem:[#allocation10 + $0x38] sm:$0xff]
        %v1284 = vld [vmem:[#allocation10 + $0x40] sm:$0xff]
        %v1285 = vld [vmem:[#allocation10 + $0x48] sm:$0xff]
        %v1286 = vld [vmem:[#allocation10 + $0x50] sm:$0xff]
        %v1287 = vld [vmem:[#allocation10 + $0x58] sm:$0xff]
        %v1288 = vld [vmem:[#allocation10 + $0x60] sm:$0xff]
        %v1289 = vld [vmem:[#allocation10 + $0x68] sm:$0xff]
        %v1290 = vld [vmem:[#allocation10 + $0x70] sm:$0xff]
        %v1291 = vld [vmem:[#allocation10 + $0x78] sm:$0xff]
        %v1292 = vld [vmem:[#allocation10 + $0x80] sm:$0xff]
        %v1293 = vld [vmem:[#allocation10 + $0x88] sm:$0xff]
        %v1294 = vld [vmem:[#allocation10 + $0x90] sm:$0xff]
        %v1295 = vld [vmem:[#allocation10 + $0x98] sm:$0xff]
        %v1296 = vld [vmem:[#allocation10 + $0xa0] sm:$0xff]
        %v1297 = vld [vmem:[#allocation10 + $0xa8] sm:$0xff]
        %v1298 = vld [vmem:[#allocation10 + $0xb0] sm:$0xff]
        %v1299 = vld [vmem:[#allocation10 + $0xb8] sm:$0xff]
        %v1300 = vld [vmem:[#allocation10 + $0xc0] sm:$0xff]
        %v1301 = vld [vmem:[#allocation10 + $0xc8] sm:$0xff]
        %v1302 = vld [vmem:[#allocation10 + $0xd0] sm:$0xff]
        %v1303 = vld [vmem:[#allocation10 + $0xd8] sm:$0xff]
        %v1304 = vld [vmem:[#allocation10 + $0xe0] sm:$0xff]
        %v1305 = vld [vmem:[#allocation10 + $0xe8] sm:$0xff]
        %v1306 = vld [vmem:[#allocation10 + $0xf0] sm:$0xff]
        %v1307 = vld [vmem:[#allocation10 + $0xf8] sm:$0xff]
        %v1308 = vld [vmem:[#allocation10 + $0x100] sm:$0xff]
        %v1309 = vld [vmem:[#allocation10 + $0x108] sm:$0xff]
        %v1310 = vld [vmem:[#allocation10 + $0x110] sm:$0xff]
        %v1311 = vld [vmem:[#allocation10 + $0x118] sm:$0xff]
        %v1312 = vld [vmem:[#allocation10 + $0x120] sm:$0xff]
        %v1313 = vld [vmem:[#allocation10 + $0x128] sm:$0xff]
        %v1314 = vld [vmem:[#allocation10 + $0x130] sm:$0xff]
        %v1315 = vld [vmem:[#allocation10 + $0x138] sm:$0xff]
        %v1316 = vld [vmem:[#allocation10 + $0x140] sm:$0xff]
        %v1317 = vld [vmem:[#allocation10 + $0x148] sm:$0xff]
        %v1318 = vld [vmem:[#allocation10 + $0x150] sm:$0xff]
        %v1319 = vld [vmem:[#allocation10 + $0x158] sm:$0xff]
        %v1320 = vld [vmem:[#allocation10 + $0x160] sm:$0xff]
        %v1321 = vld [vmem:[#allocation10 + $0x168] sm:$0xff]
        %v1322 = vld [vmem:[#allocation10 + $0x170] sm:$0xff]
        %v1323 = vld [vmem:[#allocation10 + $0x178] sm:$0xff]
        %v1324 = vld [vmem:[#allocation10 + $0x180] sm:$0xff]
        %v1325 = vld [vmem:[#allocation10 + $0x188] sm:$0xff]
        %v1326 = vld [vmem:[#allocation10 + $0x190] sm:$0xff]
        %v1327 = vld [vmem:[#allocation10 + $0x198] sm:$0xff]
        %v1328 = vld [vmem:[#allocation10 + $0x1a0] sm:$0xff]
        %v1329 = vld [vmem:[#allocation10 + $0x1a8] sm:$0xff]
        %v1330 = vld [vmem:[#allocation10 + $0x1b0] sm:$0xff]
        %v1331 = vld [vmem:[#allocation10 + $0x1b8] sm:$0xff]
        %v1332 = vld [vmem:[#allocation10 + $0x1c0] sm:$0xff]
        %v1333 = vld [vmem:[#allocation10 + $0x1c8] sm:$0xff]
        %v1334 = vld [vmem:[#allocation10 + $0x1d0] sm:$0xff]
        %v1335 = vld [vmem:[#allocation10 + $0x1d8] sm:$0xff]
        %v1336 = vld [vmem:[#allocation10 + $0x1e0] sm:$0xff]
        %v1337 = vld [vmem:[#allocation10 + $0x1e8] sm:$0xff]
        %v1338 = vld [vmem:[#allocation10 + $0x1f0] sm:$0xff]
        %v1339 = vld [vmem:[#allocation10 + $0x1f8] sm:$0xff]
        %v1340 = vld [vmem:[#allocation10 + $0x200] sm:$0xff]
        %v1341 = vld [vmem:[#allocation10 + $0x208] sm:$0xff]
        %v1342 = vld [vmem:[#allocation10 + $0x210] sm:$0xff]
        %v1343 = vld [vmem:[#allocation10 + $0x218] sm:$0xff]
        %v1344 = vld [vmem:[#allocation10 + $0x220] sm:$0xff]
        %v1345 = vld [vmem:[#allocation10 + $0x228] sm:$0xff]
        %v1346 = vld [vmem:[#allocation10 + $0x230] sm:$0xff]
        %v1347 = vld [vmem:[#allocation10 + $0x238] sm:$0xff]
        %v1348 = vld [vmem:[#allocation10 + $0x240] sm:$0xff]
        %v1349 = vld [vmem:[#allocation10 + $0x248] sm:$0xff]
        %v1350 = vld [vmem:[#allocation10 + $0x250] sm:$0xff]
        %v1351 = vld [vmem:[#allocation10 + $0x258] sm:$0xff]
        %v1352 = vld [vmem:[#allocation10 + $0x260] sm:$0xff]
        %v1353 = vld [vmem:[#allocation10 + $0x268] sm:$0xff]
        %v1354 = vld [vmem:[#allocation10 + $0x270] sm:$0xff]
        %v1355 = vld [vmem:[#allocation10 + $0x278] sm:$0xff]
        %v1356 = vld [vmem:[#allocation10 + $0x280] sm:$0xff]
        %v1357 = vld [vmem:[#allocation10 + $0x288] sm:$0xff]
        %v1358 = vld [vmem:[#allocation10 + $0x290] sm:$0xff]
        %v1359 = vld [vmem:[#allocation10 + $0x298] sm:$0xff]
        %v1360 = vld [vmem:[#allocation10 + $0x2a0] sm:$0xff]
        %v1361 = vld [vmem:[#allocation10 + $0x2a8] sm:$0xff]
        %v1362 = vld [vmem:[#allocation10 + $0x2b0] sm:$0xff]
        %v1363 = vld [vmem:[#allocation10 + $0x2b8] sm:$0xff]
        %v1364 = vld [vmem:[#allocation10 + $0x2c0] sm:$0xff]
        %v1365 = vld [vmem:[#allocation10 + $0x2c8] sm:$0xff]
        %v1366 = vld [vmem:[#allocation10 + $0x2d0] sm:$0xff]
        %v1367 = vld [vmem:[#allocation10 + $0x2d8] sm:$0xff]
        %v1368 = vld [vmem:[#allocation10 + $0x2e0] sm:$0xff]
        %v1369 = vld [vmem:[#allocation10 + $0x2e8] sm:$0xff]
        %v1370 = vld [vmem:[#allocation10 + $0x2f0] sm:$0xff]
        %v1371 = vld [vmem:[#allocation10 + $0x2f8] sm:$0xff]
        %v1372 = vld [vmem:[#allocation10 + $0x300] sm:$0xff]
        %v1373 = vld [vmem:[#allocation10 + $0x308] sm:$0xff]
        %v1374 = vld [vmem:[#allocation10 + $0x310] sm:$0xff]
        %v1375 = vld [vmem:[#allocation10 + $0x318] sm:$0xff]
        %v1376 = vld [vmem:[#allocation10 + $0x320] sm:$0xff]
        %v1377 = vld [vmem:[#allocation10 + $0x328] sm:$0xff]
        %v1378 = vld [vmem:[#allocation10 + $0x330] sm:$0xff]
        %v1379 = vld [vmem:[#allocation10 + $0x338] sm:$0xff]
        %v1380 = vld [vmem:[#allocation10 + $0x340] sm:$0xff]
        %v1381 = vld [vmem:[#allocation10 + $0x348] sm:$0xff]
        %v1382 = vld [vmem:[#allocation10 + $0x350] sm:$0xff]
        %v1383 = vld [vmem:[#allocation10 + $0x358] sm:$0xff]
        %v1384 = vld [vmem:[#allocation10 + $0x360] sm:$0xff]
        %v1385 = vld [vmem:[#allocation10 + $0x368] sm:$0xff]
        %v1386 = vld [vmem:[#allocation10 + $0x370] sm:$0xff]
        %v1387 = vld [vmem:[#allocation10 + $0x378] sm:$0xff]
        %v1388 = vld [vmem:[#allocation10 + $0x380] sm:$0xff]
        %v1389 = vld [vmem:[#allocation10 + $0x388] sm:$0xff]
        %v1390 = vld [vmem:[#allocation10 + $0x390] sm:$0xff]
        %v1391 = vld [vmem:[#allocation10 + $0x398] sm:$0xff]
        %v1392 = vld [vmem:[#allocation10 + $0x3a0] sm:$0xff]
        %v1393 = vld [vmem:[#allocation10 + $0x3a8] sm:$0xff]
        %v1394 = vld [vmem:[#allocation10 + $0x3b0] sm:$0xff]
        %v1395 = vld [vmem:[#allocation10 + $0x3b8] sm:$0xff]
        %v1396 = vld [vmem:[#allocation10 + $0x3c0] sm:$0xff]
        %v1397 = vld [vmem:[#allocation10 + $0x3c8] sm:$0xff]
        %v1398 = vld [vmem:[#allocation10 + $0x3d0] sm:$0xff]
        %v1399 = vld [vmem:[#allocation10 + $0x3d8] sm:$0xff]
        %v1400 = vld [vmem:[#allocation10 + $0x3e0] sm:$0xff]
        %v1401 = vld [vmem:[#allocation10 + $0x3e8] sm:$0xff]
        %v1402 = vld [vmem:[#allocation10 + $0x3f0] sm:$0xff]
        %v1403 = vld [vmem:[#allocation10 + $0x3f8] sm:$0xff]
        %v1404 = vld [vmem:[#allocation10 + $0x400] sm:$0xff]
        %v1405 = vld [vmem:[#allocation10 + $0x408] sm:$0xff]
        %v1406 = vld [vmem:[#allocation10 + $0x410] sm:$0xff]
        %v1407 = vld [vmem:[#allocation10 + $0x418] sm:$0xff]
        %v1408 = vld [vmem:[#allocation10 + $0x420] sm:$0xff]
        %v1409 = vld [vmem:[#allocation10 + $0x428] sm:$0xff]
        %v1410 = vld [vmem:[#allocation10 + $0x430] sm:$0xff]
        %v1411 = vld [vmem:[#allocation10 + $0x438] sm:$0xff]
        %v1412 = vld [vmem:[#allocation10 + $0x440] sm:$0xff]
        %v1413 = vld [vmem:[#allocation10 + $0x448] sm:$0xff]
        %v1414 = vld [vmem:[#allocation10 + $0x450] sm:$0xff]
        %v1415 = vld [vmem:[#allocation10 + $0x458] sm:$0xff]
        %v1416 = vld [vmem:[#allocation10 + $0x460] sm:$0xff]
        %v1417 = vld [vmem:[#allocation10 + $0x468] sm:$0xff]
        %v1418 = vld [vmem:[#allocation10 + $0x470] sm:$0xff]
        %v1419 = vld [vmem:[#allocation10 + $0x478] sm:$0xff]
        %v1420 = vld [vmem:[#allocation10 + $0x480] sm:$0xff]
        %v1421 = vld [vmem:[#allocation10 + $0x488] sm:$0xff]
        %v1422 = vld [vmem:[#allocation10 + $0x490] sm:$0xff]
        %v1423 = vld [vmem:[#allocation10 + $0x498] sm:$0xff]
        %v1424 = vld [vmem:[#allocation10 + $0x4a0] sm:$0xff]
        %v1425 = vld [vmem:[#allocation10 + $0x4a8] sm:$0xff]
        %v1426 = vld [vmem:[#allocation10 + $0x4b0] sm:$0xff]
        %v1427 = vld [vmem:[#allocation10 + $0x4b8] sm:$0xff]
        %v1428 = vld [vmem:[#allocation10 + $0x4c0] sm:$0xff]
        %v1429 = vld [vmem:[#allocation10 + $0x4c8] sm:$0xff]
        %v1430 = vld [vmem:[#allocation10 + $0x4d0] sm:$0xff]
        %v1431 = vld [vmem:[#allocation10 + $0x4d8] sm:$0xff]
        %v1432 = vld [vmem:[#allocation10 + $0x4e0] sm:$0xff]
        %v1433 = vld [vmem:[#allocation10 + $0x4e8] sm:$0xff]
        %v1434 = vld [vmem:[#allocation10 + $0x4f0] sm:$0xff]
        %v1435 = vld [vmem:[#allocation10 + $0x4f8] sm:$0xff]
        %v1436 = vld [vmem:[#allocation10 + $0x500] sm:$0xff]
        %v1437 = vld [vmem:[#allocation10 + $0x508] sm:$0xff]
        %v1438 = vld [vmem:[#allocation10 + $0x510] sm:$0xff]
        %v1439 = vld [vmem:[#allocation10 + $0x518] sm:$0xff]
        %v1440 = vld [vmem:[#allocation10 + $0x520] sm:$0xff]
        %v1441 = vld [vmem:[#allocation10 + $0x528] sm:$0xff]
        %v1442 = vld [vmem:[#allocation10 + $0x530] sm:$0xff]
        %v1443 = vld [vmem:[#allocation10 + $0x538] sm:$0xff]
        %v1444 = vld [vmem:[#allocation10 + $0x540] sm:$0xff]
        %v1445 = vld [vmem:[#allocation10 + $0x548] sm:$0xff]
        %v1446 = vld [vmem:[#allocation10 + $0x550] sm:$0xff]
        %v1447 = vld [vmem:[#allocation10 + $0x558] sm:$0xff]
        %v1448 = vld [vmem:[#allocation10 + $0x560] sm:$0xff]
        %v1449 = vld [vmem:[#allocation10 + $0x568] sm:$0xff]
        %v1450 = vld [vmem:[#allocation10 + $0x570] sm:$0xff]
        %v1451 = vld [vmem:[#allocation10 + $0x578] sm:$0xff]
        %v1452 = vld [vmem:[#allocation10 + $0x580] sm:$0xff]
        %v1453 = vld [vmem:[#allocation10 + $0x588] sm:$0xff]
        %v1454 = vld [vmem:[#allocation10 + $0x590] sm:$0xff]
        %v1455 = vld [vmem:[#allocation10 + $0x598] sm:$0xff]
        %v1456 = vld [vmem:[#allocation10 + $0x5a0] sm:$0xff]
        %v1457 = vld [vmem:[#allocation10 + $0x5a8] sm:$0xff]
        %v1458 = vld [vmem:[#allocation10 + $0x5b0] sm:$0xff]
        %v1459 = vld [vmem:[#allocation10 + $0x5b8] sm:$0xff]
        %v1460 = vld [vmem:[#allocation10 + $0x5c0] sm:$0xff]
        %v1461 = vld [vmem:[#allocation10 + $0x5c8] sm:$0xff]
        %v1462 = vld [vmem:[#allocation10 + $0x5d0] sm:$0xff]
        %v1463 = vld [vmem:[#allocation10 + $0x5d8] sm:$0xff]
        %v1464 = vld [vmem:[#allocation10 + $0x5e0] sm:$0xff]
        %v1465 = vld [vmem:[#allocation10 + $0x5e8] sm:$0xff]
        %v1466 = vld [vmem:[#allocation10 + $0x5f0] sm:$0xff]
        %v1467 = vld [vmem:[#allocation10 + $0x5f8] sm:$0xff]
        %v1468 = vld [vmem:[#allocation10 + $0x600] sm:$0xff]
        %v1469 = vld [vmem:[#allocation10 + $0x608] sm:$0xff]
        %v1470 = vld [vmem:[#allocation10 + $0x610] sm:$0xff]
        %v1471 = vld [vmem:[#allocation10 + $0x618] sm:$0xff]
        %v1472 = vld [vmem:[#allocation10 + $0x620] sm:$0xff]
        %v1473 = vld [vmem:[#allocation10 + $0x628] sm:$0xff]
        %v1474 = vld [vmem:[#allocation10 + $0x630] sm:$0xff]
        %v1475 = vld [vmem:[#allocation10 + $0x638] sm:$0xff]
        %v1476 = vld [vmem:[#allocation10 + $0x640] sm:$0xff]
        %v1477 = vld [vmem:[#allocation10 + $0x648] sm:$0xff]
        %v1478 = vld [vmem:[#allocation10 + $0x650] sm:$0xff]
        %v1479 = vld [vmem:[#allocation10 + $0x658] sm:$0xff]
        %v1480 = vld [vmem:[#allocation10 + $0x660] sm:$0xff]
        %v1481 = vld [vmem:[#allocation10 + $0x668] sm:$0xff]
        %v1482 = vld [vmem:[#allocation10 + $0x670] sm:$0xff]
        %v1483 = vld [vmem:[#allocation10 + $0x678] sm:$0xff]
        %v1484 = vld [vmem:[#allocation10 + $0x680] sm:$0xff]
        %v1485 = vld [vmem:[#allocation10 + $0x688] sm:$0xff]
        %v1486 = vld [vmem:[#allocation10 + $0x690] sm:$0xff]
        %v1487 = vld [vmem:[#allocation10 + $0x698] sm:$0xff]
        %v1488 = vld [vmem:[#allocation10 + $0x6a0] sm:$0xff]
        %v1489 = vld [vmem:[#allocation10 + $0x6a8] sm:$0xff]
        %v1490 = vld [vmem:[#allocation10 + $0x6b0] sm:$0xff]
        %v1491 = vld [vmem:[#allocation10 + $0x6b8] sm:$0xff]
        %v1492 = vld [vmem:[#allocation10 + $0x6c0] sm:$0xff]
        %v1493 = vld [vmem:[#allocation10 + $0x6c8] sm:$0xff]
        %v1494 = vld [vmem:[#allocation10 + $0x6d0] sm:$0xff]
        %v1495 = vld [vmem:[#allocation10 + $0x6d8] sm:$0xff]
        %v1496 = vld [vmem:[#allocation10 + $0x6e0] sm:$0xff]
        %v1497 = vld [vmem:[#allocation10 + $0x6e8] sm:$0xff]
        %v1498 = vld [vmem:[#allocation10 + $0x6f0] sm:$0xff]
        %v1499 = vld [vmem:[#allocation10 + $0x6f8] sm:$0xff]
        %v1500 = vld [vmem:[#allocation10 + $0x700] sm:$0xff]
        %v1501 = vld [vmem:[#allocation10 + $0x708] sm:$0xff]
        %v1502 = vld [vmem:[#allocation10 + $0x710] sm:$0xff]
        %v1503 = vld [vmem:[#allocation10 + $0x718] sm:$0xff]
        %v1504 = vld [vmem:[#allocation10 + $0x720] sm:$0xff]
        %v1505 = vld [vmem:[#allocation10 + $0x728] sm:$0xff]
        %v1506 = vld [vmem:[#allocation10 + $0x730] sm:$0xff]
        %v1507 = vld [vmem:[#allocation10 + $0x738] sm:$0xff]
        %v1508 = vld [vmem:[#allocation10 + $0x740] sm:$0xff]
        %v1509 = vld [vmem:[#allocation10 + $0x748] sm:$0xff]
        %v1510 = vld [vmem:[#allocation10 + $0x750] sm:$0xff]
        %v1511 = vld [vmem:[#allocation10 + $0x758] sm:$0xff]
        %v1512 = vld [vmem:[#allocation10 + $0x760] sm:$0xff]
        %v1513 = vld [vmem:[#allocation10 + $0x768] sm:$0xff]
        %v1514 = vld [vmem:[#allocation10 + $0x770] sm:$0xff]
        %v1515 = vld [vmem:[#allocation10 + $0x778] sm:$0xff]
        %v1516 = vld [vmem:[#allocation10 + $0x780] sm:$0xff]
        %v1517 = vld [vmem:[#allocation10 + $0x788] sm:$0xff]
        %v1518 = vld [vmem:[#allocation10 + $0x790] sm:$0xff]
        %v1519 = vld [vmem:[#allocation10 + $0x798] sm:$0xff]
        %v1520 = vld [vmem:[#allocation10 + $0x7a0] sm:$0xff]
        %v1521 = vld [vmem:[#allocation10 + $0x7a8] sm:$0xff]
        %v1522 = vld [vmem:[#allocation10 + $0x7b0] sm:$0xff]
        %v1523 = vld [vmem:[#allocation10 + $0x7b8] sm:$0xff]
        %v1524 = vld [vmem:[#allocation10 + $0x7c0] sm:$0xff]
        %v1525 = vld [vmem:[#allocation10 + $0x7c8] sm:$0xff]
        %v1526 = vld [vmem:[#allocation10 + $0x7d0] sm:$0xff]
        %v1527 = vld [vmem:[#allocation10 + $0x7d8] sm:$0xff]
        %v1528 = vld [vmem:[#allocation10 + $0x7e0] sm:$0xff]
        %v1529 = vld [vmem:[#allocation10 + $0x7e8] sm:$0xff]
        %v1530 = vld [vmem:[#allocation10 + $0x7f0] sm:$0xff]
        %v1531 = vld [vmem:[#allocation10 + $0x7f8] sm:$0xff]
        %1532 = vmatprep.subr.mxu0 %v1397
        %1533 = vmatpush1.msra.mxu0 %v1396
        %1534 = vmatprep.subr.mxu0 %v1389
        %1535 = vmatpush1.msra.mxu0 %v1388
        %1536 = vmatprep.subr.mxu0 %v1381
        %1537 = vmatpush1.msra.mxu0 %v1380
        %1538 = vmatprep.subr.mxu0 %v1373
        %1539 = vmatpush1.msra.mxu0 %v1372
        %1540 = vmatprep.subr.mxu0 %v1365
        %1541 = vmatpush1.msra.mxu0 %v1364
        %1542 = vmatprep.subr.mxu0 %v1357
        %1543 = vmatpush1.msra.mxu0 %v1356
        %1544 = vmatprep.subr.mxu0 %v1349
        %1545 = vmatpush1.msra.mxu0 %v1348
        %1546 = vmatprep.subr.mxu0 %v1341
        %1547 = vmatpush1.msra.mxu0 %v1340
        %1548 = vmatprep.subr.mxu0 %v1333
        %1549 = vmatpush1.msra.mxu0 %v1332
        %1550 = vmatprep.subr.mxu0 %v1325
        %1551 = vmatpush1.msra.mxu0 %v1324
        %1552 = vmatprep.subr.mxu0 %v1317
        %1553 = vmatpush1.msra.mxu0 %v1316
        %1554 = vmatprep.subr.mxu0 %v1309
        %1555 = vmatpush1.msra.mxu0 %v1308
        %1556 = vmatprep.subr.mxu0 %v1301
        %1557 = vmatpush1.msra.mxu0 %v1300
        %1558 = vmatprep.subr.mxu0 %v1293
        %1559 = vmatpush1.msra.mxu0 %v1292
        %1560 = vmatprep.subr.mxu0 %v1285
        %1561 = vmatpush1.msra.mxu0 %v1284
        %1562 = vmatprep.subr.mxu0 %v1277
        %1563 = vmatpush1.msra.mxu0 %v1276
        %1564 = vmatprep.subr.mxu0 %v1525
        %1565 = vmatpush2.msra.mxu0 %v1524
        %1566 = vmatprep.subr.mxu0 %v1517
        %1567 = vmatpush2.msra.mxu0 %v1516
        %1568 = vmatprep.subr.mxu0 %v1509
        %1569 = vmatpush2.msra.mxu0 %v1508
        %1570 = vmatprep.subr.mxu0 %v1501
        %1571 = vmatpush2.msra.mxu0 %v1500
        %1572 = vmatprep.subr.mxu0 %v1493
        %1573 = vmatpush2.msra.mxu0 %v1492
        %1574 = vmatprep.subr.mxu0 %v1485
        %1575 = vmatpush2.msra.mxu0 %v1484
        %1576 = vmatprep.subr.mxu0 %v1477
        %1577 = vmatpush2.msra.mxu0 %v1476
        %1578 = vmatprep.subr.mxu0 %v1469
        %1579 = vmatpush2.msra.mxu0 %v1468
        %1580 = vmatprep.subr.mxu0 %v1461
        %1581 = vmatpush2.msra.mxu0 %v1460
        %1582 = vmatprep.subr.mxu0 %v1453
        %1583 = vmatpush2.msra.mxu0 %v1452
        %1584 = vmatprep.subr.mxu0 %v1445
        %1585 = vmatpush2.msra.mxu0 %v1444
        %1586 = vmatprep.subr.mxu0 %v1437
        %1587 = vmatpush2.msra.mxu0 %v1436
        %1588 = vmatprep.subr.mxu0 %v1429
        %1589 = vmatpush2.msra.mxu0 %v1428
        %1590 = vmatprep.subr.mxu0 %v1421
        %1591 = vmatpush2.msra.mxu0 %v1420
        %1592 = vmatprep.subr.mxu0 %v1413
        %1593 = vmatpush2.msra.mxu0 %v1412
        %1594 = vmatprep.subr.mxu0 %v1405
        %1595 = vmatpush2.msra.mxu0 %v1404
        %1596 = vmatprep.mubr.f32.mxu0 %v1011
        %1597 = vmatmul.mubr.f32.gmra.mxu0 %v1009
        %v1598 = vpop.f32.mrf.mxu0
        %v1599 = vadd.f32 0.0, %v1598
        %v1600 = vpop.f32.mrf.mxu0
        %v1601 = vadd.f32 0.0, %v1600
        %1602 = vdwg.mxu0
        %1603 = vmatprep.subr.mxu0 %v1399
        %1604 = vmatpush1.msra.mxu0 %v1398
        %1605 = vmatprep.subr.mxu0 %v1391
        %1606 = vmatpush1.msra.mxu0 %v1390
        %1607 = vmatprep.subr.mxu0 %v1383
        %1608 = vmatpush1.msra.mxu0 %v1382
        %1609 = vmatprep.subr.mxu0 %v1375
        %1610 = vmatpush1.msra.mxu0 %v1374
        %1611 = vmatprep.subr.mxu0 %v1367
        %1612 = vmatpush1.msra.mxu0 %v1366
        %1613 = vmatprep.subr.mxu0 %v1359
        %1614 = vmatpush1.msra.mxu0 %v1358
        %1615 = vmatprep.subr.mxu0 %v1351
        %1616 = vmatpush1.msra.mxu0 %v1350
        %1617 = vmatprep.subr.mxu0 %v1343
        %1618 = vmatpush1.msra.mxu0 %v1342
        %1619 = vmatprep.subr.mxu0 %v1335
        %1620 = vmatpush1.msra.mxu0 %v1334
        %1621 = vmatprep.subr.mxu0 %v1327
        %1622 = vmatpush1.msra.mxu0 %v1326
        %1623 = vmatprep.subr.mxu0 %v1319
        %1624 = vmatpush1.msra.mxu0 %v1318
        %1625 = vmatprep.subr.mxu0 %v1311
        %1626 = vmatpush1.msra.mxu0 %v1310
        %1627 = vmatprep.subr.mxu0 %v1303
        %1628 = vmatpush1.msra.mxu0 %v1302
        %1629 = vmatprep.subr.mxu0 %v1295
        %1630 = vmatpush1.msra.mxu0 %v1294
        %1631 = vmatprep.subr.mxu0 %v1287
        %1632 = vmatpush1.msra.mxu0 %v1286
        %1633 = vmatprep.subr.mxu0 %v1279
        %1634 = vmatpush1.msra.mxu0 %v1278
        %1635 = vmatprep.subr.mxu0 %v1527
        %1636 = vmatpush2.msra.mxu0 %v1526
        %1637 = vmatprep.subr.mxu0 %v1519
        %1638 = vmatpush2.msra.mxu0 %v1518
        %1639 = vmatprep.subr.mxu0 %v1511
        %1640 = vmatpush2.msra.mxu0 %v1510
        %1641 = vmatprep.subr.mxu0 %v1503
        %1642 = vmatpush2.msra.mxu0 %v1502
        %1643 = vmatprep.subr.mxu0 %v1495
        %1644 = vmatpush2.msra.mxu0 %v1494
        %1645 = vmatprep.subr.mxu0 %v1487
        %1646 = vmatpush2.msra.mxu0 %v1486
        %1647 = vmatprep.subr.mxu0 %v1479
        %1648 = vmatpush2.msra.mxu0 %v1478
        %1649 = vmatprep.subr.mxu0 %v1471
        %1650 = vmatpush2.msra.mxu0 %v1470
        %1651 = vmatprep.subr.mxu0 %v1463
        %1652 = vmatpush2.msra.mxu0 %v1462
        %1653 = vmatprep.subr.mxu0 %v1455
        %1654 = vmatpush2.msra.mxu0 %v1454
        %1655 = vmatprep.subr.mxu0 %v1447
        %1656 = vmatpush2.msra.mxu0 %v1446
        %1657 = vmatprep.subr.mxu0 %v1439
        %1658 = vmatpush2.msra.mxu0 %v1438
        %1659 = vmatprep.subr.mxu0 %v1431
        %1660 = vmatpush2.msra.mxu0 %v1430
        %1661 = vmatprep.subr.mxu0 %v1423
        %1662 = vmatpush2.msra.mxu0 %v1422
        %1663 = vmatprep.subr.mxu0 %v1415
        %1664 = vmatpush2.msra.mxu0 %v1414
        %1665 = vmatprep.subr.mxu0 %v1407
        %1666 = vmatpush2.msra.mxu0 %v1406
        %1667 = vmatprep.mubr.f32.mxu0 %v1011
        %1668 = vmatmul.mubr.f32.gmra.mxu0 %v1009
        %v1669 = vpop.f32.mrf.mxu0
        %v1670 = vadd.f32 0.0, %v1669
        %v1671 = vpop.f32.mrf.mxu0
        %v1672 = vadd.f32 0.0, %v1671
        %1673 = vdwg.mxu0
        %1674 = vmatprep.subr.mxu0 %v1401
        %1675 = vmatpush1.msra.mxu0 %v1400
        %1676 = vmatprep.subr.mxu0 %v1393
        %1677 = vmatpush1.msra.mxu0 %v1392
        %1678 = vmatprep.subr.mxu0 %v1385
        %1679 = vmatpush1.msra.mxu0 %v1384
        %1680 = vmatprep.subr.mxu0 %v1377
        %1681 = vmatpush1.msra.mxu0 %v1376
        %1682 = vmatprep.subr.mxu0 %v1369
        %1683 = vmatpush1.msra.mxu0 %v1368
        %1684 = vmatprep.subr.mxu0 %v1361
        %1685 = vmatpush1.msra.mxu0 %v1360
        %1686 = vmatprep.subr.mxu0 %v1353
        %1687 = vmatpush1.msra.mxu0 %v1352
        %1688 = vmatprep.subr.mxu0 %v1345
        %1689 = vmatpush1.msra.mxu0 %v1344
        %1690 = vmatprep.subr.mxu0 %v1337
        %1691 = vmatpush1.msra.mxu0 %v1336
        %1692 = vmatprep.subr.mxu0 %v1329
        %1693 = vmatpush1.msra.mxu0 %v1328
        %1694 = vmatprep.subr.mxu0 %v1321
        %1695 = vmatpush1.msra.mxu0 %v1320
        %1696 = vmatprep.subr.mxu0 %v1313
        %1697 = vmatpush1.msra.mxu0 %v1312
        %1698 = vmatprep.subr.mxu0 %v1305
        %1699 = vmatpush1.msra.mxu0 %v1304
        %1700 = vmatprep.subr.mxu0 %v1297
        %1701 = vmatpush1.msra.mxu0 %v1296
        %1702 = vmatprep.subr.mxu0 %v1289
        %1703 = vmatpush1.msra.mxu0 %v1288
        %1704 = vmatprep.subr.mxu0 %v1281
        %1705 = vmatpush1.msra.mxu0 %v1280
        %1706 = vmatprep.subr.mxu0 %v1529
        %1707 = vmatpush2.msra.mxu0 %v1528
        %1708 = vmatprep.subr.mxu0 %v1521
        %1709 = vmatpush2.msra.mxu0 %v1520
        %1710 = vmatprep.subr.mxu0 %v1513
        %1711 = vmatpush2.msra.mxu0 %v1512
        %1712 = vmatprep.subr.mxu0 %v1505
        %1713 = vmatpush2.msra.mxu0 %v1504
        %1714 = vmatprep.subr.mxu0 %v1497
        %1715 = vmatpush2.msra.mxu0 %v1496
        %1716 = vmatprep.subr.mxu0 %v1489
        %1717 = vmatpush2.msra.mxu0 %v1488
        %1718 = vmatprep.subr.mxu0 %v1481
        %1719 = vmatpush2.msra.mxu0 %v1480
        %1720 = vmatprep.subr.mxu0 %v1473
        %1721 = vmatpush2.msra.mxu0 %v1472
        %1722 = vmatprep.subr.mxu0 %v1465
        %1723 = vmatpush2.msra.mxu0 %v1464
        %1724 = vmatprep.subr.mxu0 %v1457
        %1725 = vmatpush2.msra.mxu0 %v1456
        %1726 = vmatprep.subr.mxu0 %v1449
        %1727 = vmatpush2.msra.mxu0 %v1448
        %1728 = vmatprep.subr.mxu0 %v1441
        %1729 = vmatpush2.msra.mxu0 %v1440
        %1730 = vmatprep.subr.mxu0 %v1433
        %1731 = vmatpush2.msra.mxu0 %v1432
        %1732 = vmatprep.subr.mxu0 %v1425
        %1733 = vmatpush2.msra.mxu0 %v1424
        %1734 = vmatprep.subr.mxu0 %v1417
        %1735 = vmatpush2.msra.mxu0 %v1416
        %1736 = vmatprep.subr.mxu0 %v1409
        %1737 = vmatpush2.msra.mxu0 %v1408
        %1738 = vmatprep.mubr.f32.mxu0 %v1011
        %1739 = vmatmul.mubr.f32.gmra.mxu0 %v1009
        %v1740 = vpop.f32.mrf.mxu0
        %v1741 = vadd.f32 0.0, %v1740
        %v1742 = vpop.f32.mrf.mxu0
        %v1743 = vadd.f32 0.0, %v1742
        %1744 = vdwg.mxu0
        %1745 = vmatprep.subr.mxu0 %v1403
        %1746 = vmatpush1.msra.mxu0 %v1402
        %1747 = vmatprep.subr.mxu0 %v1395
        %1748 = vmatpush1.msra.mxu0 %v1394
        %1749 = vmatprep.subr.mxu0 %v1387
        %1750 = vmatpush1.msra.mxu0 %v1386
        %1751 = vmatprep.subr.mxu0 %v1379
        %1752 = vmatpush1.msra.mxu0 %v1378
        %1753 = vmatprep.subr.mxu0 %v1371
        %1754 = vmatpush1.msra.mxu0 %v1370
        %1755 = vmatprep.subr.mxu0 %v1363
        %1756 = vmatpush1.msra.mxu0 %v1362
        %1757 = vmatprep.subr.mxu0 %v1355
        %1758 = vmatpush1.msra.mxu0 %v1354
        %1759 = vmatprep.subr.mxu0 %v1347
        %1760 = vmatpush1.msra.mxu0 %v1346
        %1761 = vmatprep.subr.mxu0 %v1339
        %1762 = vmatpush1.msra.mxu0 %v1338
        %1763 = vmatprep.subr.mxu0 %v1331
        %1764 = vmatpush1.msra.mxu0 %v1330
        %1765 = vmatprep.subr.mxu0 %v1323
        %1766 = vmatpush1.msra.mxu0 %v1322
        %1767 = vmatprep.subr.mxu0 %v1315
        %1768 = vmatpush1.msra.mxu0 %v1314
        %1769 = vmatprep.subr.mxu0 %v1307
        %1770 = vmatpush1.msra.mxu0 %v1306
        %1771 = vmatprep.subr.mxu0 %v1299
        %1772 = vmatpush1.msra.mxu0 %v1298
        %1773 = vmatprep.subr.mxu0 %v1291
        %1774 = vmatpush1.msra.mxu0 %v1290
        %1775 = vmatprep.subr.mxu0 %v1283
        %1776 = vmatpush1.msra.mxu0 %v1282
        %1777 = vmatprep.subr.mxu0 %v1531
        %1778 = vmatpush2.msra.mxu0 %v1530
        %1779 = vmatprep.subr.mxu0 %v1523
        %1780 = vmatpush2.msra.mxu0 %v1522
        %1781 = vmatprep.subr.mxu0 %v1515
        %1782 = vmatpush2.msra.mxu0 %v1514
        %1783 = vmatprep.subr.mxu0 %v1507
        %1784 = vmatpush2.msra.mxu0 %v1506
        %1785 = vmatprep.subr.mxu0 %v1499
        %1786 = vmatpush2.msra.mxu0 %v1498
        %1787 = vmatprep.subr.mxu0 %v1491
        %1788 = vmatpush2.msra.mxu0 %v1490
        %1789 = vmatprep.subr.mxu0 %v1483
        %1790 = vmatpush2.msra.mxu0 %v1482
        %1791 = vmatprep.subr.mxu0 %v1475
        %1792 = vmatpush2.msra.mxu0 %v1474
        %1793 = vmatprep.subr.mxu0 %v1467
        %1794 = vmatpush2.msra.mxu0 %v1466
        %1795 = vmatprep.subr.mxu0 %v1459
        %1796 = vmatpush2.msra.mxu0 %v1458
        %1797 = vmatprep.subr.mxu0 %v1451
        %1798 = vmatpush2.msra.mxu0 %v1450
        %1799 = vmatprep.subr.mxu0 %v1443
        %1800 = vmatpush2.msra.mxu0 %v1442
        %1801 = vmatprep.subr.mxu0 %v1435
        %1802 = vmatpush2.msra.mxu0 %v1434
        %1803 = vmatprep.subr.mxu0 %v1427
        %1804 = vmatpush2.msra.mxu0 %v1426
        %1805 = vmatprep.subr.mxu0 %v1419
        %1806 = vmatpush2.msra.mxu0 %v1418
        %1807 = vmatprep.subr.mxu0 %v1411
        %1808 = vmatpush2.msra.mxu0 %v1410
        %1809 = vmatprep.mubr.f32.mxu0 %v1011
        %1810 = vmatmul.mubr.f32.gmra.mxu0 %v1009
        %v1811 = vpop.f32.mrf.mxu0
        %v1812 = vadd.f32 0.0, %v1811
        %v1813 = vpop.f32.mrf.mxu0
        %v1814 = vadd.f32 0.0, %v1813
        %1815 = vdwg.mxu0
        %1816 = vmatprep.subr.mxu0 %v1141
        %1817 = vmatpush1.msra.mxu0 %v1140
        %1818 = vmatprep.subr.mxu0 %v1133
        %1819 = vmatpush1.msra.mxu0 %v1132
        %1820 = vmatprep.subr.mxu0 %v1125
        %1821 = vmatpush1.msra.mxu0 %v1124
        %1822 = vmatprep.subr.mxu0 %v1117
        %1823 = vmatpush1.msra.mxu0 %v1116
        %1824 = vmatprep.subr.mxu0 %v1109
        %1825 = vmatpush1.msra.mxu0 %v1108
        %1826 = vmatprep.subr.mxu0 %v1101
        %1827 = vmatpush1.msra.mxu0 %v1100
        %1828 = vmatprep.subr.mxu0 %v1093
        %1829 = vmatpush1.msra.mxu0 %v1092
        %1830 = vmatprep.subr.mxu0 %v1085
        %1831 = vmatpush1.msra.mxu0 %v1084
        %1832 = vmatprep.subr.mxu0 %v1077
        %1833 = vmatpush1.msra.mxu0 %v1076
        %1834 = vmatprep.subr.mxu0 %v1069
        %1835 = vmatpush1.msra.mxu0 %v1068
        %1836 = vmatprep.subr.mxu0 %v1061
        %1837 = vmatpush1.msra.mxu0 %v1060
        %1838 = vmatprep.subr.mxu0 %v1053
        %1839 = vmatpush1.msra.mxu0 %v1052
        %1840 = vmatprep.subr.mxu0 %v1045
        %1841 = vmatpush1.msra.mxu0 %v1044
        %1842 = vmatprep.subr.mxu0 %v1037
        %1843 = vmatpush1.msra.mxu0 %v1036
        %1844 = vmatprep.subr.mxu0 %v1029
        %1845 = vmatpush1.msra.mxu0 %v1028
        %1846 = vmatprep.subr.mxu0 %v1021
        %1847 = vmatpush1.msra.mxu0 %v1020
        %1848 = vmatprep.subr.mxu0 %v1269
        %1849 = vmatpush2.msra.mxu0 %v1268
        %1850 = vmatprep.subr.mxu0 %v1261
        %1851 = vmatpush2.msra.mxu0 %v1260
        %1852 = vmatprep.subr.mxu0 %v1253
        %1853 = vmatpush2.msra.mxu0 %v1252
        %1854 = vmatprep.subr.mxu0 %v1245
        %1855 = vmatpush2.msra.mxu0 %v1244
        %1856 = vmatprep.subr.mxu0 %v1237
        %1857 = vmatpush2.msra.mxu0 %v1236
        %1858 = vmatprep.subr.mxu0 %v1229
        %1859 = vmatpush2.msra.mxu0 %v1228
        %1860 = vmatprep.subr.mxu0 %v1221
        %1861 = vmatpush2.msra.mxu0 %v1220
        %1862 = vmatprep.subr.mxu0 %v1213
        %1863 = vmatpush2.msra.mxu0 %v1212
        %1864 = vmatprep.subr.mxu0 %v1205
        %1865 = vmatpush2.msra.mxu0 %v1204
        %1866 = vmatprep.subr.mxu0 %v1197
        %1867 = vmatpush2.msra.mxu0 %v1196
        %1868 = vmatprep.subr.mxu0 %v1189
        %1869 = vmatpush2.msra.mxu0 %v1188
        %1870 = vmatprep.subr.mxu0 %v1181
        %1871 = vmatpush2.msra.mxu0 %v1180
        %1872 = vmatprep.subr.mxu0 %v1173
        %1873 = vmatpush2.msra.mxu0 %v1172
        %1874 = vmatprep.subr.mxu0 %v1165
        %1875 = vmatpush2.msra.mxu0 %v1164
        %1876 = vmatprep.subr.mxu0 %v1157
        %1877 = vmatpush2.msra.mxu0 %v1156
        %1878 = vmatprep.subr.mxu0 %v1149
        %1879 = vmatpush2.msra.mxu0 %v1148
        %1880 = vmatprep.mubr.f32.mxu0 %v357
        %1881 = vmatmul.mubr.f32.gmra.mxu0 %v356
        %v1882 = vpop.f32.mrf.mxu0
        %v1883 = vadd.f32 %v1599, %v1882
        %v1884 = vpop.f32.mrf.mxu0
        %v1885 = vadd.f32 %v1601, %v1884
        %1886 = vdwg.mxu0
        %1887 = vmatprep.subr.mxu0 %v1143
        %1888 = vmatpush1.msra.mxu0 %v1142
        %1889 = vmatprep.subr.mxu0 %v1135
        %1890 = vmatpush1.msra.mxu0 %v1134
        %1891 = vmatprep.subr.mxu0 %v1127
        %1892 = vmatpush1.msra.mxu0 %v1126
        %1893 = vmatprep.subr.mxu0 %v1119
        %1894 = vmatpush1.msra.mxu0 %v1118
        %1895 = vmatprep.subr.mxu0 %v1111
        %1896 = vmatpush1.msra.mxu0 %v1110
        %1897 = vmatprep.subr.mxu0 %v1103
        %1898 = vmatpush1.msra.mxu0 %v1102
        %1899 = vmatprep.subr.mxu0 %v1095
        %1900 = vmatpush1.msra.mxu0 %v1094
        %1901 = vmatprep.subr.mxu0 %v1087
        %1902 = vmatpush1.msra.mxu0 %v1086
        %1903 = vmatprep.subr.mxu0 %v1079
        %1904 = vmatpush1.msra.mxu0 %v1078
        %1905 = vmatprep.subr.mxu0 %v1071
        %1906 = vmatpush1.msra.mxu0 %v1070
        %1907 = vmatprep.subr.mxu0 %v1063
        %1908 = vmatpush1.msra.mxu0 %v1062
        %1909 = vmatprep.subr.mxu0 %v1055
        %1910 = vmatpush1.msra.mxu0 %v1054
        %1911 = vmatprep.subr.mxu0 %v1047
        %1912 = vmatpush1.msra.mxu0 %v1046
        %1913 = vmatprep.subr.mxu0 %v1039
        %1914 = vmatpush1.msra.mxu0 %v1038
        %1915 = vmatprep.subr.mxu0 %v1031
        %1916 = vmatpush1.msra.mxu0 %v1030
        %1917 = vmatprep.subr.mxu0 %v1023
        %1918 = vmatpush1.msra.mxu0 %v1022
        %1919 = vmatprep.subr.mxu0 %v1271
        %1920 = vmatpush2.msra.mxu0 %v1270
        %1921 = vmatprep.subr.mxu0 %v1263
        %1922 = vmatpush2.msra.mxu0 %v1262
        %1923 = vmatprep.subr.mxu0 %v1255
        %1924 = vmatpush2.msra.mxu0 %v1254
        %1925 = vmatprep.subr.mxu0 %v1247
        %1926 = vmatpush2.msra.mxu0 %v1246
        %1927 = vmatprep.subr.mxu0 %v1239
        %1928 = vmatpush2.msra.mxu0 %v1238
        %1929 = vmatprep.subr.mxu0 %v1231
        %1930 = vmatpush2.msra.mxu0 %v1230
        %1931 = vmatprep.subr.mxu0 %v1223
        %1932 = vmatpush2.msra.mxu0 %v1222
        %1933 = vmatprep.subr.mxu0 %v1215
        %1934 = vmatpush2.msra.mxu0 %v1214
        %1935 = vmatprep.subr.mxu0 %v1207
        %1936 = vmatpush2.msra.mxu0 %v1206
        %1937 = vmatprep.subr.mxu0 %v1199
        %1938 = vmatpush2.msra.mxu0 %v1198
        %1939 = vmatprep.subr.mxu0 %v1191
        %1940 = vmatpush2.msra.mxu0 %v1190
        %1941 = vmatprep.subr.mxu0 %v1183
        %1942 = vmatpush2.msra.mxu0 %v1182
        %1943 = vmatprep.subr.mxu0 %v1175
        %1944 = vmatpush2.msra.mxu0 %v1174
        %1945 = vmatprep.subr.mxu0 %v1167
        %1946 = vmatpush2.msra.mxu0 %v1166
        %1947 = vmatprep.subr.mxu0 %v1159
        %1948 = vmatpush2.msra.mxu0 %v1158
        %1949 = vmatprep.subr.mxu0 %v1151
        %1950 = vmatpush2.msra.mxu0 %v1150
        %1951 = vmatprep.mubr.f32.mxu0 %v357
        %1952 = vmatmul.mubr.f32.gmra.mxu0 %v356
        %v1953 = vpop.f32.mrf.mxu0
        %v1954 = vadd.f32 %v1670, %v1953
        %v1955 = vpop.f32.mrf.mxu0
        %v1956 = vadd.f32 %v1672, %v1955
        %1957 = vdwg.mxu0
        %1958 = vmatprep.subr.mxu0 %v1145
        %1959 = vmatpush1.msra.mxu0 %v1144
        %1960 = vmatprep.subr.mxu0 %v1137
        %1961 = vmatpush1.msra.mxu0 %v1136
        %1962 = vmatprep.subr.mxu0 %v1129
        %1963 = vmatpush1.msra.mxu0 %v1128
        %1964 = vmatprep.subr.mxu0 %v1121
        %1965 = vmatpush1.msra.mxu0 %v1120
        %1966 = vmatprep.subr.mxu0 %v1113
        %1967 = vmatpush1.msra.mxu0 %v1112
        %1968 = vmatprep.subr.mxu0 %v1105
        %1969 = vmatpush1.msra.mxu0 %v1104
        %1970 = vmatprep.subr.mxu0 %v1097
        %1971 = vmatpush1.msra.mxu0 %v1096
        %1972 = vmatprep.subr.mxu0 %v1089
        %1973 = vmatpush1.msra.mxu0 %v1088
        %1974 = vmatprep.subr.mxu0 %v1081
        %1975 = vmatpush1.msra.mxu0 %v1080
        %1976 = vmatprep.subr.mxu0 %v1073
        %1977 = vmatpush1.msra.mxu0 %v1072
        %1978 = vmatprep.subr.mxu0 %v1065
        %1979 = vmatpush1.msra.mxu0 %v1064
        %1980 = vmatprep.subr.mxu0 %v1057
        %1981 = vmatpush1.msra.mxu0 %v1056
        %1982 = vmatprep.subr.mxu0 %v1049
        %1983 = vmatpush1.msra.mxu0 %v1048
        %1984 = vmatprep.subr.mxu0 %v1041
        %1985 = vmatpush1.msra.mxu0 %v1040
        %1986 = vmatprep.subr.mxu0 %v1033
        %1987 = vmatpush1.msra.mxu0 %v1032
        %1988 = vmatprep.subr.mxu0 %v1025
        %1989 = vmatpush1.msra.mxu0 %v1024
        %1990 = vmatprep.subr.mxu0 %v1273
        %1991 = vmatpush2.msra.mxu0 %v1272
        %1992 = vmatprep.subr.mxu0 %v1265
        %1993 = vmatpush2.msra.mxu0 %v1264
        %1994 = vmatprep.subr.mxu0 %v1257
        %1995 = vmatpush2.msra.mxu0 %v1256
        %1996 = vmatprep.subr.mxu0 %v1249
        %1997 = vmatpush2.msra.mxu0 %v1248
        %1998 = vmatprep.subr.mxu0 %v1241
        %1999 = vmatpush2.msra.mxu0 %v1240
        %2000 = vmatprep.subr.mxu0 %v1233
        %2001 = vmatpush2.msra.mxu0 %v1232
        %2002 = vmatprep.subr.mxu0 %v1225
        %2003 = vmatpush2.msra.mxu0 %v1224
        %2004 = vmatprep.subr.mxu0 %v1217
        %2005 = vmatpush2.msra.mxu0 %v1216
        %2006 = vmatprep.subr.mxu0 %v1209
        %2007 = vmatpush2.msra.mxu0 %v1208
        %2008 = vmatprep.subr.mxu0 %v1201
        %2009 = vmatpush2.msra.mxu0 %v1200
        %2010 = vmatprep.subr.mxu0 %v1193
        %2011 = vmatpush2.msra.mxu0 %v1192
        %2012 = vmatprep.subr.mxu0 %v1185
        %2013 = vmatpush2.msra.mxu0 %v1184
        %2014 = vmatprep.subr.mxu0 %v1177
        %2015 = vmatpush2.msra.mxu0 %v1176
        %2016 = vmatprep.subr.mxu0 %v1169
        %2017 = vmatpush2.msra.mxu0 %v1168
        %2018 = vmatprep.subr.mxu0 %v1161
        %2019 = vmatpush2.msra.mxu0 %v1160
        %2020 = vmatprep.subr.mxu0 %v1153
        %2021 = vmatpush2.msra.mxu0 %v1152
        %2022 = vmatprep.mubr.f32.mxu0 %v357
        %2023 = vmatmul.mubr.f32.gmra.mxu0 %v356
        %v2024 = vpop.f32.mrf.mxu0
        %v2025 = vadd.f32 %v1741, %v2024
        %v2026 = vpop.f32.mrf.mxu0
        %v2027 = vadd.f32 %v1743, %v2026
        %2028 = vdwg.mxu0
        %2029 = vmatprep.subr.mxu0 %v1147
        %2030 = vmatpush1.msra.mxu0 %v1146
        %2031 = vmatprep.subr.mxu0 %v1139
        %2032 = vmatpush1.msra.mxu0 %v1138
        %2033 = vmatprep.subr.mxu0 %v1131
        %2034 = vmatpush1.msra.mxu0 %v1130
        %2035 = vmatprep.subr.mxu0 %v1123
        %2036 = vmatpush1.msra.mxu0 %v1122
        %2037 = vmatprep.subr.mxu0 %v1115
        %2038 = vmatpush1.msra.mxu0 %v1114
        %2039 = vmatprep.subr.mxu0 %v1107
        %2040 = vmatpush1.msra.mxu0 %v1106
        %2041 = vmatprep.subr.mxu0 %v1099
        %2042 = vmatpush1.msra.mxu0 %v1098
        %2043 = vmatprep.subr.mxu0 %v1091
        %2044 = vmatpush1.msra.mxu0 %v1090
        %2045 = vmatprep.subr.mxu0 %v1083
        %2046 = vmatpush1.msra.mxu0 %v1082
        %2047 = vmatprep.subr.mxu0 %v1075
        %2048 = vmatpush1.msra.mxu0 %v1074
        %2049 = vmatprep.subr.mxu0 %v1067
        %2050 = vmatpush1.msra.mxu0 %v1066
        %2051 = vmatprep.subr.mxu0 %v1059
        %2052 = vmatpush1.msra.mxu0 %v1058
        %2053 = vmatprep.subr.mxu0 %v1051
        %2054 = vmatpush1.msra.mxu0 %v1050
        %2055 = vmatprep.subr.mxu0 %v1043
        %2056 = vmatpush1.msra.mxu0 %v1042
        %2057 = vmatprep.subr.mxu0 %v1035
        %2058 = vmatpush1.msra.mxu0 %v1034
        %2059 = vmatprep.subr.mxu0 %v1027
        %2060 = vmatpush1.msra.mxu0 %v1026
        %2061 = vmatprep.subr.mxu0 %v1275
        %2062 = vmatpush2.msra.mxu0 %v1274
        %2063 = vmatprep.subr.mxu0 %v1267
        %2064 = vmatpush2.msra.mxu0 %v1266
        %2065 = vmatprep.subr.mxu0 %v1259
        %2066 = vmatpush2.msra.mxu0 %v1258
        %2067 = vmatprep.subr.mxu0 %v1251
        %2068 = vmatpush2.msra.mxu0 %v1250
        %2069 = vmatprep.subr.mxu0 %v1243
        %2070 = vmatpush2.msra.mxu0 %v1242
        %2071 = vmatprep.subr.mxu0 %v1235
        %2072 = vmatpush2.msra.mxu0 %v1234
        %2073 = vmatprep.subr.mxu0 %v1227
        %2074 = vmatpush2.msra.mxu0 %v1226
        %2075 = vmatprep.subr.mxu0 %v1219
        %2076 = vmatpush2.msra.mxu0 %v1218
        %2077 = vmatprep.subr.mxu0 %v1211
        %2078 = vmatpush2.msra.mxu0 %v1210
        %2079 = vmatprep.subr.mxu0 %v1203
        %2080 = vmatpush2.msra.mxu0 %v1202
        %2081 = vmatprep.subr.mxu0 %v1195
        %2082 = vmatpush2.msra.mxu0 %v1194
        %2083 = vmatprep.subr.mxu0 %v1187
        %2084 = vmatpush2.msra.mxu0 %v1186
        %2085 = vmatprep.subr.mxu0 %v1179
        %2086 = vmatpush2.msra.mxu0 %v1178
        %2087 = vmatprep.subr.mxu0 %v1171
        %2088 = vmatpush2.msra.mxu0 %v1170
        %2089 = vmatprep.subr.mxu0 %v1163
        %2090 = vmatpush2.msra.mxu0 %v1162
        %2091 = vmatprep.subr.mxu0 %v1155
        %2092 = vmatpush2.msra.mxu0 %v1154
        %2093 = vmatprep.mubr.f32.mxu0 %v357
        %2094 = vmatmul.mubr.f32.gmra.mxu0 %v356
        %v2095 = vpop.f32.mrf.mxu0
        %v2096 = vadd.f32 %v1812, %v2095
        %v2097 = vpop.f32.mrf.mxu0
        %v2098 = vadd.f32 %v1814, %v2097
        %2099 = vdwg.mxu0
        %s2100 = scalar_lea.vmem [#allocation10], 2048
        %v2101 = vld [vmem:[%s2100] sm:$0xff]
        %v2102 = vld [vmem:[%s2100 + $0x8] sm:$0xff]
        %v2103 = vld [vmem:[%s2100 + $0x10] sm:$0xff]
        %v2104 = vld [vmem:[%s2100 + $0x18] sm:$0xff]
        %v2105 = vld [vmem:[%s2100 + $0x20] sm:$0xff]
        %v2106 = vld [vmem:[%s2100 + $0x28] sm:$0xff]
        %v2107 = vld [vmem:[%s2100 + $0x30] sm:$0xff]
        %v2108 = vld [vmem:[%s2100 + $0x38] sm:$0xff]
        %v2109 = vld [vmem:[%s2100 + $0x40] sm:$0xff]
        %v2110 = vld [vmem:[%s2100 + $0x48] sm:$0xff]
        %v2111 = vld [vmem:[%s2100 + $0x50] sm:$0xff]
        %v2112 = vld [vmem:[%s2100 + $0x58] sm:$0xff]
        %v2113 = vld [vmem:[%s2100 + $0x60] sm:$0xff]
        %v2114 = vld [vmem:[%s2100 + $0x68] sm:$0xff]
        %v2115 = vld [vmem:[%s2100 + $0x70] sm:$0xff]
        %v2116 = vld [vmem:[%s2100 + $0x78] sm:$0xff]
        %v2117 = vld [vmem:[%s2100 + $0x80] sm:$0xff]
        %v2118 = vld [vmem:[%s2100 + $0x88] sm:$0xff]
        %v2119 = vld [vmem:[%s2100 + $0x90] sm:$0xff]
        %v2120 = vld [vmem:[%s2100 + $0x98] sm:$0xff]
        %v2121 = vld [vmem:[%s2100 + $0xa0] sm:$0xff]
        %v2122 = vld [vmem:[%s2100 + $0xa8] sm:$0xff]
        %v2123 = vld [vmem:[%s2100 + $0xb0] sm:$0xff]
        %v2124 = vld [vmem:[%s2100 + $0xb8] sm:$0xff]
        %v2125 = vld [vmem:[%s2100 + $0xc0] sm:$0xff]
        %v2126 = vld [vmem:[%s2100 + $0xc8] sm:$0xff]
        %v2127 = vld [vmem:[%s2100 + $0xd0] sm:$0xff]
        %v2128 = vld [vmem:[%s2100 + $0xd8] sm:$0xff]
        %v2129 = vld [vmem:[%s2100 + $0xe0] sm:$0xff]
        %v2130 = vld [vmem:[%s2100 + $0xe8] sm:$0xff]
        %v2131 = vld [vmem:[%s2100 + $0xf0] sm:$0xff]
        %v2132 = vld [vmem:[%s2100 + $0xf8] sm:$0xff]
        %v2133 = vld [vmem:[%s2100 + $0x100] sm:$0xff]
        %v2134 = vld [vmem:[%s2100 + $0x108] sm:$0xff]
        %v2135 = vld [vmem:[%s2100 + $0x110] sm:$0xff]
        %v2136 = vld [vmem:[%s2100 + $0x118] sm:$0xff]
        %v2137 = vld [vmem:[%s2100 + $0x120] sm:$0xff]
        %v2138 = vld [vmem:[%s2100 + $0x128] sm:$0xff]
        %v2139 = vld [vmem:[%s2100 + $0x130] sm:$0xff]
        %v2140 = vld [vmem:[%s2100 + $0x138] sm:$0xff]
        %v2141 = vld [vmem:[%s2100 + $0x140] sm:$0xff]
        %v2142 = vld [vmem:[%s2100 + $0x148] sm:$0xff]
        %v2143 = vld [vmem:[%s2100 + $0x150] sm:$0xff]
        %v2144 = vld [vmem:[%s2100 + $0x158] sm:$0xff]
        %v2145 = vld [vmem:[%s2100 + $0x160] sm:$0xff]
        %v2146 = vld [vmem:[%s2100 + $0x168] sm:$0xff]
        %v2147 = vld [vmem:[%s2100 + $0x170] sm:$0xff]
        %v2148 = vld [vmem:[%s2100 + $0x178] sm:$0xff]
        %v2149 = vld [vmem:[%s2100 + $0x180] sm:$0xff]
        %v2150 = vld [vmem:[%s2100 + $0x188] sm:$0xff]
        %v2151 = vld [vmem:[%s2100 + $0x190] sm:$0xff]
        %v2152 = vld [vmem:[%s2100 + $0x198] sm:$0xff]
        %v2153 = vld [vmem:[%s2100 + $0x1a0] sm:$0xff]
        %v2154 = vld [vmem:[%s2100 + $0x1a8] sm:$0xff]
        %v2155 = vld [vmem:[%s2100 + $0x1b0] sm:$0xff]
        %v2156 = vld [vmem:[%s2100 + $0x1b8] sm:$0xff]
        %v2157 = vld [vmem:[%s2100 + $0x1c0] sm:$0xff]
        %v2158 = vld [vmem:[%s2100 + $0x1c8] sm:$0xff]
        %v2159 = vld [vmem:[%s2100 + $0x1d0] sm:$0xff]
        %v2160 = vld [vmem:[%s2100 + $0x1d8] sm:$0xff]
        %v2161 = vld [vmem:[%s2100 + $0x1e0] sm:$0xff]
        %v2162 = vld [vmem:[%s2100 + $0x1e8] sm:$0xff]
        %v2163 = vld [vmem:[%s2100 + $0x1f0] sm:$0xff]
        %v2164 = vld [vmem:[%s2100 + $0x1f8] sm:$0xff]
        %v2165 = vld [vmem:[%s2100 + $0x200] sm:$0xff]
        %v2166 = vld [vmem:[%s2100 + $0x208] sm:$0xff]
        %v2167 = vld [vmem:[%s2100 + $0x210] sm:$0xff]
        %v2168 = vld [vmem:[%s2100 + $0x218] sm:$0xff]
        %v2169 = vld [vmem:[%s2100 + $0x220] sm:$0xff]
        %v2170 = vld [vmem:[%s2100 + $0x228] sm:$0xff]
        %v2171 = vld [vmem:[%s2100 + $0x230] sm:$0xff]
        %v2172 = vld [vmem:[%s2100 + $0x238] sm:$0xff]
        %v2173 = vld [vmem:[%s2100 + $0x240] sm:$0xff]
        %v2174 = vld [vmem:[%s2100 + $0x248] sm:$0xff]
        %v2175 = vld [vmem:[%s2100 + $0x250] sm:$0xff]
        %v2176 = vld [vmem:[%s2100 + $0x258] sm:$0xff]
        %v2177 = vld [vmem:[%s2100 + $0x260] sm:$0xff]
        %v2178 = vld [vmem:[%s2100 + $0x268] sm:$0xff]
        %v2179 = vld [vmem:[%s2100 + $0x270] sm:$0xff]
        %v2180 = vld [vmem:[%s2100 + $0x278] sm:$0xff]
        %v2181 = vld [vmem:[%s2100 + $0x280] sm:$0xff]
        %v2182 = vld [vmem:[%s2100 + $0x288] sm:$0xff]
        %v2183 = vld [vmem:[%s2100 + $0x290] sm:$0xff]
        %v2184 = vld [vmem:[%s2100 + $0x298] sm:$0xff]
        %v2185 = vld [vmem:[%s2100 + $0x2a0] sm:$0xff]
        %v2186 = vld [vmem:[%s2100 + $0x2a8] sm:$0xff]
        %v2187 = vld [vmem:[%s2100 + $0x2b0] sm:$0xff]
        %v2188 = vld [vmem:[%s2100 + $0x2b8] sm:$0xff]
        %v2189 = vld [vmem:[%s2100 + $0x2c0] sm:$0xff]
        %v2190 = vld [vmem:[%s2100 + $0x2c8] sm:$0xff]
        %v2191 = vld [vmem:[%s2100 + $0x2d0] sm:$0xff]
        %v2192 = vld [vmem:[%s2100 + $0x2d8] sm:$0xff]
        %v2193 = vld [vmem:[%s2100 + $0x2e0] sm:$0xff]
        %v2194 = vld [vmem:[%s2100 + $0x2e8] sm:$0xff]
        %v2195 = vld [vmem:[%s2100 + $0x2f0] sm:$0xff]
        %v2196 = vld [vmem:[%s2100 + $0x2f8] sm:$0xff]
        %v2197 = vld [vmem:[%s2100 + $0x300] sm:$0xff]
        %v2198 = vld [vmem:[%s2100 + $0x308] sm:$0xff]
        %v2199 = vld [vmem:[%s2100 + $0x310] sm:$0xff]
        %v2200 = vld [vmem:[%s2100 + $0x318] sm:$0xff]
        %v2201 = vld [vmem:[%s2100 + $0x320] sm:$0xff]
        %v2202 = vld [vmem:[%s2100 + $0x328] sm:$0xff]
        %v2203 = vld [vmem:[%s2100 + $0x330] sm:$0xff]
        %v2204 = vld [vmem:[%s2100 + $0x338] sm:$0xff]
        %v2205 = vld [vmem:[%s2100 + $0x340] sm:$0xff]
        %v2206 = vld [vmem:[%s2100 + $0x348] sm:$0xff]
        %v2207 = vld [vmem:[%s2100 + $0x350] sm:$0xff]
        %v2208 = vld [vmem:[%s2100 + $0x358] sm:$0xff]
        %v2209 = vld [vmem:[%s2100 + $0x360] sm:$0xff]
        %v2210 = vld [vmem:[%s2100 + $0x368] sm:$0xff]
        %v2211 = vld [vmem:[%s2100 + $0x370] sm:$0xff]
        %v2212 = vld [vmem:[%s2100 + $0x378] sm:$0xff]
        %v2213 = vld [vmem:[%s2100 + $0x380] sm:$0xff]
        %v2214 = vld [vmem:[%s2100 + $0x388] sm:$0xff]
        %v2215 = vld [vmem:[%s2100 + $0x390] sm:$0xff]
        %v2216 = vld [vmem:[%s2100 + $0x398] sm:$0xff]
        %v2217 = vld [vmem:[%s2100 + $0x3a0] sm:$0xff]
        %v2218 = vld [vmem:[%s2100 + $0x3a8] sm:$0xff]
        %v2219 = vld [vmem:[%s2100 + $0x3b0] sm:$0xff]
        %v2220 = vld [vmem:[%s2100 + $0x3b8] sm:$0xff]
        %v2221 = vld [vmem:[%s2100 + $0x3c0] sm:$0xff]
        %v2222 = vld [vmem:[%s2100 + $0x3c8] sm:$0xff]
        %v2223 = vld [vmem:[%s2100 + $0x3d0] sm:$0xff]
        %v2224 = vld [vmem:[%s2100 + $0x3d8] sm:$0xff]
        %v2225 = vld [vmem:[%s2100 + $0x3e0] sm:$0xff]
        %v2226 = vld [vmem:[%s2100 + $0x3e8] sm:$0xff]
        %v2227 = vld [vmem:[%s2100 + $0x3f0] sm:$0xff]
        %v2228 = vld [vmem:[%s2100 + $0x3f8] sm:$0xff]
        %v2229 = vld [vmem:[%s2100 + $0x400] sm:$0xff]
        %v2230 = vld [vmem:[%s2100 + $0x408] sm:$0xff]
        %v2231 = vld [vmem:[%s2100 + $0x410] sm:$0xff]
        %v2232 = vld [vmem:[%s2100 + $0x418] sm:$0xff]
        %v2233 = vld [vmem:[%s2100 + $0x420] sm:$0xff]
        %v2234 = vld [vmem:[%s2100 + $0x428] sm:$0xff]
        %v2235 = vld [vmem:[%s2100 + $0x430] sm:$0xff]
        %v2236 = vld [vmem:[%s2100 + $0x438] sm:$0xff]
        %v2237 = vld [vmem:[%s2100 + $0x440] sm:$0xff]
        %v2238 = vld [vmem:[%s2100 + $0x448] sm:$0xff]
        %v2239 = vld [vmem:[%s2100 + $0x450] sm:$0xff]
        %v2240 = vld [vmem:[%s2100 + $0x458] sm:$0xff]
        %v2241 = vld [vmem:[%s2100 + $0x460] sm:$0xff]
        %v2242 = vld [vmem:[%s2100 + $0x468] sm:$0xff]
        %v2243 = vld [vmem:[%s2100 + $0x470] sm:$0xff]
        %v2244 = vld [vmem:[%s2100 + $0x478] sm:$0xff]
        %v2245 = vld [vmem:[%s2100 + $0x480] sm:$0xff]
        %v2246 = vld [vmem:[%s2100 + $0x488] sm:$0xff]
        %v2247 = vld [vmem:[%s2100 + $0x490] sm:$0xff]
        %v2248 = vld [vmem:[%s2100 + $0x498] sm:$0xff]
        %v2249 = vld [vmem:[%s2100 + $0x4a0] sm:$0xff]
        %v2250 = vld [vmem:[%s2100 + $0x4a8] sm:$0xff]
        %v2251 = vld [vmem:[%s2100 + $0x4b0] sm:$0xff]
        %v2252 = vld [vmem:[%s2100 + $0x4b8] sm:$0xff]
        %v2253 = vld [vmem:[%s2100 + $0x4c0] sm:$0xff]
        %v2254 = vld [vmem:[%s2100 + $0x4c8] sm:$0xff]
        %v2255 = vld [vmem:[%s2100 + $0x4d0] sm:$0xff]
        %v2256 = vld [vmem:[%s2100 + $0x4d8] sm:$0xff]
        %v2257 = vld [vmem:[%s2100 + $0x4e0] sm:$0xff]
        %v2258 = vld [vmem:[%s2100 + $0x4e8] sm:$0xff]
        %v2259 = vld [vmem:[%s2100 + $0x4f0] sm:$0xff]
        %v2260 = vld [vmem:[%s2100 + $0x4f8] sm:$0xff]
        %v2261 = vld [vmem:[%s2100 + $0x500] sm:$0xff]
        %v2262 = vld [vmem:[%s2100 + $0x508] sm:$0xff]
        %v2263 = vld [vmem:[%s2100 + $0x510] sm:$0xff]
        %v2264 = vld [vmem:[%s2100 + $0x518] sm:$0xff]
        %v2265 = vld [vmem:[%s2100 + $0x520] sm:$0xff]
        %v2266 = vld [vmem:[%s2100 + $0x528] sm:$0xff]
        %v2267 = vld [vmem:[%s2100 + $0x530] sm:$0xff]
        %v2268 = vld [vmem:[%s2100 + $0x538] sm:$0xff]
        %v2269 = vld [vmem:[%s2100 + $0x540] sm:$0xff]
        %v2270 = vld [vmem:[%s2100 + $0x548] sm:$0xff]
        %v2271 = vld [vmem:[%s2100 + $0x550] sm:$0xff]
        %v2272 = vld [vmem:[%s2100 + $0x558] sm:$0xff]
        %v2273 = vld [vmem:[%s2100 + $0x560] sm:$0xff]
        %v2274 = vld [vmem:[%s2100 + $0x568] sm:$0xff]
        %v2275 = vld [vmem:[%s2100 + $0x570] sm:$0xff]
        %v2276 = vld [vmem:[%s2100 + $0x578] sm:$0xff]
        %v2277 = vld [vmem:[%s2100 + $0x580] sm:$0xff]
        %v2278 = vld [vmem:[%s2100 + $0x588] sm:$0xff]
        %v2279 = vld [vmem:[%s2100 + $0x590] sm:$0xff]
        %v2280 = vld [vmem:[%s2100 + $0x598] sm:$0xff]
        %v2281 = vld [vmem:[%s2100 + $0x5a0] sm:$0xff]
        %v2282 = vld [vmem:[%s2100 + $0x5a8] sm:$0xff]
        %v2283 = vld [vmem:[%s2100 + $0x5b0] sm:$0xff]
        %v2284 = vld [vmem:[%s2100 + $0x5b8] sm:$0xff]
        %v2285 = vld [vmem:[%s2100 + $0x5c0] sm:$0xff]
        %v2286 = vld [vmem:[%s2100 + $0x5c8] sm:$0xff]
        %v2287 = vld [vmem:[%s2100 + $0x5d0] sm:$0xff]
        %v2288 = vld [vmem:[%s2100 + $0x5d8] sm:$0xff]
        %v2289 = vld [vmem:[%s2100 + $0x5e0] sm:$0xff]
        %v2290 = vld [vmem:[%s2100 + $0x5e8] sm:$0xff]
        %v2291 = vld [vmem:[%s2100 + $0x5f0] sm:$0xff]
        %v2292 = vld [vmem:[%s2100 + $0x5f8] sm:$0xff]
        %v2293 = vld [vmem:[%s2100 + $0x600] sm:$0xff]
        %v2294 = vld [vmem:[%s2100 + $0x608] sm:$0xff]
        %v2295 = vld [vmem:[%s2100 + $0x610] sm:$0xff]
        %v2296 = vld [vmem:[%s2100 + $0x618] sm:$0xff]
        %v2297 = vld [vmem:[%s2100 + $0x620] sm:$0xff]
        %v2298 = vld [vmem:[%s2100 + $0x628] sm:$0xff]
        %v2299 = vld [vmem:[%s2100 + $0x630] sm:$0xff]
        %v2300 = vld [vmem:[%s2100 + $0x638] sm:$0xff]
        %v2301 = vld [vmem:[%s2100 + $0x640] sm:$0xff]
        %v2302 = vld [vmem:[%s2100 + $0x648] sm:$0xff]
        %v2303 = vld [vmem:[%s2100 + $0x650] sm:$0xff]
        %v2304 = vld [vmem:[%s2100 + $0x658] sm:$0xff]
        %v2305 = vld [vmem:[%s2100 + $0x660] sm:$0xff]
        %v2306 = vld [vmem:[%s2100 + $0x668] sm:$0xff]
        %v2307 = vld [vmem:[%s2100 + $0x670] sm:$0xff]
        %v2308 = vld [vmem:[%s2100 + $0x678] sm:$0xff]
        %v2309 = vld [vmem:[%s2100 + $0x680] sm:$0xff]
        %v2310 = vld [vmem:[%s2100 + $0x688] sm:$0xff]
        %v2311 = vld [vmem:[%s2100 + $0x690] sm:$0xff]
        %v2312 = vld [vmem:[%s2100 + $0x698] sm:$0xff]
        %v2313 = vld [vmem:[%s2100 + $0x6a0] sm:$0xff]
        %v2314 = vld [vmem:[%s2100 + $0x6a8] sm:$0xff]
        %v2315 = vld [vmem:[%s2100 + $0x6b0] sm:$0xff]
        %v2316 = vld [vmem:[%s2100 + $0x6b8] sm:$0xff]
        %v2317 = vld [vmem:[%s2100 + $0x6c0] sm:$0xff]
        %v2318 = vld [vmem:[%s2100 + $0x6c8] sm:$0xff]
        %v2319 = vld [vmem:[%s2100 + $0x6d0] sm:$0xff]
        %v2320 = vld [vmem:[%s2100 + $0x6d8] sm:$0xff]
        %v2321 = vld [vmem:[%s2100 + $0x6e0] sm:$0xff]
        %v2322 = vld [vmem:[%s2100 + $0x6e8] sm:$0xff]
        %v2323 = vld [vmem:[%s2100 + $0x6f0] sm:$0xff]
        %v2324 = vld [vmem:[%s2100 + $0x6f8] sm:$0xff]
        %v2325 = vld [vmem:[%s2100 + $0x700] sm:$0xff]
        %v2326 = vld [vmem:[%s2100 + $0x708] sm:$0xff]
        %v2327 = vld [vmem:[%s2100 + $0x710] sm:$0xff]
        %v2328 = vld [vmem:[%s2100 + $0x718] sm:$0xff]
        %v2329 = vld [vmem:[%s2100 + $0x720] sm:$0xff]
        %v2330 = vld [vmem:[%s2100 + $0x728] sm:$0xff]
        %v2331 = vld [vmem:[%s2100 + $0x730] sm:$0xff]
        %v2332 = vld [vmem:[%s2100 + $0x738] sm:$0xff]
        %v2333 = vld [vmem:[%s2100 + $0x740] sm:$0xff]
        %v2334 = vld [vmem:[%s2100 + $0x748] sm:$0xff]
        %v2335 = vld [vmem:[%s2100 + $0x750] sm:$0xff]
        %v2336 = vld [vmem:[%s2100 + $0x758] sm:$0xff]
        %v2337 = vld [vmem:[%s2100 + $0x760] sm:$0xff]
        %v2338 = vld [vmem:[%s2100 + $0x768] sm:$0xff]
        %v2339 = vld [vmem:[%s2100 + $0x770] sm:$0xff]
        %v2340 = vld [vmem:[%s2100 + $0x778] sm:$0xff]
        %v2341 = vld [vmem:[%s2100 + $0x780] sm:$0xff]
        %v2342 = vld [vmem:[%s2100 + $0x788] sm:$0xff]
        %v2343 = vld [vmem:[%s2100 + $0x790] sm:$0xff]
        %v2344 = vld [vmem:[%s2100 + $0x798] sm:$0xff]
        %v2345 = vld [vmem:[%s2100 + $0x7a0] sm:$0xff]
        %v2346 = vld [vmem:[%s2100 + $0x7a8] sm:$0xff]
        %v2347 = vld [vmem:[%s2100 + $0x7b0] sm:$0xff]
        %v2348 = vld [vmem:[%s2100 + $0x7b8] sm:$0xff]
        %v2349 = vld [vmem:[%s2100 + $0x7c0] sm:$0xff]
        %v2350 = vld [vmem:[%s2100 + $0x7c8] sm:$0xff]
        %v2351 = vld [vmem:[%s2100 + $0x7d0] sm:$0xff]
        %v2352 = vld [vmem:[%s2100 + $0x7d8] sm:$0xff]
        %v2353 = vld [vmem:[%s2100 + $0x7e0] sm:$0xff]
        %v2354 = vld [vmem:[%s2100 + $0x7e8] sm:$0xff]
        %v2355 = vld [vmem:[%s2100 + $0x7f0] sm:$0xff]
        %v2356 = vld [vmem:[%s2100 + $0x7f8] sm:$0xff]
        %v2359 = vrot.slane %v1009, 3
        %v2360 = vrot.slane %v1011, 3
        %2363 = vmatprep.subr.mxu0 %v2222
        %2364 = vmatpush1.msra.mxu0 %v2221
        %2365 = vmatprep.subr.mxu0 %v2214
        %2366 = vmatpush1.msra.mxu0 %v2213
        %2367 = vmatprep.subr.mxu0 %v2206
        %2368 = vmatpush1.msra.mxu0 %v2205
        %2369 = vmatprep.subr.mxu0 %v2198
        %2370 = vmatpush1.msra.mxu0 %v2197
        %2371 = vmatprep.subr.mxu0 %v2190
        %2372 = vmatpush1.msra.mxu0 %v2189
        %2373 = vmatprep.subr.mxu0 %v2182
        %2374 = vmatpush1.msra.mxu0 %v2181
        %2375 = vmatprep.subr.mxu0 %v2174
        %2376 = vmatpush1.msra.mxu0 %v2173
        %2377 = vmatprep.subr.mxu0 %v2166
        %2378 = vmatpush1.msra.mxu0 %v2165
        %2379 = vmatprep.subr.mxu0 %v2158
        %2380 = vmatpush1.msra.mxu0 %v2157
        %2381 = vmatprep.subr.mxu0 %v2150
        %2382 = vmatpush1.msra.mxu0 %v2149
        %2383 = vmatprep.subr.mxu0 %v2142
        %2384 = vmatpush1.msra.mxu0 %v2141
        %2385 = vmatprep.subr.mxu0 %v2134
        %2386 = vmatpush1.msra.mxu0 %v2133
        %2387 = vmatprep.subr.mxu0 %v2126
        %2388 = vmatpush1.msra.mxu0 %v2125
        %2389 = vmatprep.subr.mxu0 %v2118
        %2390 = vmatpush1.msra.mxu0 %v2117
        %2391 = vmatprep.subr.mxu0 %v2110
        %2392 = vmatpush1.msra.mxu0 %v2109
        %2393 = vmatprep.subr.mxu0 %v2102
        %2394 = vmatpush1.msra.mxu0 %v2101
        %2395 = vmatprep.subr.mxu0 %v2350
        %2396 = vmatpush2.msra.mxu0 %v2349
        %2397 = vmatprep.subr.mxu0 %v2342
        %2398 = vmatpush2.msra.mxu0 %v2341
        %2399 = vmatprep.subr.mxu0 %v2334
        %2400 = vmatpush2.msra.mxu0 %v2333
        %2401 = vmatprep.subr.mxu0 %v2326
        %2402 = vmatpush2.msra.mxu0 %v2325
        %2403 = vmatprep.subr.mxu0 %v2318
        %2404 = vmatpush2.msra.mxu0 %v2317
        %2405 = vmatprep.subr.mxu0 %v2310
        %2406 = vmatpush2.msra.mxu0 %v2309
        %2407 = vmatprep.subr.mxu0 %v2302
        %2408 = vmatpush2.msra.mxu0 %v2301
        %2409 = vmatprep.subr.mxu0 %v2294
        %2410 = vmatpush2.msra.mxu0 %v2293
        %2411 = vmatprep.subr.mxu0 %v2286
        %2412 = vmatpush2.msra.mxu0 %v2285
        %2413 = vmatprep.subr.mxu0 %v2278
        %2414 = vmatpush2.msra.mxu0 %v2277
        %2415 = vmatprep.subr.mxu0 %v2270
        %2416 = vmatpush2.msra.mxu0 %v2269
        %2417 = vmatprep.subr.mxu0 %v2262
        %2418 = vmatpush2.msra.mxu0 %v2261
        %2419 = vmatprep.subr.mxu0 %v2254
        %2420 = vmatpush2.msra.mxu0 %v2253
        %2421 = vmatprep.subr.mxu0 %v2246
        %2422 = vmatpush2.msra.mxu0 %v2245
        %2423 = vmatprep.subr.mxu0 %v2238
        %2424 = vmatpush2.msra.mxu0 %v2237
        %2425 = vmatprep.subr.mxu0 %v2230
        %2426 = vmatpush2.msra.mxu0 %v2229
        %2427 = vmatprep.mubr.f32.mxu0 %v2360
        %2428 = vmatmul.mubr.f32.gmra.mxu0 %v2359
        %v2429 = vpop.f32.mrf.mxu0
        %v2430 = vadd.f32 0.0, %v2429
        %v2431 = vpop.f32.mrf.mxu0
        %v2432 = vadd.f32 0.0, %v2431
        %2433 = vdwg.mxu0
        %2434 = vmatprep.subr.mxu0 %v2224
        %2435 = vmatpush1.msra.mxu0 %v2223
        %2436 = vmatprep.subr.mxu0 %v2216
        %2437 = vmatpush1.msra.mxu0 %v2215
        %2438 = vmatprep.subr.mxu0 %v2208
        %2439 = vmatpush1.msra.mxu0 %v2207
        %2440 = vmatprep.subr.mxu0 %v2200
        %2441 = vmatpush1.msra.mxu0 %v2199
        %2442 = vmatprep.subr.mxu0 %v2192
        %2443 = vmatpush1.msra.mxu0 %v2191
        %2444 = vmatprep.subr.mxu0 %v2184
        %2445 = vmatpush1.msra.mxu0 %v2183
        %2446 = vmatprep.subr.mxu0 %v2176
        %2447 = vmatpush1.msra.mxu0 %v2175
        %2448 = vmatprep.subr.mxu0 %v2168
        %2449 = vmatpush1.msra.mxu0 %v2167
        %2450 = vmatprep.subr.mxu0 %v2160
        %2451 = vmatpush1.msra.mxu0 %v2159
        %2452 = vmatprep.subr.mxu0 %v2152
        %2453 = vmatpush1.msra.mxu0 %v2151
        %2454 = vmatprep.subr.mxu0 %v2144
        %2455 = vmatpush1.msra.mxu0 %v2143
        %2456 = vmatprep.subr.mxu0 %v2136
        %2457 = vmatpush1.msra.mxu0 %v2135
        %2458 = vmatprep.subr.mxu0 %v2128
        %2459 = vmatpush1.msra.mxu0 %v2127
        %2460 = vmatprep.subr.mxu0 %v2120
        %2461 = vmatpush1.msra.mxu0 %v2119
        %2462 = vmatprep.subr.mxu0 %v2112
        %2463 = vmatpush1.msra.mxu0 %v2111
        %2464 = vmatprep.subr.mxu0 %v2104
        %2465 = vmatpush1.msra.mxu0 %v2103
        %2466 = vmatprep.subr.mxu0 %v2352
        %2467 = vmatpush2.msra.mxu0 %v2351
        %2468 = vmatprep.subr.mxu0 %v2344
        %2469 = vmatpush2.msra.mxu0 %v2343
        %2470 = vmatprep.subr.mxu0 %v2336
        %2471 = vmatpush2.msra.mxu0 %v2335
        %2472 = vmatprep.subr.mxu0 %v2328
        %2473 = vmatpush2.msra.mxu0 %v2327
        %2474 = vmatprep.subr.mxu0 %v2320
        %2475 = vmatpush2.msra.mxu0 %v2319
        %2476 = vmatprep.subr.mxu0 %v2312
        %2477 = vmatpush2.msra.mxu0 %v2311
        %2478 = vmatprep.subr.mxu0 %v2304
        %2479 = vmatpush2.msra.mxu0 %v2303
        %2480 = vmatprep.subr.mxu0 %v2296
        %2481 = vmatpush2.msra.mxu0 %v2295
        %2482 = vmatprep.subr.mxu0 %v2288
        %2483 = vmatpush2.msra.mxu0 %v2287
        %2484 = vmatprep.subr.mxu0 %v2280
        %2485 = vmatpush2.msra.mxu0 %v2279
        %2486 = vmatprep.subr.mxu0 %v2272
        %2487 = vmatpush2.msra.mxu0 %v2271
        %2488 = vmatprep.subr.mxu0 %v2264
        %2489 = vmatpush2.msra.mxu0 %v2263
        %2490 = vmatprep.subr.mxu0 %v2256
        %2491 = vmatpush2.msra.mxu0 %v2255
        %2492 = vmatprep.subr.mxu0 %v2248
        %2493 = vmatpush2.msra.mxu0 %v2247
        %2494 = vmatprep.subr.mxu0 %v2240
        %2495 = vmatpush2.msra.mxu0 %v2239
        %2496 = vmatprep.subr.mxu0 %v2232
        %2497 = vmatpush2.msra.mxu0 %v2231
        %2498 = vmatprep.mubr.f32.mxu0 %v2360
        %2499 = vmatmul.mubr.f32.gmra.mxu0 %v2359
        %v2500 = vpop.f32.mrf.mxu0
        %v2501 = vadd.f32 0.0, %v2500
        %v2502 = vpop.f32.mrf.mxu0
        %v2503 = vadd.f32 0.0, %v2502
        %2504 = vdwg.mxu0
        %2505 = vmatprep.subr.mxu0 %v2226
        %2506 = vmatpush1.msra.mxu0 %v2225
        %2507 = vmatprep.subr.mxu0 %v2218
        %2508 = vmatpush1.msra.mxu0 %v2217
        %2509 = vmatprep.subr.mxu0 %v2210
        %2510 = vmatpush1.msra.mxu0 %v2209
        %2511 = vmatprep.subr.mxu0 %v2202
        %2512 = vmatpush1.msra.mxu0 %v2201
        %2513 = vmatprep.subr.mxu0 %v2194
        %2514 = vmatpush1.msra.mxu0 %v2193
        %2515 = vmatprep.subr.mxu0 %v2186
        %2516 = vmatpush1.msra.mxu0 %v2185
        %2517 = vmatprep.subr.mxu0 %v2178
        %2518 = vmatpush1.msra.mxu0 %v2177
        %2519 = vmatprep.subr.mxu0 %v2170
        %2520 = vmatpush1.msra.mxu0 %v2169
        %2521 = vmatprep.subr.mxu0 %v2162
        %2522 = vmatpush1.msra.mxu0 %v2161
        %2523 = vmatprep.subr.mxu0 %v2154
        %2524 = vmatpush1.msra.mxu0 %v2153
        %2525 = vmatprep.subr.mxu0 %v2146
        %2526 = vmatpush1.msra.mxu0 %v2145
        %2527 = vmatprep.subr.mxu0 %v2138
        %2528 = vmatpush1.msra.mxu0 %v2137
        %2529 = vmatprep.subr.mxu0 %v2130
        %2530 = vmatpush1.msra.mxu0 %v2129
        %2531 = vmatprep.subr.mxu0 %v2122
        %2532 = vmatpush1.msra.mxu0 %v2121
        %2533 = vmatprep.subr.mxu0 %v2114
        %2534 = vmatpush1.msra.mxu0 %v2113
        %2535 = vmatprep.subr.mxu0 %v2106
        %2536 = vmatpush1.msra.mxu0 %v2105
        %2537 = vmatprep.subr.mxu0 %v2354
        %2538 = vmatpush2.msra.mxu0 %v2353
        %2539 = vmatprep.subr.mxu0 %v2346
        %2540 = vmatpush2.msra.mxu0 %v2345
        %2541 = vmatprep.subr.mxu0 %v2338
        %2542 = vmatpush2.msra.mxu0 %v2337
        %2543 = vmatprep.subr.mxu0 %v2330
        %2544 = vmatpush2.msra.mxu0 %v2329
        %2545 = vmatprep.subr.mxu0 %v2322
        %2546 = vmatpush2.msra.mxu0 %v2321
        %2547 = vmatprep.subr.mxu0 %v2314
        %2548 = vmatpush2.msra.mxu0 %v2313
        %2549 = vmatprep.subr.mxu0 %v2306
        %2550 = vmatpush2.msra.mxu0 %v2305
        %2551 = vmatprep.subr.mxu0 %v2298
        %2552 = vmatpush2.msra.mxu0 %v2297
        %2553 = vmatprep.subr.mxu0 %v2290
        %2554 = vmatpush2.msra.mxu0 %v2289
        %2555 = vmatprep.subr.mxu0 %v2282
        %2556 = vmatpush2.msra.mxu0 %v2281
        %2557 = vmatprep.subr.mxu0 %v2274
        %2558 = vmatpush2.msra.mxu0 %v2273
        %2559 = vmatprep.subr.mxu0 %v2266
        %2560 = vmatpush2.msra.mxu0 %v2265
        %2561 = vmatprep.subr.mxu0 %v2258
        %2562 = vmatpush2.msra.mxu0 %v2257
        %2563 = vmatprep.subr.mxu0 %v2250
        %2564 = vmatpush2.msra.mxu0 %v2249
        %2565 = vmatprep.subr.mxu0 %v2242
        %2566 = vmatpush2.msra.mxu0 %v2241
        %2567 = vmatprep.subr.mxu0 %v2234
        %2568 = vmatpush2.msra.mxu0 %v2233
        %2569 = vmatprep.mubr.f32.mxu0 %v2360
        %2570 = vmatmul.mubr.f32.gmra.mxu0 %v2359
        %v2571 = vpop.f32.mrf.mxu0
        %v2572 = vadd.f32 0.0, %v2571
        %v2573 = vpop.f32.mrf.mxu0
        %v2574 = vadd.f32 0.0, %v2573
        %2575 = vdwg.mxu0
        %2576 = vmatprep.subr.mxu0 %v2228
        %2577 = vmatpush1.msra.mxu0 %v2227
        %2578 = vmatprep.subr.mxu0 %v2220
        %2579 = vmatpush1.msra.mxu0 %v2219
        %2580 = vmatprep.subr.mxu0 %v2212
        %2581 = vmatpush1.msra.mxu0 %v2211
        %2582 = vmatprep.subr.mxu0 %v2204
        %2583 = vmatpush1.msra.mxu0 %v2203
        %2584 = vmatprep.subr.mxu0 %v2196
        %2585 = vmatpush1.msra.mxu0 %v2195
        %2586 = vmatprep.subr.mxu0 %v2188
        %2587 = vmatpush1.msra.mxu0 %v2187
        %2588 = vmatprep.subr.mxu0 %v2180
        %2589 = vmatpush1.msra.mxu0 %v2179
        %2590 = vmatprep.subr.mxu0 %v2172
        %2591 = vmatpush1.msra.mxu0 %v2171
        %2592 = vmatprep.subr.mxu0 %v2164
        %2593 = vmatpush1.msra.mxu0 %v2163
        %2594 = vmatprep.subr.mxu0 %v2156
        %2595 = vmatpush1.msra.mxu0 %v2155
        %2596 = vmatprep.subr.mxu0 %v2148
        %2597 = vmatpush1.msra.mxu0 %v2147
        %2598 = vmatprep.subr.mxu0 %v2140
        %2599 = vmatpush1.msra.mxu0 %v2139
        %2600 = vmatprep.subr.mxu0 %v2132
        %2601 = vmatpush1.msra.mxu0 %v2131
        %2602 = vmatprep.subr.mxu0 %v2124
        %2603 = vmatpush1.msra.mxu0 %v2123
        %2604 = vmatprep.subr.mxu0 %v2116
        %2605 = vmatpush1.msra.mxu0 %v2115
        %2606 = vmatprep.subr.mxu0 %v2108
        %2607 = vmatpush1.msra.mxu0 %v2107
        %2608 = vmatprep.subr.mxu0 %v2356
        %2609 = vmatpush2.msra.mxu0 %v2355
        %2610 = vmatprep.subr.mxu0 %v2348
        %2611 = vmatpush2.msra.mxu0 %v2347
        %2612 = vmatprep.subr.mxu0 %v2340
        %2613 = vmatpush2.msra.mxu0 %v2339
        %2614 = vmatprep.subr.mxu0 %v2332
        %2615 = vmatpush2.msra.mxu0 %v2331
        %2616 = vmatprep.subr.mxu0 %v2324
        %2617 = vmatpush2.msra.mxu0 %v2323
        %2618 = vmatprep.subr.mxu0 %v2316
        %2619 = vmatpush2.msra.mxu0 %v2315
        %2620 = vmatprep.subr.mxu0 %v2308
        %2621 = vmatpush2.msra.mxu0 %v2307
        %2622 = vmatprep.subr.mxu0 %v2300
        %2623 = vmatpush2.msra.mxu0 %v2299
        %2624 = vmatprep.subr.mxu0 %v2292
        %2625 = vmatpush2.msra.mxu0 %v2291
        %2626 = vmatprep.subr.mxu0 %v2284
        %2627 = vmatpush2.msra.mxu0 %v2283
        %2628 = vmatprep.subr.mxu0 %v2276
        %2629 = vmatpush2.msra.mxu0 %v2275
        %2630 = vmatprep.subr.mxu0 %v2268
        %2631 = vmatpush2.msra.mxu0 %v2267
        %2632 = vmatprep.subr.mxu0 %v2260
        %2633 = vmatpush2.msra.mxu0 %v2259
        %2634 = vmatprep.subr.mxu0 %v2252
        %2635 = vmatpush2.msra.mxu0 %v2251
        %2636 = vmatprep.subr.mxu0 %v2244
        %2637 = vmatpush2.msra.mxu0 %v2243
        %2638 = vmatprep.subr.mxu0 %v2236
        %2639 = vmatpush2.msra.mxu0 %v2235
        %2640 = vmatprep.mubr.f32.mxu0 %v2360
        %2641 = vmatmul.mubr.f32.gmra.mxu0 %v2359
        %v2642 = vpop.f32.mrf.mxu0
        %v2643 = vadd.f32 0.0, %v2642
        %v2644 = vpop.f32.mrf.mxu0
        %v2645 = vadd.f32 0.0, %v2644
        %2646 = vdwg.mxu0
        %v2647 = vadd.f32 %v1883, %v2430
        %v2648 = vadd.f32 %v1885, %v2432
        %v2649 = vadd.f32 %v1954, %v2501
        %v2650 = vadd.f32 %v1956, %v2503
        %v2651 = vadd.f32 %v2025, %v2572
        %v2652 = vadd.f32 %v2027, %v2574
        %v2653 = vadd.f32 %v2096, %v2643
        %v2654 = vadd.f32 %v2098, %v2645
        %s2655 = scalar_lea.vmem [#allocation10], 4096
        %v2656 = vld [vmem:[%s2655] sm:$0xff]
        %v2657 = vld [vmem:[%s2655 + $0x8] sm:$0xff]
        %v2658 = vld [vmem:[%s2655 + $0x10] sm:$0xff]
        %v2659 = vld [vmem:[%s2655 + $0x18] sm:$0xff]
        %v2660 = vld [vmem:[%s2655 + $0x20] sm:$0xff]
        %v2661 = vld [vmem:[%s2655 + $0x28] sm:$0xff]
        %v2662 = vld [vmem:[%s2655 + $0x30] sm:$0xff]
        %v2663 = vld [vmem:[%s2655 + $0x38] sm:$0xff]
        %v2664 = vld [vmem:[%s2655 + $0x40] sm:$0xff]
        %v2665 = vld [vmem:[%s2655 + $0x48] sm:$0xff]
        %v2666 = vld [vmem:[%s2655 + $0x50] sm:$0xff]
        %v2667 = vld [vmem:[%s2655 + $0x58] sm:$0xff]
        %v2668 = vld [vmem:[%s2655 + $0x60] sm:$0xff]
        %v2669 = vld [vmem:[%s2655 + $0x68] sm:$0xff]
        %v2670 = vld [vmem:[%s2655 + $0x70] sm:$0xff]
        %v2671 = vld [vmem:[%s2655 + $0x78] sm:$0xff]
        %v2672 = vld [vmem:[%s2655 + $0x80] sm:$0xff]
        %v2673 = vld [vmem:[%s2655 + $0x88] sm:$0xff]
        %v2674 = vld [vmem:[%s2655 + $0x90] sm:$0xff]
        %v2675 = vld [vmem:[%s2655 + $0x98] sm:$0xff]
        %v2676 = vld [vmem:[%s2655 + $0xa0] sm:$0xff]
        %v2677 = vld [vmem:[%s2655 + $0xa8] sm:$0xff]
        %v2678 = vld [vmem:[%s2655 + $0xb0] sm:$0xff]
        %v2679 = vld [vmem:[%s2655 + $0xb8] sm:$0xff]
        %v2680 = vld [vmem:[%s2655 + $0xc0] sm:$0xff]
        %v2681 = vld [vmem:[%s2655 + $0xc8] sm:$0xff]
        %v2682 = vld [vmem:[%s2655 + $0xd0] sm:$0xff]
        %v2683 = vld [vmem:[%s2655 + $0xd8] sm:$0xff]
        %v2684 = vld [vmem:[%s2655 + $0xe0] sm:$0xff]
        %v2685 = vld [vmem:[%s2655 + $0xe8] sm:$0xff]
        %v2686 = vld [vmem:[%s2655 + $0xf0] sm:$0xff]
        %v2687 = vld [vmem:[%s2655 + $0xf8] sm:$0xff]
        %v2688 = vld [vmem:[%s2655 + $0x100] sm:$0xff]
        %v2689 = vld [vmem:[%s2655 + $0x108] sm:$0xff]
        %v2690 = vld [vmem:[%s2655 + $0x110] sm:$0xff]
        %v2691 = vld [vmem:[%s2655 + $0x118] sm:$0xff]
        %v2692 = vld [vmem:[%s2655 + $0x120] sm:$0xff]
        %v2693 = vld [vmem:[%s2655 + $0x128] sm:$0xff]
        %v2694 = vld [vmem:[%s2655 + $0x130] sm:$0xff]
        %v2695 = vld [vmem:[%s2655 + $0x138] sm:$0xff]
        %v2696 = vld [vmem:[%s2655 + $0x140] sm:$0xff]
        %v2697 = vld [vmem:[%s2655 + $0x148] sm:$0xff]
        %v2698 = vld [vmem:[%s2655 + $0x150] sm:$0xff]
        %v2699 = vld [vmem:[%s2655 + $0x158] sm:$0xff]
        %v2700 = vld [vmem:[%s2655 + $0x160] sm:$0xff]
        %v2701 = vld [vmem:[%s2655 + $0x168] sm:$0xff]
        %v2702 = vld [vmem:[%s2655 + $0x170] sm:$0xff]
        %v2703 = vld [vmem:[%s2655 + $0x178] sm:$0xff]
        %v2704 = vld [vmem:[%s2655 + $0x180] sm:$0xff]
        %v2705 = vld [vmem:[%s2655 + $0x188] sm:$0xff]
        %v2706 = vld [vmem:[%s2655 + $0x190] sm:$0xff]
        %v2707 = vld [vmem:[%s2655 + $0x198] sm:$0xff]
        %v2708 = vld [vmem:[%s2655 + $0x1a0] sm:$0xff]
        %v2709 = vld [vmem:[%s2655 + $0x1a8] sm:$0xff]
        %v2710 = vld [vmem:[%s2655 + $0x1b0] sm:$0xff]
        %v2711 = vld [vmem:[%s2655 + $0x1b8] sm:$0xff]
        %v2712 = vld [vmem:[%s2655 + $0x1c0] sm:$0xff]
        %v2713 = vld [vmem:[%s2655 + $0x1c8] sm:$0xff]
        %v2714 = vld [vmem:[%s2655 + $0x1d0] sm:$0xff]
        %v2715 = vld [vmem:[%s2655 + $0x1d8] sm:$0xff]
        %v2716 = vld [vmem:[%s2655 + $0x1e0] sm:$0xff]
        %v2717 = vld [vmem:[%s2655 + $0x1e8] sm:$0xff]
        %v2718 = vld [vmem:[%s2655 + $0x1f0] sm:$0xff]
        %v2719 = vld [vmem:[%s2655 + $0x1f8] sm:$0xff]
        %v2720 = vld [vmem:[%s2655 + $0x200] sm:$0xff]
        %v2721 = vld [vmem:[%s2655 + $0x208] sm:$0xff]
        %v2722 = vld [vmem:[%s2655 + $0x210] sm:$0xff]
        %v2723 = vld [vmem:[%s2655 + $0x218] sm:$0xff]
        %v2724 = vld [vmem:[%s2655 + $0x220] sm:$0xff]
        %v2725 = vld [vmem:[%s2655 + $0x228] sm:$0xff]
        %v2726 = vld [vmem:[%s2655 + $0x230] sm:$0xff]
        %v2727 = vld [vmem:[%s2655 + $0x238] sm:$0xff]
        %v2728 = vld [vmem:[%s2655 + $0x240] sm:$0xff]
        %v2729 = vld [vmem:[%s2655 + $0x248] sm:$0xff]
        %v2730 = vld [vmem:[%s2655 + $0x250] sm:$0xff]
        %v2731 = vld [vmem:[%s2655 + $0x258] sm:$0xff]
        %v2732 = vld [vmem:[%s2655 + $0x260] sm:$0xff]
        %v2733 = vld [vmem:[%s2655 + $0x268] sm:$0xff]
        %v2734 = vld [vmem:[%s2655 + $0x270] sm:$0xff]
        %v2735 = vld [vmem:[%s2655 + $0x278] sm:$0xff]
        %v2736 = vld [vmem:[%s2655 + $0x280] sm:$0xff]
        %v2737 = vld [vmem:[%s2655 + $0x288] sm:$0xff]
        %v2738 = vld [vmem:[%s2655 + $0x290] sm:$0xff]
        %v2739 = vld [vmem:[%s2655 + $0x298] sm:$0xff]
        %v2740 = vld [vmem:[%s2655 + $0x2a0] sm:$0xff]
        %v2741 = vld [vmem:[%s2655 + $0x2a8] sm:$0xff]
        %v2742 = vld [vmem:[%s2655 + $0x2b0] sm:$0xff]
        %v2743 = vld [vmem:[%s2655 + $0x2b8] sm:$0xff]
        %v2744 = vld [vmem:[%s2655 + $0x2c0] sm:$0xff]
        %v2745 = vld [vmem:[%s2655 + $0x2c8] sm:$0xff]
        %v2746 = vld [vmem:[%s2655 + $0x2d0] sm:$0xff]
        %v2747 = vld [vmem:[%s2655 + $0x2d8] sm:$0xff]
        %v2748 = vld [vmem:[%s2655 + $0x2e0] sm:$0xff]
        %v2749 = vld [vmem:[%s2655 + $0x2e8] sm:$0xff]
        %v2750 = vld [vmem:[%s2655 + $0x2f0] sm:$0xff]
        %v2751 = vld [vmem:[%s2655 + $0x2f8] sm:$0xff]
        %v2752 = vld [vmem:[%s2655 + $0x300] sm:$0xff]
        %v2753 = vld [vmem:[%s2655 + $0x308] sm:$0xff]
        %v2754 = vld [vmem:[%s2655 + $0x310] sm:$0xff]
        %v2755 = vld [vmem:[%s2655 + $0x318] sm:$0xff]
        %v2756 = vld [vmem:[%s2655 + $0x320] sm:$0xff]
        %v2757 = vld [vmem:[%s2655 + $0x328] sm:$0xff]
        %v2758 = vld [vmem:[%s2655 + $0x330] sm:$0xff]
        %v2759 = vld [vmem:[%s2655 + $0x338] sm:$0xff]
        %v2760 = vld [vmem:[%s2655 + $0x340] sm:$0xff]
        %v2761 = vld [vmem:[%s2655 + $0x348] sm:$0xff]
        %v2762 = vld [vmem:[%s2655 + $0x350] sm:$0xff]
        %v2763 = vld [vmem:[%s2655 + $0x358] sm:$0xff]
        %v2764 = vld [vmem:[%s2655 + $0x360] sm:$0xff]
        %v2765 = vld [vmem:[%s2655 + $0x368] sm:$0xff]
        %v2766 = vld [vmem:[%s2655 + $0x370] sm:$0xff]
        %v2767 = vld [vmem:[%s2655 + $0x378] sm:$0xff]
        %v2768 = vld [vmem:[%s2655 + $0x380] sm:$0xff]
        %v2769 = vld [vmem:[%s2655 + $0x388] sm:$0xff]
        %v2770 = vld [vmem:[%s2655 + $0x390] sm:$0xff]
        %v2771 = vld [vmem:[%s2655 + $0x398] sm:$0xff]
        %v2772 = vld [vmem:[%s2655 + $0x3a0] sm:$0xff]
        %v2773 = vld [vmem:[%s2655 + $0x3a8] sm:$0xff]
        %v2774 = vld [vmem:[%s2655 + $0x3b0] sm:$0xff]
        %v2775 = vld [vmem:[%s2655 + $0x3b8] sm:$0xff]
        %v2776 = vld [vmem:[%s2655 + $0x3c0] sm:$0xff]
        %v2777 = vld [vmem:[%s2655 + $0x3c8] sm:$0xff]
        %v2778 = vld [vmem:[%s2655 + $0x3d0] sm:$0xff]
        %v2779 = vld [vmem:[%s2655 + $0x3d8] sm:$0xff]
        %v2780 = vld [vmem:[%s2655 + $0x3e0] sm:$0xff]
        %v2781 = vld [vmem:[%s2655 + $0x3e8] sm:$0xff]
        %v2782 = vld [vmem:[%s2655 + $0x3f0] sm:$0xff]
        %v2783 = vld [vmem:[%s2655 + $0x3f8] sm:$0xff]
        %v2784 = vld [vmem:[%s2655 + $0x400] sm:$0xff]
        %v2785 = vld [vmem:[%s2655 + $0x408] sm:$0xff]
        %v2786 = vld [vmem:[%s2655 + $0x410] sm:$0xff]
        %v2787 = vld [vmem:[%s2655 + $0x418] sm:$0xff]
        %v2788 = vld [vmem:[%s2655 + $0x420] sm:$0xff]
        %v2789 = vld [vmem:[%s2655 + $0x428] sm:$0xff]
        %v2790 = vld [vmem:[%s2655 + $0x430] sm:$0xff]
        %v2791 = vld [vmem:[%s2655 + $0x438] sm:$0xff]
        %v2792 = vld [vmem:[%s2655 + $0x440] sm:$0xff]
        %v2793 = vld [vmem:[%s2655 + $0x448] sm:$0xff]
        %v2794 = vld [vmem:[%s2655 + $0x450] sm:$0xff]
        %v2795 = vld [vmem:[%s2655 + $0x458] sm:$0xff]
        %v2796 = vld [vmem:[%s2655 + $0x460] sm:$0xff]
        %v2797 = vld [vmem:[%s2655 + $0x468] sm:$0xff]
        %v2798 = vld [vmem:[%s2655 + $0x470] sm:$0xff]
        %v2799 = vld [vmem:[%s2655 + $0x478] sm:$0xff]
        %v2800 = vld [vmem:[%s2655 + $0x480] sm:$0xff]
        %v2801 = vld [vmem:[%s2655 + $0x488] sm:$0xff]
        %v2802 = vld [vmem:[%s2655 + $0x490] sm:$0xff]
        %v2803 = vld [vmem:[%s2655 + $0x498] sm:$0xff]
        %v2804 = vld [vmem:[%s2655 + $0x4a0] sm:$0xff]
        %v2805 = vld [vmem:[%s2655 + $0x4a8] sm:$0xff]
        %v2806 = vld [vmem:[%s2655 + $0x4b0] sm:$0xff]
        %v2807 = vld [vmem:[%s2655 + $0x4b8] sm:$0xff]
        %v2808 = vld [vmem:[%s2655 + $0x4c0] sm:$0xff]
        %v2809 = vld [vmem:[%s2655 + $0x4c8] sm:$0xff]
        %v2810 = vld [vmem:[%s2655 + $0x4d0] sm:$0xff]
        %v2811 = vld [vmem:[%s2655 + $0x4d8] sm:$0xff]
        %v2812 = vld [vmem:[%s2655 + $0x4e0] sm:$0xff]
        %v2813 = vld [vmem:[%s2655 + $0x4e8] sm:$0xff]
        %v2814 = vld [vmem:[%s2655 + $0x4f0] sm:$0xff]
        %v2815 = vld [vmem:[%s2655 + $0x4f8] sm:$0xff]
        %v2816 = vld [vmem:[%s2655 + $0x500] sm:$0xff]
        %v2817 = vld [vmem:[%s2655 + $0x508] sm:$0xff]
        %v2818 = vld [vmem:[%s2655 + $0x510] sm:$0xff]
        %v2819 = vld [vmem:[%s2655 + $0x518] sm:$0xff]
        %v2820 = vld [vmem:[%s2655 + $0x520] sm:$0xff]
        %v2821 = vld [vmem:[%s2655 + $0x528] sm:$0xff]
        %v2822 = vld [vmem:[%s2655 + $0x530] sm:$0xff]
        %v2823 = vld [vmem:[%s2655 + $0x538] sm:$0xff]
        %v2824 = vld [vmem:[%s2655 + $0x540] sm:$0xff]
        %v2825 = vld [vmem:[%s2655 + $0x548] sm:$0xff]
        %v2826 = vld [vmem:[%s2655 + $0x550] sm:$0xff]
        %v2827 = vld [vmem:[%s2655 + $0x558] sm:$0xff]
        %v2828 = vld [vmem:[%s2655 + $0x560] sm:$0xff]
        %v2829 = vld [vmem:[%s2655 + $0x568] sm:$0xff]
        %v2830 = vld [vmem:[%s2655 + $0x570] sm:$0xff]
        %v2831 = vld [vmem:[%s2655 + $0x578] sm:$0xff]
        %v2832 = vld [vmem:[%s2655 + $0x580] sm:$0xff]
        %v2833 = vld [vmem:[%s2655 + $0x588] sm:$0xff]
        %v2834 = vld [vmem:[%s2655 + $0x590] sm:$0xff]
        %v2835 = vld [vmem:[%s2655 + $0x598] sm:$0xff]
        %v2836 = vld [vmem:[%s2655 + $0x5a0] sm:$0xff]
        %v2837 = vld [vmem:[%s2655 + $0x5a8] sm:$0xff]
        %v2838 = vld [vmem:[%s2655 + $0x5b0] sm:$0xff]
        %v2839 = vld [vmem:[%s2655 + $0x5b8] sm:$0xff]
        %v2840 = vld [vmem:[%s2655 + $0x5c0] sm:$0xff]
        %v2841 = vld [vmem:[%s2655 + $0x5c8] sm:$0xff]
        %v2842 = vld [vmem:[%s2655 + $0x5d0] sm:$0xff]
        %v2843 = vld [vmem:[%s2655 + $0x5d8] sm:$0xff]
        %v2844 = vld [vmem:[%s2655 + $0x5e0] sm:$0xff]
        %v2845 = vld [vmem:[%s2655 + $0x5e8] sm:$0xff]
        %v2846 = vld [vmem:[%s2655 + $0x5f0] sm:$0xff]
        %v2847 = vld [vmem:[%s2655 + $0x5f8] sm:$0xff]
        %v2848 = vld [vmem:[%s2655 + $0x600] sm:$0xff]
        %v2849 = vld [vmem:[%s2655 + $0x608] sm:$0xff]
        %v2850 = vld [vmem:[%s2655 + $0x610] sm:$0xff]
        %v2851 = vld [vmem:[%s2655 + $0x618] sm:$0xff]
        %v2852 = vld [vmem:[%s2655 + $0x620] sm:$0xff]
        %v2853 = vld [vmem:[%s2655 + $0x628] sm:$0xff]
        %v2854 = vld [vmem:[%s2655 + $0x630] sm:$0xff]
        %v2855 = vld [vmem:[%s2655 + $0x638] sm:$0xff]
        %v2856 = vld [vmem:[%s2655 + $0x640] sm:$0xff]
        %v2857 = vld [vmem:[%s2655 + $0x648] sm:$0xff]
        %v2858 = vld [vmem:[%s2655 + $0x650] sm:$0xff]
        %v2859 = vld [vmem:[%s2655 + $0x658] sm:$0xff]
        %v2860 = vld [vmem:[%s2655 + $0x660] sm:$0xff]
        %v2861 = vld [vmem:[%s2655 + $0x668] sm:$0xff]
        %v2862 = vld [vmem:[%s2655 + $0x670] sm:$0xff]
        %v2863 = vld [vmem:[%s2655 + $0x678] sm:$0xff]
        %v2864 = vld [vmem:[%s2655 + $0x680] sm:$0xff]
        %v2865 = vld [vmem:[%s2655 + $0x688] sm:$0xff]
        %v2866 = vld [vmem:[%s2655 + $0x690] sm:$0xff]
        %v2867 = vld [vmem:[%s2655 + $0x698] sm:$0xff]
        %v2868 = vld [vmem:[%s2655 + $0x6a0] sm:$0xff]
        %v2869 = vld [vmem:[%s2655 + $0x6a8] sm:$0xff]
        %v2870 = vld [vmem:[%s2655 + $0x6b0] sm:$0xff]
        %v2871 = vld [vmem:[%s2655 + $0x6b8] sm:$0xff]
        %v2872 = vld [vmem:[%s2655 + $0x6c0] sm:$0xff]
        %v2873 = vld [vmem:[%s2655 + $0x6c8] sm:$0xff]
        %v2874 = vld [vmem:[%s2655 + $0x6d0] sm:$0xff]
        %v2875 = vld [vmem:[%s2655 + $0x6d8] sm:$0xff]
        %v2876 = vld [vmem:[%s2655 + $0x6e0] sm:$0xff]
        %v2877 = vld [vmem:[%s2655 + $0x6e8] sm:$0xff]
        %v2878 = vld [vmem:[%s2655 + $0x6f0] sm:$0xff]
        %v2879 = vld [vmem:[%s2655 + $0x6f8] sm:$0xff]
        %v2880 = vld [vmem:[%s2655 + $0x700] sm:$0xff]
        %v2881 = vld [vmem:[%s2655 + $0x708] sm:$0xff]
        %v2882 = vld [vmem:[%s2655 + $0x710] sm:$0xff]
        %v2883 = vld [vmem:[%s2655 + $0x718] sm:$0xff]
        %v2884 = vld [vmem:[%s2655 + $0x720] sm:$0xff]
        %v2885 = vld [vmem:[%s2655 + $0x728] sm:$0xff]
        %v2886 = vld [vmem:[%s2655 + $0x730] sm:$0xff]
        %v2887 = vld [vmem:[%s2655 + $0x738] sm:$0xff]
        %v2888 = vld [vmem:[%s2655 + $0x740] sm:$0xff]
        %v2889 = vld [vmem:[%s2655 + $0x748] sm:$0xff]
        %v2890 = vld [vmem:[%s2655 + $0x750] sm:$0xff]
        %v2891 = vld [vmem:[%s2655 + $0x758] sm:$0xff]
        %v2892 = vld [vmem:[%s2655 + $0x760] sm:$0xff]
        %v2893 = vld [vmem:[%s2655 + $0x768] sm:$0xff]
        %v2894 = vld [vmem:[%s2655 + $0x770] sm:$0xff]
        %v2895 = vld [vmem:[%s2655 + $0x778] sm:$0xff]
        %v2896 = vld [vmem:[%s2655 + $0x780] sm:$0xff]
        %v2897 = vld [vmem:[%s2655 + $0x788] sm:$0xff]
        %v2898 = vld [vmem:[%s2655 + $0x790] sm:$0xff]
        %v2899 = vld [vmem:[%s2655 + $0x798] sm:$0xff]
        %v2900 = vld [vmem:[%s2655 + $0x7a0] sm:$0xff]
        %v2901 = vld [vmem:[%s2655 + $0x7a8] sm:$0xff]
        %v2902 = vld [vmem:[%s2655 + $0x7b0] sm:$0xff]
        %v2903 = vld [vmem:[%s2655 + $0x7b8] sm:$0xff]
        %v2904 = vld [vmem:[%s2655 + $0x7c0] sm:$0xff]
        %v2905 = vld [vmem:[%s2655 + $0x7c8] sm:$0xff]
        %v2906 = vld [vmem:[%s2655 + $0x7d0] sm:$0xff]
        %v2907 = vld [vmem:[%s2655 + $0x7d8] sm:$0xff]
        %v2908 = vld [vmem:[%s2655 + $0x7e0] sm:$0xff]
        %v2909 = vld [vmem:[%s2655 + $0x7e8] sm:$0xff]
        %v2910 = vld [vmem:[%s2655 + $0x7f0] sm:$0xff]
        %v2911 = vld [vmem:[%s2655 + $0x7f8] sm:$0xff]
        %vm2914 = vcmask 1041408
        %v2915 = vrot.slane %v1009, 6
        %v2916 = vrot.slane %v1015, 6
        %v2917 = vsel %vm2914, %v2915, %v2916
        %v2918 = vrot.slane %v1011, 6
        %v2919 = vrot.slane %v1017, 6
        %v2920 = vsel %vm2914, %v2918, %v2919
        %2923 = vmatprep.subr.mxu0 %v2777
        %2924 = vmatpush1.msra.mxu0 %v2776
        %2925 = vmatprep.subr.mxu0 %v2769
        %2926 = vmatpush1.msra.mxu0 %v2768
        %2927 = vmatprep.subr.mxu0 %v2761
        %2928 = vmatpush1.msra.mxu0 %v2760
        %2929 = vmatprep.subr.mxu0 %v2753
        %2930 = vmatpush1.msra.mxu0 %v2752
        %2931 = vmatprep.subr.mxu0 %v2745
        %2932 = vmatpush1.msra.mxu0 %v2744
        %2933 = vmatprep.subr.mxu0 %v2737
        %2934 = vmatpush1.msra.mxu0 %v2736
        %2935 = vmatprep.subr.mxu0 %v2729
        %2936 = vmatpush1.msra.mxu0 %v2728
        %2937 = vmatprep.subr.mxu0 %v2721
        %2938 = vmatpush1.msra.mxu0 %v2720
        %2939 = vmatprep.subr.mxu0 %v2713
        %2940 = vmatpush1.msra.mxu0 %v2712
        %2941 = vmatprep.subr.mxu0 %v2705
        %2942 = vmatpush1.msra.mxu0 %v2704
        %2943 = vmatprep.subr.mxu0 %v2697
        %2944 = vmatpush1.msra.mxu0 %v2696
        %2945 = vmatprep.subr.mxu0 %v2689
        %2946 = vmatpush1.msra.mxu0 %v2688
        %2947 = vmatprep.subr.mxu0 %v2681
        %2948 = vmatpush1.msra.mxu0 %v2680
        %2949 = vmatprep.subr.mxu0 %v2673
        %2950 = vmatpush1.msra.mxu0 %v2672
        %2951 = vmatprep.subr.mxu0 %v2665
        %2952 = vmatpush1.msra.mxu0 %v2664
        %2953 = vmatprep.subr.mxu0 %v2657
        %2954 = vmatpush1.msra.mxu0 %v2656
        %2955 = vmatprep.subr.mxu0 %v2905
        %2956 = vmatpush2.msra.mxu0 %v2904
        %2957 = vmatprep.subr.mxu0 %v2897
        %2958 = vmatpush2.msra.mxu0 %v2896
        %2959 = vmatprep.subr.mxu0 %v2889
        %2960 = vmatpush2.msra.mxu0 %v2888
        %2961 = vmatprep.subr.mxu0 %v2881
        %2962 = vmatpush2.msra.mxu0 %v2880
        %2963 = vmatprep.subr.mxu0 %v2873
        %2964 = vmatpush2.msra.mxu0 %v2872
        %2965 = vmatprep.subr.mxu0 %v2865
        %2966 = vmatpush2.msra.mxu0 %v2864
        %2967 = vmatprep.subr.mxu0 %v2857
        %2968 = vmatpush2.msra.mxu0 %v2856
        %2969 = vmatprep.subr.mxu0 %v2849
        %2970 = vmatpush2.msra.mxu0 %v2848
        %2971 = vmatprep.subr.mxu0 %v2841
        %2972 = vmatpush2.msra.mxu0 %v2840
        %2973 = vmatprep.subr.mxu0 %v2833
        %2974 = vmatpush2.msra.mxu0 %v2832
        %2975 = vmatprep.subr.mxu0 %v2825
        %2976 = vmatpush2.msra.mxu0 %v2824
        %2977 = vmatprep.subr.mxu0 %v2817
        %2978 = vmatpush2.msra.mxu0 %v2816
        %2979 = vmatprep.subr.mxu0 %v2809
        %2980 = vmatpush2.msra.mxu0 %v2808
        %2981 = vmatprep.subr.mxu0 %v2801
        %2982 = vmatpush2.msra.mxu0 %v2800
        %2983 = vmatprep.subr.mxu0 %v2793
        %2984 = vmatpush2.msra.mxu0 %v2792
        %2985 = vmatprep.subr.mxu0 %v2785
        %2986 = vmatpush2.msra.mxu0 %v2784
        %2987 = vmatprep.mubr.f32.mxu0 %v2920
        %2988 = vmatmul.mubr.f32.gmra.mxu0 %v2917
        %v2989 = vpop.f32.mrf.mxu0
        %v2990 = vadd.f32 0.0, %v2989
        %v2991 = vpop.f32.mrf.mxu0
        %v2992 = vadd.f32 0.0, %v2991
        %2993 = vdwg.mxu0
        %2994 = vmatprep.subr.mxu0 %v2779
        %2995 = vmatpush1.msra.mxu0 %v2778
        %2996 = vmatprep.subr.mxu0 %v2771
        %2997 = vmatpush1.msra.mxu0 %v2770
        %2998 = vmatprep.subr.mxu0 %v2763
        %2999 = vmatpush1.msra.mxu0 %v2762
        %3000 = vmatprep.subr.mxu0 %v2755
        %3001 = vmatpush1.msra.mxu0 %v2754
        %3002 = vmatprep.subr.mxu0 %v2747
        %3003 = vmatpush1.msra.mxu0 %v2746
        %3004 = vmatprep.subr.mxu0 %v2739
        %3005 = vmatpush1.msra.mxu0 %v2738
        %3006 = vmatprep.subr.mxu0 %v2731
        %3007 = vmatpush1.msra.mxu0 %v2730
        %3008 = vmatprep.subr.mxu0 %v2723
        %3009 = vmatpush1.msra.mxu0 %v2722
        %3010 = vmatprep.subr.mxu0 %v2715
        %3011 = vmatpush1.msra.mxu0 %v2714
        %3012 = vmatprep.subr.mxu0 %v2707
        %3013 = vmatpush1.msra.mxu0 %v2706
        %3014 = vmatprep.subr.mxu0 %v2699
        %3015 = vmatpush1.msra.mxu0 %v2698
        %3016 = vmatprep.subr.mxu0 %v2691
        %3017 = vmatpush1.msra.mxu0 %v2690
        %3018 = vmatprep.subr.mxu0 %v2683
        %3019 = vmatpush1.msra.mxu0 %v2682
        %3020 = vmatprep.subr.mxu0 %v2675
        %3021 = vmatpush1.msra.mxu0 %v2674
        %3022 = vmatprep.subr.mxu0 %v2667
        %3023 = vmatpush1.msra.mxu0 %v2666
        %3024 = vmatprep.subr.mxu0 %v2659
        %3025 = vmatpush1.msra.mxu0 %v2658
        %3026 = vmatprep.subr.mxu0 %v2907
        %3027 = vmatpush2.msra.mxu0 %v2906
        %3028 = vmatprep.subr.mxu0 %v2899
        %3029 = vmatpush2.msra.mxu0 %v2898
        %3030 = vmatprep.subr.mxu0 %v2891
        %3031 = vmatpush2.msra.mxu0 %v2890
        %3032 = vmatprep.subr.mxu0 %v2883
        %3033 = vmatpush2.msra.mxu0 %v2882
        %3034 = vmatprep.subr.mxu0 %v2875
        %3035 = vmatpush2.msra.mxu0 %v2874
        %3036 = vmatprep.subr.mxu0 %v2867
        %3037 = vmatpush2.msra.mxu0 %v2866
        %3038 = vmatprep.subr.mxu0 %v2859
        %3039 = vmatpush2.msra.mxu0 %v2858
        %3040 = vmatprep.subr.mxu0 %v2851
        %3041 = vmatpush2.msra.mxu0 %v2850
        %3042 = vmatprep.subr.mxu0 %v2843
        %3043 = vmatpush2.msra.mxu0 %v2842
        %3044 = vmatprep.subr.mxu0 %v2835
        %3045 = vmatpush2.msra.mxu0 %v2834
        %3046 = vmatprep.subr.mxu0 %v2827
        %3047 = vmatpush2.msra.mxu0 %v2826
        %3048 = vmatprep.subr.mxu0 %v2819
        %3049 = vmatpush2.msra.mxu0 %v2818
        %3050 = vmatprep.subr.mxu0 %v2811
        %3051 = vmatpush2.msra.mxu0 %v2810
        %3052 = vmatprep.subr.mxu0 %v2803
        %3053 = vmatpush2.msra.mxu0 %v2802
        %3054 = vmatprep.subr.mxu0 %v2795
        %3055 = vmatpush2.msra.mxu0 %v2794
        %3056 = vmatprep.subr.mxu0 %v2787
        %3057 = vmatpush2.msra.mxu0 %v2786
        %3058 = vmatprep.mubr.f32.mxu0 %v2920
        %3059 = vmatmul.mubr.f32.gmra.mxu0 %v2917
        %v3060 = vpop.f32.mrf.mxu0
        %v3061 = vadd.f32 0.0, %v3060
        %v3062 = vpop.f32.mrf.mxu0
        %v3063 = vadd.f32 0.0, %v3062
        %3064 = vdwg.mxu0
        %3065 = vmatprep.subr.mxu0 %v2781
        %3066 = vmatpush1.msra.mxu0 %v2780
        %3067 = vmatprep.subr.mxu0 %v2773
        %3068 = vmatpush1.msra.mxu0 %v2772
        %3069 = vmatprep.subr.mxu0 %v2765
        %3070 = vmatpush1.msra.mxu0 %v2764
        %3071 = vmatprep.subr.mxu0 %v2757
        %3072 = vmatpush1.msra.mxu0 %v2756
        %3073 = vmatprep.subr.mxu0 %v2749
        %3074 = vmatpush1.msra.mxu0 %v2748
        %3075 = vmatprep.subr.mxu0 %v2741
        %3076 = vmatpush1.msra.mxu0 %v2740
        %3077 = vmatprep.subr.mxu0 %v2733
        %3078 = vmatpush1.msra.mxu0 %v2732
        %3079 = vmatprep.subr.mxu0 %v2725
        %3080 = vmatpush1.msra.mxu0 %v2724
        %3081 = vmatprep.subr.mxu0 %v2717
        %3082 = vmatpush1.msra.mxu0 %v2716
        %3083 = vmatprep.subr.mxu0 %v2709
        %3084 = vmatpush1.msra.mxu0 %v2708
        %3085 = vmatprep.subr.mxu0 %v2701
        %3086 = vmatpush1.msra.mxu0 %v2700
        %3087 = vmatprep.subr.mxu0 %v2693
        %3088 = vmatpush1.msra.mxu0 %v2692
        %3089 = vmatprep.subr.mxu0 %v2685
        %3090 = vmatpush1.msra.mxu0 %v2684
        %3091 = vmatprep.subr.mxu0 %v2677
        %3092 = vmatpush1.msra.mxu0 %v2676
        %3093 = vmatprep.subr.mxu0 %v2669
        %3094 = vmatpush1.msra.mxu0 %v2668
        %3095 = vmatprep.subr.mxu0 %v2661
        %3096 = vmatpush1.msra.mxu0 %v2660
        %3097 = vmatprep.subr.mxu0 %v2909
        %3098 = vmatpush2.msra.mxu0 %v2908
        %3099 = vmatprep.subr.mxu0 %v2901
        %3100 = vmatpush2.msra.mxu0 %v2900
        %3101 = vmatprep.subr.mxu0 %v2893
        %3102 = vmatpush2.msra.mxu0 %v2892
        %3103 = vmatprep.subr.mxu0 %v2885
        %3104 = vmatpush2.msra.mxu0 %v2884
        %3105 = vmatprep.subr.mxu0 %v2877
        %3106 = vmatpush2.msra.mxu0 %v2876
        %3107 = vmatprep.subr.mxu0 %v2869
        %3108 = vmatpush2.msra.mxu0 %v2868
        %3109 = vmatprep.subr.mxu0 %v2861
        %3110 = vmatpush2.msra.mxu0 %v2860
        %3111 = vmatprep.subr.mxu0 %v2853
        %3112 = vmatpush2.msra.mxu0 %v2852
        %3113 = vmatprep.subr.mxu0 %v2845
        %3114 = vmatpush2.msra.mxu0 %v2844
        %3115 = vmatprep.subr.mxu0 %v2837
        %3116 = vmatpush2.msra.mxu0 %v2836
        %3117 = vmatprep.subr.mxu0 %v2829
        %3118 = vmatpush2.msra.mxu0 %v2828
        %3119 = vmatprep.subr.mxu0 %v2821
        %3120 = vmatpush2.msra.mxu0 %v2820
        %3121 = vmatprep.subr.mxu0 %v2813
        %3122 = vmatpush2.msra.mxu0 %v2812
        %3123 = vmatprep.subr.mxu0 %v2805
        %3124 = vmatpush2.msra.mxu0 %v2804
        %3125 = vmatprep.subr.mxu0 %v2797
        %3126 = vmatpush2.msra.mxu0 %v2796
        %3127 = vmatprep.subr.mxu0 %v2789
        %3128 = vmatpush2.msra.mxu0 %v2788
        %3129 = vmatprep.mubr.f32.mxu0 %v2920
        %3130 = vmatmul.mubr.f32.gmra.mxu0 %v2917
        %v3131 = vpop.f32.mrf.mxu0
        %v3132 = vadd.f32 0.0, %v3131
        %v3133 = vpop.f32.mrf.mxu0
        %v3134 = vadd.f32 0.0, %v3133
        %3135 = vdwg.mxu0
        %3136 = vmatprep.subr.mxu0 %v2783
        %3137 = vmatpush1.msra.mxu0 %v2782
        %3138 = vmatprep.subr.mxu0 %v2775
        %3139 = vmatpush1.msra.mxu0 %v2774
        %3140 = vmatprep.subr.mxu0 %v2767
        %3141 = vmatpush1.msra.mxu0 %v2766
        %3142 = vmatprep.subr.mxu0 %v2759
        %3143 = vmatpush1.msra.mxu0 %v2758
        %3144 = vmatprep.subr.mxu0 %v2751
        %3145 = vmatpush1.msra.mxu0 %v2750
        %3146 = vmatprep.subr.mxu0 %v2743
        %3147 = vmatpush1.msra.mxu0 %v2742
        %3148 = vmatprep.subr.mxu0 %v2735
        %3149 = vmatpush1.msra.mxu0 %v2734
        %3150 = vmatprep.subr.mxu0 %v2727
        %3151 = vmatpush1.msra.mxu0 %v2726
        %3152 = vmatprep.subr.mxu0 %v2719
        %3153 = vmatpush1.msra.mxu0 %v2718
        %3154 = vmatprep.subr.mxu0 %v2711
        %3155 = vmatpush1.msra.mxu0 %v2710
        %3156 = vmatprep.subr.mxu0 %v2703
        %3157 = vmatpush1.msra.mxu0 %v2702
        %3158 = vmatprep.subr.mxu0 %v2695
        %3159 = vmatpush1.msra.mxu0 %v2694
        %3160 = vmatprep.subr.mxu0 %v2687
        %3161 = vmatpush1.msra.mxu0 %v2686
        %3162 = vmatprep.subr.mxu0 %v2679
        %3163 = vmatpush1.msra.mxu0 %v2678
        %3164 = vmatprep.subr.mxu0 %v2671
        %3165 = vmatpush1.msra.mxu0 %v2670
        %3166 = vmatprep.subr.mxu0 %v2663
        %3167 = vmatpush1.msra.mxu0 %v2662
        %3168 = vmatprep.subr.mxu0 %v2911
        %3169 = vmatpush2.msra.mxu0 %v2910
        %3170 = vmatprep.subr.mxu0 %v2903
        %3171 = vmatpush2.msra.mxu0 %v2902
        %3172 = vmatprep.subr.mxu0 %v2895
        %3173 = vmatpush2.msra.mxu0 %v2894
        %3174 = vmatprep.subr.mxu0 %v2887
        %3175 = vmatpush2.msra.mxu0 %v2886
        %3176 = vmatprep.subr.mxu0 %v2879
        %3177 = vmatpush2.msra.mxu0 %v2878
        %3178 = vmatprep.subr.mxu0 %v2871
        %3179 = vmatpush2.msra.mxu0 %v2870
        %3180 = vmatprep.subr.mxu0 %v2863
        %3181 = vmatpush2.msra.mxu0 %v2862
        %3182 = vmatprep.subr.mxu0 %v2855
        %3183 = vmatpush2.msra.mxu0 %v2854
        %3184 = vmatprep.subr.mxu0 %v2847
        %3185 = vmatpush2.msra.mxu0 %v2846
        %3186 = vmatprep.subr.mxu0 %v2839
        %3187 = vmatpush2.msra.mxu0 %v2838
        %3188 = vmatprep.subr.mxu0 %v2831
        %3189 = vmatpush2.msra.mxu0 %v2830
        %3190 = vmatprep.subr.mxu0 %v2823
        %3191 = vmatpush2.msra.mxu0 %v2822
        %3192 = vmatprep.subr.mxu0 %v2815
        %3193 = vmatpush2.msra.mxu0 %v2814
        %3194 = vmatprep.subr.mxu0 %v2807
        %3195 = vmatpush2.msra.mxu0 %v2806
        %3196 = vmatprep.subr.mxu0 %v2799
        %3197 = vmatpush2.msra.mxu0 %v2798
        %3198 = vmatprep.subr.mxu0 %v2791
        %3199 = vmatpush2.msra.mxu0 %v2790
        %3200 = vmatprep.mubr.f32.mxu0 %v2920
        %3201 = vmatmul.mubr.f32.gmra.mxu0 %v2917
        %v3202 = vpop.f32.mrf.mxu0
        %v3203 = vadd.f32 0.0, %v3202
        %v3204 = vpop.f32.mrf.mxu0
        %v3205 = vadd.f32 0.0, %v3204
        %3206 = vdwg.mxu0
        %v3207 = vadd.f32 %v2647, %v2990
        %v3208 = vadd.f32 %v2648, %v2992
        %v3209 = vadd.f32 %v2649, %v3061
        %v3210 = vadd.f32 %v2650, %v3063
        %v3211 = vadd.f32 %v2651, %v3132
        %v3212 = vadd.f32 %v2652, %v3134
        %v3213 = vadd.f32 %v2653, %v3203
        %v3214 = vadd.f32 %v2654, %v3205
        %s3215 = scalar_lea.vmem [#allocation10], 6144
        %v3216 = vld [vmem:[%s3215] sm:$0xff]
        %v3217 = vld [vmem:[%s3215 + $0x8] sm:$0xff]
        %v3218 = vld [vmem:[%s3215 + $0x10] sm:$0xff]
        %v3219 = vld [vmem:[%s3215 + $0x18] sm:$0xff]
        %v3220 = vld [vmem:[%s3215 + $0x20] sm:$0xff]
        %v3221 = vld [vmem:[%s3215 + $0x28] sm:$0xff]
        %v3222 = vld [vmem:[%s3215 + $0x30] sm:$0xff]
        %v3223 = vld [vmem:[%s3215 + $0x38] sm:$0xff]
        %v3224 = vld [vmem:[%s3215 + $0x40] sm:$0xff]
        %v3225 = vld [vmem:[%s3215 + $0x48] sm:$0xff]
        %v3226 = vld [vmem:[%s3215 + $0x50] sm:$0xff]
        %v3227 = vld [vmem:[%s3215 + $0x58] sm:$0xff]
        %v3228 = vld [vmem:[%s3215 + $0x60] sm:$0xff]
        %v3229 = vld [vmem:[%s3215 + $0x68] sm:$0xff]
        %v3230 = vld [vmem:[%s3215 + $0x70] sm:$0xff]
        %v3231 = vld [vmem:[%s3215 + $0x78] sm:$0xff]
        %v3232 = vld [vmem:[%s3215 + $0x80] sm:$0xff]
        %v3233 = vld [vmem:[%s3215 + $0x88] sm:$0xff]
        %v3234 = vld [vmem:[%s3215 + $0x90] sm:$0xff]
        %v3235 = vld [vmem:[%s3215 + $0x98] sm:$0xff]
        %v3236 = vld [vmem:[%s3215 + $0xa0] sm:$0xff]
        %v3237 = vld [vmem:[%s3215 + $0xa8] sm:$0xff]
        %v3238 = vld [vmem:[%s3215 + $0xb0] sm:$0xff]
        %v3239 = vld [vmem:[%s3215 + $0xb8] sm:$0xff]
        %v3240 = vld [vmem:[%s3215 + $0xc0] sm:$0xff]
        %v3241 = vld [vmem:[%s3215 + $0xc8] sm:$0xff]
        %v3242 = vld [vmem:[%s3215 + $0xd0] sm:$0xff]
        %v3243 = vld [vmem:[%s3215 + $0xd8] sm:$0xff]
        %v3244 = vld [vmem:[%s3215 + $0xe0] sm:$0xff]
        %v3245 = vld [vmem:[%s3215 + $0xe8] sm:$0xff]
        %v3246 = vld [vmem:[%s3215 + $0xf0] sm:$0xff]
        %v3247 = vld [vmem:[%s3215 + $0xf8] sm:$0xff]
        %v3248 = vld [vmem:[%s3215 + $0x100] sm:$0xff]
        %v3249 = vld [vmem:[%s3215 + $0x108] sm:$0xff]
        %v3250 = vld [vmem:[%s3215 + $0x110] sm:$0xff]
        %v3251 = vld [vmem:[%s3215 + $0x118] sm:$0xff]
        %v3252 = vld [vmem:[%s3215 + $0x120] sm:$0xff]
        %v3253 = vld [vmem:[%s3215 + $0x128] sm:$0xff]
        %v3254 = vld [vmem:[%s3215 + $0x130] sm:$0xff]
        %v3255 = vld [vmem:[%s3215 + $0x138] sm:$0xff]
        %v3256 = vld [vmem:[%s3215 + $0x140] sm:$0xff]
        %v3257 = vld [vmem:[%s3215 + $0x148] sm:$0xff]
        %v3258 = vld [vmem:[%s3215 + $0x150] sm:$0xff]
        %v3259 = vld [vmem:[%s3215 + $0x158] sm:$0xff]
        %v3260 = vld [vmem:[%s3215 + $0x160] sm:$0xff]
        %v3261 = vld [vmem:[%s3215 + $0x168] sm:$0xff]
        %v3262 = vld [vmem:[%s3215 + $0x170] sm:$0xff]
        %v3263 = vld [vmem:[%s3215 + $0x178] sm:$0xff]
        %v3264 = vld [vmem:[%s3215 + $0x180] sm:$0xff]
        %v3265 = vld [vmem:[%s3215 + $0x188] sm:$0xff]
        %v3266 = vld [vmem:[%s3215 + $0x190] sm:$0xff]
        %v3267 = vld [vmem:[%s3215 + $0x198] sm:$0xff]
        %v3268 = vld [vmem:[%s3215 + $0x1a0] sm:$0xff]
        %v3269 = vld [vmem:[%s3215 + $0x1a8] sm:$0xff]
        %v3270 = vld [vmem:[%s3215 + $0x1b0] sm:$0xff]
        %v3271 = vld [vmem:[%s3215 + $0x1b8] sm:$0xff]
        %v3272 = vld [vmem:[%s3215 + $0x1c0] sm:$0xff]
        %v3273 = vld [vmem:[%s3215 + $0x1c8] sm:$0xff]
        %v3274 = vld [vmem:[%s3215 + $0x1d0] sm:$0xff]
        %v3275 = vld [vmem:[%s3215 + $0x1d8] sm:$0xff]
        %v3276 = vld [vmem:[%s3215 + $0x1e0] sm:$0xff]
        %v3277 = vld [vmem:[%s3215 + $0x1e8] sm:$0xff]
        %v3278 = vld [vmem:[%s3215 + $0x1f0] sm:$0xff]
        %v3279 = vld [vmem:[%s3215 + $0x1f8] sm:$0xff]
        %v3280 = vld [vmem:[%s3215 + $0x200] sm:$0xff]
        %v3281 = vld [vmem:[%s3215 + $0x208] sm:$0xff]
        %v3282 = vld [vmem:[%s3215 + $0x210] sm:$0xff]
        %v3283 = vld [vmem:[%s3215 + $0x218] sm:$0xff]
        %v3284 = vld [vmem:[%s3215 + $0x220] sm:$0xff]
        %v3285 = vld [vmem:[%s3215 + $0x228] sm:$0xff]
        %v3286 = vld [vmem:[%s3215 + $0x230] sm:$0xff]
        %v3287 = vld [vmem:[%s3215 + $0x238] sm:$0xff]
        %v3288 = vld [vmem:[%s3215 + $0x240] sm:$0xff]
        %v3289 = vld [vmem:[%s3215 + $0x248] sm:$0xff]
        %v3290 = vld [vmem:[%s3215 + $0x250] sm:$0xff]
        %v3291 = vld [vmem:[%s3215 + $0x258] sm:$0xff]
        %v3292 = vld [vmem:[%s3215 + $0x260] sm:$0xff]
        %v3293 = vld [vmem:[%s3215 + $0x268] sm:$0xff]
        %v3294 = vld [vmem:[%s3215 + $0x270] sm:$0xff]
        %v3295 = vld [vmem:[%s3215 + $0x278] sm:$0xff]
        %v3296 = vld [vmem:[%s3215 + $0x280] sm:$0xff]
        %v3297 = vld [vmem:[%s3215 + $0x288] sm:$0xff]
        %v3298 = vld [vmem:[%s3215 + $0x290] sm:$0xff]
        %v3299 = vld [vmem:[%s3215 + $0x298] sm:$0xff]
        %v3300 = vld [vmem:[%s3215 + $0x2a0] sm:$0xff]
        %v3301 = vld [vmem:[%s3215 + $0x2a8] sm:$0xff]
        %v3302 = vld [vmem:[%s3215 + $0x2b0] sm:$0xff]
        %v3303 = vld [vmem:[%s3215 + $0x2b8] sm:$0xff]
        %v3304 = vld [vmem:[%s3215 + $0x2c0] sm:$0xff]
        %v3305 = vld [vmem:[%s3215 + $0x2c8] sm:$0xff]
        %v3306 = vld [vmem:[%s3215 + $0x2d0] sm:$0xff]
        %v3307 = vld [vmem:[%s3215 + $0x2d8] sm:$0xff]
        %v3308 = vld [vmem:[%s3215 + $0x2e0] sm:$0xff]
        %v3309 = vld [vmem:[%s3215 + $0x2e8] sm:$0xff]
        %v3310 = vld [vmem:[%s3215 + $0x2f0] sm:$0xff]
        %v3311 = vld [vmem:[%s3215 + $0x2f8] sm:$0xff]
        %v3312 = vld [vmem:[%s3215 + $0x300] sm:$0xff]
        %v3313 = vld [vmem:[%s3215 + $0x308] sm:$0xff]
        %v3314 = vld [vmem:[%s3215 + $0x310] sm:$0xff]
        %v3315 = vld [vmem:[%s3215 + $0x318] sm:$0xff]
        %v3316 = vld [vmem:[%s3215 + $0x320] sm:$0xff]
        %v3317 = vld [vmem:[%s3215 + $0x328] sm:$0xff]
        %v3318 = vld [vmem:[%s3215 + $0x330] sm:$0xff]
        %v3319 = vld [vmem:[%s3215 + $0x338] sm:$0xff]
        %v3320 = vld [vmem:[%s3215 + $0x340] sm:$0xff]
        %v3321 = vld [vmem:[%s3215 + $0x348] sm:$0xff]
        %v3322 = vld [vmem:[%s3215 + $0x350] sm:$0xff]
        %v3323 = vld [vmem:[%s3215 + $0x358] sm:$0xff]
        %v3324 = vld [vmem:[%s3215 + $0x360] sm:$0xff]
        %v3325 = vld [vmem:[%s3215 + $0x368] sm:$0xff]
        %v3326 = vld [vmem:[%s3215 + $0x370] sm:$0xff]
        %v3327 = vld [vmem:[%s3215 + $0x378] sm:$0xff]
        %v3328 = vld [vmem:[%s3215 + $0x380] sm:$0xff]
        %v3329 = vld [vmem:[%s3215 + $0x388] sm:$0xff]
        %v3330 = vld [vmem:[%s3215 + $0x390] sm:$0xff]
        %v3331 = vld [vmem:[%s3215 + $0x398] sm:$0xff]
        %v3332 = vld [vmem:[%s3215 + $0x3a0] sm:$0xff]
        %v3333 = vld [vmem:[%s3215 + $0x3a8] sm:$0xff]
        %v3334 = vld [vmem:[%s3215 + $0x3b0] sm:$0xff]
        %v3335 = vld [vmem:[%s3215 + $0x3b8] sm:$0xff]
        %v3336 = vld [vmem:[%s3215 + $0x3c0] sm:$0xff]
        %v3337 = vld [vmem:[%s3215 + $0x3c8] sm:$0xff]
        %v3338 = vld [vmem:[%s3215 + $0x3d0] sm:$0xff]
        %v3339 = vld [vmem:[%s3215 + $0x3d8] sm:$0xff]
        %v3340 = vld [vmem:[%s3215 + $0x3e0] sm:$0xff]
        %v3341 = vld [vmem:[%s3215 + $0x3e8] sm:$0xff]
        %v3342 = vld [vmem:[%s3215 + $0x3f0] sm:$0xff]
        %v3343 = vld [vmem:[%s3215 + $0x3f8] sm:$0xff]
        %v3344 = vld [vmem:[%s3215 + $0x400] sm:$0xff]
        %v3345 = vld [vmem:[%s3215 + $0x408] sm:$0xff]
        %v3346 = vld [vmem:[%s3215 + $0x410] sm:$0xff]
        %v3347 = vld [vmem:[%s3215 + $0x418] sm:$0xff]
        %v3348 = vld [vmem:[%s3215 + $0x420] sm:$0xff]
        %v3349 = vld [vmem:[%s3215 + $0x428] sm:$0xff]
        %v3350 = vld [vmem:[%s3215 + $0x430] sm:$0xff]
        %v3351 = vld [vmem:[%s3215 + $0x438] sm:$0xff]
        %v3352 = vld [vmem:[%s3215 + $0x440] sm:$0xff]
        %v3353 = vld [vmem:[%s3215 + $0x448] sm:$0xff]
        %v3354 = vld [vmem:[%s3215 + $0x450] sm:$0xff]
        %v3355 = vld [vmem:[%s3215 + $0x458] sm:$0xff]
        %v3356 = vld [vmem:[%s3215 + $0x460] sm:$0xff]
        %v3357 = vld [vmem:[%s3215 + $0x468] sm:$0xff]
        %v3358 = vld [vmem:[%s3215 + $0x470] sm:$0xff]
        %v3359 = vld [vmem:[%s3215 + $0x478] sm:$0xff]
        %v3360 = vld [vmem:[%s3215 + $0x480] sm:$0xff]
        %v3361 = vld [vmem:[%s3215 + $0x488] sm:$0xff]
        %v3362 = vld [vmem:[%s3215 + $0x490] sm:$0xff]
        %v3363 = vld [vmem:[%s3215 + $0x498] sm:$0xff]
        %v3364 = vld [vmem:[%s3215 + $0x4a0] sm:$0xff]
        %v3365 = vld [vmem:[%s3215 + $0x4a8] sm:$0xff]
        %v3366 = vld [vmem:[%s3215 + $0x4b0] sm:$0xff]
        %v3367 = vld [vmem:[%s3215 + $0x4b8] sm:$0xff]
        %v3368 = vld [vmem:[%s3215 + $0x4c0] sm:$0xff]
        %v3369 = vld [vmem:[%s3215 + $0x4c8] sm:$0xff]
        %v3370 = vld [vmem:[%s3215 + $0x4d0] sm:$0xff]
        %v3371 = vld [vmem:[%s3215 + $0x4d8] sm:$0xff]
        %v3372 = vld [vmem:[%s3215 + $0x4e0] sm:$0xff]
        %v3373 = vld [vmem:[%s3215 + $0x4e8] sm:$0xff]
        %v3374 = vld [vmem:[%s3215 + $0x4f0] sm:$0xff]
        %v3375 = vld [vmem:[%s3215 + $0x4f8] sm:$0xff]
        %v3376 = vld [vmem:[%s3215 + $0x500] sm:$0xff]
        %v3377 = vld [vmem:[%s3215 + $0x508] sm:$0xff]
        %v3378 = vld [vmem:[%s3215 + $0x510] sm:$0xff]
        %v3379 = vld [vmem:[%s3215 + $0x518] sm:$0xff]
        %v3380 = vld [vmem:[%s3215 + $0x520] sm:$0xff]
        %v3381 = vld [vmem:[%s3215 + $0x528] sm:$0xff]
        %v3382 = vld [vmem:[%s3215 + $0x530] sm:$0xff]
        %v3383 = vld [vmem:[%s3215 + $0x538] sm:$0xff]
        %v3384 = vld [vmem:[%s3215 + $0x540] sm:$0xff]
        %v3385 = vld [vmem:[%s3215 + $0x548] sm:$0xff]
        %v3386 = vld [vmem:[%s3215 + $0x550] sm:$0xff]
        %v3387 = vld [vmem:[%s3215 + $0x558] sm:$0xff]
        %v3388 = vld [vmem:[%s3215 + $0x560] sm:$0xff]
        %v3389 = vld [vmem:[%s3215 + $0x568] sm:$0xff]
        %v3390 = vld [vmem:[%s3215 + $0x570] sm:$0xff]
        %v3391 = vld [vmem:[%s3215 + $0x578] sm:$0xff]
        %v3392 = vld [vmem:[%s3215 + $0x580] sm:$0xff]
        %v3393 = vld [vmem:[%s3215 + $0x588] sm:$0xff]
        %v3394 = vld [vmem:[%s3215 + $0x590] sm:$0xff]
        %v3395 = vld [vmem:[%s3215 + $0x598] sm:$0xff]
        %v3396 = vld [vmem:[%s3215 + $0x5a0] sm:$0xff]
        %v3397 = vld [vmem:[%s3215 + $0x5a8] sm:$0xff]
        %v3398 = vld [vmem:[%s3215 + $0x5b0] sm:$0xff]
        %v3399 = vld [vmem:[%s3215 + $0x5b8] sm:$0xff]
        %v3400 = vld [vmem:[%s3215 + $0x5c0] sm:$0xff]
        %v3401 = vld [vmem:[%s3215 + $0x5c8] sm:$0xff]
        %v3402 = vld [vmem:[%s3215 + $0x5d0] sm:$0xff]
        %v3403 = vld [vmem:[%s3215 + $0x5d8] sm:$0xff]
        %v3404 = vld [vmem:[%s3215 + $0x5e0] sm:$0xff]
        %v3405 = vld [vmem:[%s3215 + $0x5e8] sm:$0xff]
        %v3406 = vld [vmem:[%s3215 + $0x5f0] sm:$0xff]
        %v3407 = vld [vmem:[%s3215 + $0x5f8] sm:$0xff]
        %v3408 = vld [vmem:[%s3215 + $0x600] sm:$0xff]
        %v3409 = vld [vmem:[%s3215 + $0x608] sm:$0xff]
        %v3410 = vld [vmem:[%s3215 + $0x610] sm:$0xff]
        %v3411 = vld [vmem:[%s3215 + $0x618] sm:$0xff]
        %v3412 = vld [vmem:[%s3215 + $0x620] sm:$0xff]
        %v3413 = vld [vmem:[%s3215 + $0x628] sm:$0xff]
        %v3414 = vld [vmem:[%s3215 + $0x630] sm:$0xff]
        %v3415 = vld [vmem:[%s3215 + $0x638] sm:$0xff]
        %v3416 = vld [vmem:[%s3215 + $0x640] sm:$0xff]
        %v3417 = vld [vmem:[%s3215 + $0x648] sm:$0xff]
        %v3418 = vld [vmem:[%s3215 + $0x650] sm:$0xff]
        %v3419 = vld [vmem:[%s3215 + $0x658] sm:$0xff]
        %v3420 = vld [vmem:[%s3215 + $0x660] sm:$0xff]
        %v3421 = vld [vmem:[%s3215 + $0x668] sm:$0xff]
        %v3422 = vld [vmem:[%s3215 + $0x670] sm:$0xff]
        %v3423 = vld [vmem:[%s3215 + $0x678] sm:$0xff]
        %v3424 = vld [vmem:[%s3215 + $0x680] sm:$0xff]
        %v3425 = vld [vmem:[%s3215 + $0x688] sm:$0xff]
        %v3426 = vld [vmem:[%s3215 + $0x690] sm:$0xff]
        %v3427 = vld [vmem:[%s3215 + $0x698] sm:$0xff]
        %v3428 = vld [vmem:[%s3215 + $0x6a0] sm:$0xff]
        %v3429 = vld [vmem:[%s3215 + $0x6a8] sm:$0xff]
        %v3430 = vld [vmem:[%s3215 + $0x6b0] sm:$0xff]
        %v3431 = vld [vmem:[%s3215 + $0x6b8] sm:$0xff]
        %v3432 = vld [vmem:[%s3215 + $0x6c0] sm:$0xff]
        %v3433 = vld [vmem:[%s3215 + $0x6c8] sm:$0xff]
        %v3434 = vld [vmem:[%s3215 + $0x6d0] sm:$0xff]
        %v3435 = vld [vmem:[%s3215 + $0x6d8] sm:$0xff]
        %v3436 = vld [vmem:[%s3215 + $0x6e0] sm:$0xff]
        %v3437 = vld [vmem:[%s3215 + $0x6e8] sm:$0xff]
        %v3438 = vld [vmem:[%s3215 + $0x6f0] sm:$0xff]
        %v3439 = vld [vmem:[%s3215 + $0x6f8] sm:$0xff]
        %v3440 = vld [vmem:[%s3215 + $0x700] sm:$0xff]
        %v3441 = vld [vmem:[%s3215 + $0x708] sm:$0xff]
        %v3442 = vld [vmem:[%s3215 + $0x710] sm:$0xff]
        %v3443 = vld [vmem:[%s3215 + $0x718] sm:$0xff]
        %v3444 = vld [vmem:[%s3215 + $0x720] sm:$0xff]
        %v3445 = vld [vmem:[%s3215 + $0x728] sm:$0xff]
        %v3446 = vld [vmem:[%s3215 + $0x730] sm:$0xff]
        %v3447 = vld [vmem:[%s3215 + $0x738] sm:$0xff]
        %v3448 = vld [vmem:[%s3215 + $0x740] sm:$0xff]
        %v3449 = vld [vmem:[%s3215 + $0x748] sm:$0xff]
        %v3450 = vld [vmem:[%s3215 + $0x750] sm:$0xff]
        %v3451 = vld [vmem:[%s3215 + $0x758] sm:$0xff]
        %v3452 = vld [vmem:[%s3215 + $0x760] sm:$0xff]
        %v3453 = vld [vmem:[%s3215 + $0x768] sm:$0xff]
        %v3454 = vld [vmem:[%s3215 + $0x770] sm:$0xff]
        %v3455 = vld [vmem:[%s3215 + $0x778] sm:$0xff]
        %v3456 = vld [vmem:[%s3215 + $0x780] sm:$0xff]
        %v3457 = vld [vmem:[%s3215 + $0x788] sm:$0xff]
        %v3458 = vld [vmem:[%s3215 + $0x790] sm:$0xff]
        %v3459 = vld [vmem:[%s3215 + $0x798] sm:$0xff]
        %v3460 = vld [vmem:[%s3215 + $0x7a0] sm:$0xff]
        %v3461 = vld [vmem:[%s3215 + $0x7a8] sm:$0xff]
        %v3462 = vld [vmem:[%s3215 + $0x7b0] sm:$0xff]
        %v3463 = vld [vmem:[%s3215 + $0x7b8] sm:$0xff]
        %v3464 = vld [vmem:[%s3215 + $0x7c0] sm:$0xff]
        %v3465 = vld [vmem:[%s3215 + $0x7c8] sm:$0xff]
        %v3466 = vld [vmem:[%s3215 + $0x7d0] sm:$0xff]
        %v3467 = vld [vmem:[%s3215 + $0x7d8] sm:$0xff]
        %v3468 = vld [vmem:[%s3215 + $0x7e0] sm:$0xff]
        %v3469 = vld [vmem:[%s3215 + $0x7e8] sm:$0xff]
        %v3470 = vld [vmem:[%s3215 + $0x7f0] sm:$0xff]
        %v3471 = vld [vmem:[%s3215 + $0x7f8] sm:$0xff]
        %v3472 = vrot.slane %v1015, 1
        %v3473 = vrot.slane %v1017, 1
        %3476 = vmatprep.subr.mxu0 %v3337
        %3477 = vmatpush1.msra.mxu0 %v3336
        %3478 = vmatprep.subr.mxu0 %v3329
        %3479 = vmatpush1.msra.mxu0 %v3328
        %3480 = vmatprep.subr.mxu0 %v3321
        %3481 = vmatpush1.msra.mxu0 %v3320
        %3482 = vmatprep.subr.mxu0 %v3313
        %3483 = vmatpush1.msra.mxu0 %v3312
        %3484 = vmatprep.subr.mxu0 %v3305
        %3485 = vmatpush1.msra.mxu0 %v3304
        %3486 = vmatprep.subr.mxu0 %v3297
        %3487 = vmatpush1.msra.mxu0 %v3296
        %3488 = vmatprep.subr.mxu0 %v3289
        %3489 = vmatpush1.msra.mxu0 %v3288
        %3490 = vmatprep.subr.mxu0 %v3281
        %3491 = vmatpush1.msra.mxu0 %v3280
        %3492 = vmatprep.subr.mxu0 %v3273
        %3493 = vmatpush1.msra.mxu0 %v3272
        %3494 = vmatprep.subr.mxu0 %v3265
        %3495 = vmatpush1.msra.mxu0 %v3264
        %3496 = vmatprep.subr.mxu0 %v3257
        %3497 = vmatpush1.msra.mxu0 %v3256
        %3498 = vmatprep.subr.mxu0 %v3249
        %3499 = vmatpush1.msra.mxu0 %v3248
        %3500 = vmatprep.subr.mxu0 %v3241
        %3501 = vmatpush1.msra.mxu0 %v3240
        %3502 = vmatprep.subr.mxu0 %v3233
        %3503 = vmatpush1.msra.mxu0 %v3232
        %3504 = vmatprep.subr.mxu0 %v3225
        %3505 = vmatpush1.msra.mxu0 %v3224
        %3506 = vmatprep.subr.mxu0 %v3217
        %3507 = vmatpush1.msra.mxu0 %v3216
        %3508 = vmatprep.subr.mxu0 %v3465
        %3509 = vmatpush2.msra.mxu0 %v3464
        %3510 = vmatprep.subr.mxu0 %v3457
        %3511 = vmatpush2.msra.mxu0 %v3456
        %3512 = vmatprep.subr.mxu0 %v3449
        %3513 = vmatpush2.msra.mxu0 %v3448
        %3514 = vmatprep.subr.mxu0 %v3441
        %3515 = vmatpush2.msra.mxu0 %v3440
        %3516 = vmatprep.subr.mxu0 %v3433
        %3517 = vmatpush2.msra.mxu0 %v3432
        %3518 = vmatprep.subr.mxu0 %v3425
        %3519 = vmatpush2.msra.mxu0 %v3424
        %3520 = vmatprep.subr.mxu0 %v3417
        %3521 = vmatpush2.msra.mxu0 %v3416
        %3522 = vmatprep.subr.mxu0 %v3409
        %3523 = vmatpush2.msra.mxu0 %v3408
        %3524 = vmatprep.subr.mxu0 %v3401
        %3525 = vmatpush2.msra.mxu0 %v3400
        %3526 = vmatprep.subr.mxu0 %v3393
        %3527 = vmatpush2.msra.mxu0 %v3392
        %3528 = vmatprep.subr.mxu0 %v3385
        %3529 = vmatpush2.msra.mxu0 %v3384
        %3530 = vmatprep.subr.mxu0 %v3377
        %3531 = vmatpush2.msra.mxu0 %v3376
        %3532 = vmatprep.subr.mxu0 %v3369
        %3533 = vmatpush2.msra.mxu0 %v3368
        %3534 = vmatprep.subr.mxu0 %v3361
        %3535 = vmatpush2.msra.mxu0 %v3360
        %3536 = vmatprep.subr.mxu0 %v3353
        %3537 = vmatpush2.msra.mxu0 %v3352
        %3538 = vmatprep.subr.mxu0 %v3345
        %3539 = vmatpush2.msra.mxu0 %v3344
        %3540 = vmatprep.mubr.f32.mxu0 %v3473
        %3541 = vmatmul.mubr.f32.gmra.mxu0 %v3472
        %v3542 = vpop.f32.mrf.mxu0
        %v3543 = vadd.f32 0.0, %v3542
        %v3544 = vpop.f32.mrf.mxu0
        %v3545 = vadd.f32 0.0, %v3544
        %3546 = vdwg.mxu0
        %3547 = vmatprep.subr.mxu0 %v3339
        %3548 = vmatpush1.msra.mxu0 %v3338
        %3549 = vmatprep.subr.mxu0 %v3331
        %3550 = vmatpush1.msra.mxu0 %v3330
        %3551 = vmatprep.subr.mxu0 %v3323
        %3552 = vmatpush1.msra.mxu0 %v3322
        %3553 = vmatprep.subr.mxu0 %v3315
        %3554 = vmatpush1.msra.mxu0 %v3314
        %3555 = vmatprep.subr.mxu0 %v3307
        %3556 = vmatpush1.msra.mxu0 %v3306
        %3557 = vmatprep.subr.mxu0 %v3299
        %3558 = vmatpush1.msra.mxu0 %v3298
        %3559 = vmatprep.subr.mxu0 %v3291
        %3560 = vmatpush1.msra.mxu0 %v3290
        %3561 = vmatprep.subr.mxu0 %v3283
        %3562 = vmatpush1.msra.mxu0 %v3282
        %3563 = vmatprep.subr.mxu0 %v3275
        %3564 = vmatpush1.msra.mxu0 %v3274
        %3565 = vmatprep.subr.mxu0 %v3267
        %3566 = vmatpush1.msra.mxu0 %v3266
        %3567 = vmatprep.subr.mxu0 %v3259
        %3568 = vmatpush1.msra.mxu0 %v3258
        %3569 = vmatprep.subr.mxu0 %v3251
        %3570 = vmatpush1.msra.mxu0 %v3250
        %3571 = vmatprep.subr.mxu0 %v3243
        %3572 = vmatpush1.msra.mxu0 %v3242
        %3573 = vmatprep.subr.mxu0 %v3235
        %3574 = vmatpush1.msra.mxu0 %v3234
        %3575 = vmatprep.subr.mxu0 %v3227
        %3576 = vmatpush1.msra.mxu0 %v3226
        %3577 = vmatprep.subr.mxu0 %v3219
        %3578 = vmatpush1.msra.mxu0 %v3218
        %3579 = vmatprep.subr.mxu0 %v3467
        %3580 = vmatpush2.msra.mxu0 %v3466
        %3581 = vmatprep.subr.mxu0 %v3459
        %3582 = vmatpush2.msra.mxu0 %v3458
        %3583 = vmatprep.subr.mxu0 %v3451
        %3584 = vmatpush2.msra.mxu0 %v3450
        %3585 = vmatprep.subr.mxu0 %v3443
        %3586 = vmatpush2.msra.mxu0 %v3442
        %3587 = vmatprep.subr.mxu0 %v3435
        %3588 = vmatpush2.msra.mxu0 %v3434
        %3589 = vmatprep.subr.mxu0 %v3427
        %3590 = vmatpush2.msra.mxu0 %v3426
        %3591 = vmatprep.subr.mxu0 %v3419
        %3592 = vmatpush2.msra.mxu0 %v3418
        %3593 = vmatprep.subr.mxu0 %v3411
        %3594 = vmatpush2.msra.mxu0 %v3410
        %3595 = vmatprep.subr.mxu0 %v3403
        %3596 = vmatpush2.msra.mxu0 %v3402
        %3597 = vmatprep.subr.mxu0 %v3395
        %3598 = vmatpush2.msra.mxu0 %v3394
        %3599 = vmatprep.subr.mxu0 %v3387
        %3600 = vmatpush2.msra.mxu0 %v3386
        %3601 = vmatprep.subr.mxu0 %v3379
        %3602 = vmatpush2.msra.mxu0 %v3378
        %3603 = vmatprep.subr.mxu0 %v3371
        %3604 = vmatpush2.msra.mxu0 %v3370
        %3605 = vmatprep.subr.mxu0 %v3363
        %3606 = vmatpush2.msra.mxu0 %v3362
        %3607 = vmatprep.subr.mxu0 %v3355
        %3608 = vmatpush2.msra.mxu0 %v3354
        %3609 = vmatprep.subr.mxu0 %v3347
        %3610 = vmatpush2.msra.mxu0 %v3346
        %3611 = vmatprep.mubr.f32.mxu0 %v3473
        %3612 = vmatmul.mubr.f32.gmra.mxu0 %v3472
        %v3613 = vpop.f32.mrf.mxu0
        %v3614 = vadd.f32 0.0, %v3613
        %v3615 = vpop.f32.mrf.mxu0
        %v3616 = vadd.f32 0.0, %v3615
        %3617 = vdwg.mxu0
        %3618 = vmatprep.subr.mxu0 %v3341
        %3619 = vmatpush1.msra.mxu0 %v3340
        %3620 = vmatprep.subr.mxu0 %v3333
        %3621 = vmatpush1.msra.mxu0 %v3332
        %3622 = vmatprep.subr.mxu0 %v3325
        %3623 = vmatpush1.msra.mxu0 %v3324
        %3624 = vmatprep.subr.mxu0 %v3317
        %3625 = vmatpush1.msra.mxu0 %v3316
        %3626 = vmatprep.subr.mxu0 %v3309
        %3627 = vmatpush1.msra.mxu0 %v3308
        %3628 = vmatprep.subr.mxu0 %v3301
        %3629 = vmatpush1.msra.mxu0 %v3300
        %3630 = vmatprep.subr.mxu0 %v3293
        %3631 = vmatpush1.msra.mxu0 %v3292
        %3632 = vmatprep.subr.mxu0 %v3285
        %3633 = vmatpush1.msra.mxu0 %v3284
        %3634 = vmatprep.subr.mxu0 %v3277
        %3635 = vmatpush1.msra.mxu0 %v3276
        %3636 = vmatprep.subr.mxu0 %v3269
        %3637 = vmatpush1.msra.mxu0 %v3268
        %3638 = vmatprep.subr.mxu0 %v3261
        %3639 = vmatpush1.msra.mxu0 %v3260
        %3640 = vmatprep.subr.mxu0 %v3253
        %3641 = vmatpush1.msra.mxu0 %v3252
        %3642 = vmatprep.subr.mxu0 %v3245
        %3643 = vmatpush1.msra.mxu0 %v3244
        %3644 = vmatprep.subr.mxu0 %v3237
        %3645 = vmatpush1.msra.mxu0 %v3236
        %3646 = vmatprep.subr.mxu0 %v3229
        %3647 = vmatpush1.msra.mxu0 %v3228
        %3648 = vmatprep.subr.mxu0 %v3221
        %3649 = vmatpush1.msra.mxu0 %v3220
        %3650 = vmatprep.subr.mxu0 %v3469
        %3651 = vmatpush2.msra.mxu0 %v3468
        %3652 = vmatprep.subr.mxu0 %v3461
        %3653 = vmatpush2.msra.mxu0 %v3460
        %3654 = vmatprep.subr.mxu0 %v3453
        %3655 = vmatpush2.msra.mxu0 %v3452
        %3656 = vmatprep.subr.mxu0 %v3445
        %3657 = vmatpush2.msra.mxu0 %v3444
        %3658 = vmatprep.subr.mxu0 %v3437
        %3659 = vmatpush2.msra.mxu0 %v3436
        %3660 = vmatprep.subr.mxu0 %v3429
        %3661 = vmatpush2.msra.mxu0 %v3428
        %3662 = vmatprep.subr.mxu0 %v3421
        %3663 = vmatpush2.msra.mxu0 %v3420
        %3664 = vmatprep.subr.mxu0 %v3413
        %3665 = vmatpush2.msra.mxu0 %v3412
        %3666 = vmatprep.subr.mxu0 %v3405
        %3667 = vmatpush2.msra.mxu0 %v3404
        %3668 = vmatprep.subr.mxu0 %v3397
        %3669 = vmatpush2.msra.mxu0 %v3396
        %3670 = vmatprep.subr.mxu0 %v3389
        %3671 = vmatpush2.msra.mxu0 %v3388
        %3672 = vmatprep.subr.mxu0 %v3381
        %3673 = vmatpush2.msra.mxu0 %v3380
        %3674 = vmatprep.subr.mxu0 %v3373
        %3675 = vmatpush2.msra.mxu0 %v3372
        %3676 = vmatprep.subr.mxu0 %v3365
        %3677 = vmatpush2.msra.mxu0 %v3364
        %3678 = vmatprep.subr.mxu0 %v3357
        %3679 = vmatpush2.msra.mxu0 %v3356
        %3680 = vmatprep.subr.mxu0 %v3349
        %3681 = vmatpush2.msra.mxu0 %v3348
        %3682 = vmatprep.mubr.f32.mxu0 %v3473
        %3683 = vmatmul.mubr.f32.gmra.mxu0 %v3472
        %v3684 = vpop.f32.mrf.mxu0
        %v3685 = vadd.f32 0.0, %v3684
        %v3686 = vpop.f32.mrf.mxu0
        %v3687 = vadd.f32 0.0, %v3686
        %3688 = vdwg.mxu0
        %3689 = vmatprep.subr.mxu0 %v3343
        %3690 = vmatpush1.msra.mxu0 %v3342
        %3691 = vmatprep.subr.mxu0 %v3335
        %3692 = vmatpush1.msra.mxu0 %v3334
        %3693 = vmatprep.subr.mxu0 %v3327
        %3694 = vmatpush1.msra.mxu0 %v3326
        %3695 = vmatprep.subr.mxu0 %v3319
        %3696 = vmatpush1.msra.mxu0 %v3318
        %3697 = vmatprep.subr.mxu0 %v3311
        %3698 = vmatpush1.msra.mxu0 %v3310
        %3699 = vmatprep.subr.mxu0 %v3303
        %3700 = vmatpush1.msra.mxu0 %v3302
        %3701 = vmatprep.subr.mxu0 %v3295
        %3702 = vmatpush1.msra.mxu0 %v3294
        %3703 = vmatprep.subr.mxu0 %v3287
        %3704 = vmatpush1.msra.mxu0 %v3286
        %3705 = vmatprep.subr.mxu0 %v3279
        %3706 = vmatpush1.msra.mxu0 %v3278
        %3707 = vmatprep.subr.mxu0 %v3271
        %3708 = vmatpush1.msra.mxu0 %v3270
        %3709 = vmatprep.subr.mxu0 %v3263
        %3710 = vmatpush1.msra.mxu0 %v3262
        %3711 = vmatprep.subr.mxu0 %v3255
        %3712 = vmatpush1.msra.mxu0 %v3254
        %3713 = vmatprep.subr.mxu0 %v3247
        %3714 = vmatpush1.msra.mxu0 %v3246
        %3715 = vmatprep.subr.mxu0 %v3239
        %3716 = vmatpush1.msra.mxu0 %v3238
        %3717 = vmatprep.subr.mxu0 %v3231
        %3718 = vmatpush1.msra.mxu0 %v3230
        %3719 = vmatprep.subr.mxu0 %v3223
        %3720 = vmatpush1.msra.mxu0 %v3222
        %3721 = vmatprep.subr.mxu0 %v3471
        %3722 = vmatpush2.msra.mxu0 %v3470
        %3723 = vmatprep.subr.mxu0 %v3463
        %3724 = vmatpush2.msra.mxu0 %v3462
        %3725 = vmatprep.subr.mxu0 %v3455
        %3726 = vmatpush2.msra.mxu0 %v3454
        %3727 = vmatprep.subr.mxu0 %v3447
        %3728 = vmatpush2.msra.mxu0 %v3446
        %3729 = vmatprep.subr.mxu0 %v3439
        %3730 = vmatpush2.msra.mxu0 %v3438
        %3731 = vmatprep.subr.mxu0 %v3431
        %3732 = vmatpush2.msra.mxu0 %v3430
        %3733 = vmatprep.subr.mxu0 %v3423
        %3734 = vmatpush2.msra.mxu0 %v3422
        %3735 = vmatprep.subr.mxu0 %v3415
        %3736 = vmatpush2.msra.mxu0 %v3414
        %3737 = vmatprep.subr.mxu0 %v3407
        %3738 = vmatpush2.msra.mxu0 %v3406
        %3739 = vmatprep.subr.mxu0 %v3399
        %3740 = vmatpush2.msra.mxu0 %v3398
        %3741 = vmatprep.subr.mxu0 %v3391
        %3742 = vmatpush2.msra.mxu0 %v3390
        %3743 = vmatprep.subr.mxu0 %v3383
        %3744 = vmatpush2.msra.mxu0 %v3382
        %3745 = vmatprep.subr.mxu0 %v3375
        %3746 = vmatpush2.msra.mxu0 %v3374
        %3747 = vmatprep.subr.mxu0 %v3367
        %3748 = vmatpush2.msra.mxu0 %v3366
        %3749 = vmatprep.subr.mxu0 %v3359
        %3750 = vmatpush2.msra.mxu0 %v3358
        %3751 = vmatprep.subr.mxu0 %v3351
        %3752 = vmatpush2.msra.mxu0 %v3350
        %3753 = vmatprep.mubr.f32.mxu0 %v3473
        %3754 = vmatmul.mubr.f32.gmra.mxu0 %v3472
        %v3755 = vpop.f32.mrf.mxu0
        %v3756 = vadd.f32 0.0, %v3755
        %v3757 = vpop.f32.mrf.mxu0
        %v3758 = vadd.f32 0.0, %v3757
        %3759 = vdwg.mxu0
        %v3760 = vadd.f32 %v3207, %v3543
        %v3761 = vadd.f32 %v3208, %v3545
        %v3762 = vadd.f32 %v3209, %v3614
        %v3763 = vadd.f32 %v3210, %v3616
        %v3764 = vadd.f32 %v3211, %v3685
        %v3765 = vadd.f32 %v3212, %v3687
        %v3766 = vadd.f32 %v3213, %v3756
        %v3767 = vadd.f32 %v3214, %v3758
        %v3776 = vcombine.low %v3760, %v3761
        %v3777 = vcombine.low %v3762, %v3763
        %v3778 = vcombine.low %v3764, %v3765
        %v3779 = vcombine.low %v3766, %v3767
        %3784 = vst [vmem:[%s350] sm:$0x77] %v3776
        %3785 = vst [vmem:[%s350 + $0x8] sm:$0x77] %v3777
        %3786 = vst [vmem:[%s350 + $0x10] sm:$0x77] %v3778
        %3787 = vst [vmem:[%s350 + $0x18] sm:$0x77] %v3779
        %p3788 = scmp.lt.s32.totalorder %s23, 1
        %s3789 = scalar_select %p3788, %s23, 1
        %s3790 = smul.addr %s3789, 8
        %s3791 = smul.addr %s3790, 4
        %s3792 = scalar_lea.vmem %s7, %s3791
        // Predicated region
        $region69: #{tpu_custom_call.1} parent=47 // pred_check
          %p3793 = pneg %p193
        $region70: #{tpu_custom_call.1} parent=47 // pred_check_branch
          %3795 = sbr.rel (%p3793) target = $region72
        $region71: #{tpu_custom_call.1} parent=47 // pred_region
          _
        $region72: #{tpu_custom_call.1} parent=47 // pred_fallthru
          _
      $region48: #{tpu_custom_call.1} parent=5 // pred_fallthru
        _
      %p3796 = scmp.le.s32.totalorder 2, %s18
      // Predicated region
      $region73: #{tpu_custom_call.1} parent=5 // pred_check
        %p3797 = pneg %p3796
      $region74: #{tpu_custom_call.1} parent=5 // pred_check_branch
        %3799 = sbr.rel (%p3797) target = $region76
      $region75: #{tpu_custom_call.1} parent=5 // pred_region
        %s3800 = ssub.s32 %s18, 2
        // Predicated region
        $region77: #{tpu_custom_call.1} parent=75 // pred_check
          %p3801 = pneg %p199
        $region78: #{tpu_custom_call.1} parent=75 // pred_check_branch
          %3803 = sbr.rel (%p3801) target = $region80
        $region79: #{tpu_custom_call.1} parent=75 // pred_region
          %p3804 = scmp.lt.s32.totalorder %s24, 1
          %s3805 = scalar_select %p3804, %s24, 1
          %s3806 = smul.addr %s3805, 8
          %s3807 = smul.addr %s3806, 4
          %s3808 = scalar_lea.vmem %s7, %s3807
        $region80: #{tpu_custom_call.1} parent=75 // pred_fallthru
          _
      $region76: #{tpu_custom_call.1} parent=5 // pred_fallthru
        _
    $region6: #{tpu_custom_call.1} parent=1 // loop_footer
      %s22 = sadd.s32 1, %s18
    $region7: #{tpu_custom_call.1} parent=1 // loop_footer_branch
      %17 = sbr.rel target = $region3
    $region8: #{tpu_custom_call.1} parent=1 // loop_exit
      _
    %3809 = vsyncpa [#allocation4], 1
    %s3810 = scalar_lea.sflag [#allocation4], 1
    %3811 = vsyncpa %s3810, 1
    %3812 = vsyncpa [#allocation6], 1
    %3813 = vsyncpa [#allocation9], 1

</llo_original>
